<compile_context>
chip_gen: v5e
topology: v5e:2x2
jax: 0.10.0
libtpu: 0.0.40
codegen_flags: <defaults>
</compile_context>

<pallas_src>
import functools
import math

import jax
import jax.numpy as jnp
from jax import lax
from jax.experimental import pallas as pl
from jax.experimental.pallas import tpu as pltpu  # noqa: F401  (kept for TPU-specific tuning)


# ----------------------------------------------------------------------------
# Fused forward kernel: LSTM layer 1 + LSTM layer 2 + Linear + LogSoftmax.
# ----------------------------------------------------------------------------
def _fused_forward_kernel(x_ref, w1ih_ref, w1hh_ref, b1_ref,
                          w2ih_ref, w2hh_ref, b2_ref, wout_ref, bout_ref,
                          o_ref, *, T, Bp, Hp):
    # x_ref:    (T*Bp, Din)  time-major, batch padded to Bp=8 sublanes (row = t*Bp + b)
    # w1ih_ref: (Din, 4Hp)   layer-1 W_ih^T, bf16, gate-padded
    # w1hh_ref: (Hp, 4Hp)    layer-1 W_hh^T, bf16, gate- and input-padded
    # b1_ref:   (1, 4Hp)     layer-1 b_ih + b_hh, f32, gate-padded
    # w2ih_ref: (Hp, 4Hp)    layer-2 W_ih^T, bf16
    # w2hh_ref: (Hp, 4Hp)    layer-2 W_hh^T, bf16
    # b2_ref:   (1, 4Hp)     layer-2 combined bias, f32
    # wout_ref: (Hp, C)      output Linear weight^T, bf16, input-padded
    # bout_ref: (1, C)       output Linear bias, f32
    # o_ref:    (T*Bp, C)    log-probabilities (time-major, padded batch)
    f32 = jnp.float32
    bf16 = jnp.bfloat16

    w1hh = w1hh_ref[...]
    w2ih = w2ih_ref[...]
    w2hh = w2hh_ref[...]

    # Hoisted layer-1 input projection (+ bias) for all (t, b) at once: (T*Bp, 4Hp).
    gates_x = (
        jnp.dot(x_ref[...].astype(bf16), w1ih_ref[...], preferred_element_type=f32)
        + b1_ref[...]
    )
    # Hoisted sublane-broadcast of the layer-2 bias (unrolled loop would re-broadcast).
    b2b = jnp.broadcast_to(b2_ref[...], (Bp, 4 * Hp))

    def lstm_cell(gates, c_prev):
        # PyTorch gate order i, f, g, o; each slice is a whole 128-lane block.
        i = jax.nn.sigmoid(gates[:, 0 * Hp:1 * Hp])
        f = jax.nn.sigmoid(gates[:, 1 * Hp:2 * Hp])
        g = jnp.tanh(gates[:, 2 * Hp:3 * Hp])
        o = jax.nn.sigmoid(gates[:, 3 * Hp:4 * Hp])
        c_new = f * c_prev + i * g
        h_new = o * jnp.tanh(c_new)
        return h_new, c_new

    zeros = jnp.zeros((Bp, Hp), f32)
    h1, c1, h2, c2 = zeros, zeros, zeros, zeros
    h2_steps = []

    # T is small and static -> fully unrolled; every slice index below is static and
    # every intermediate is a full (8, 128)-aligned tile (no masked ops in the loop).
    for t in range(T):
        # ---- Layer 1: precomputed input gates + recurrent matmul (K = Hp) ----
        g1 = gates_x[t * Bp:(t + 1) * Bp, :] + jnp.dot(
            h1.astype(bf16), w1hh, preferred_element_type=f32)
        h1, c1 = lstm_cell(g1, c1)

        # ---- Layer 2: two K=Hp matmuls (no per-step lane-concat) ----
        g2 = (jnp.dot(h1.astype(bf16), w2ih, preferred_element_type=f32)
              + jnp.dot(h2.astype(bf16), w2hh, preferred_element_type=f32)
              + b2b)
        h2, c2 = lstm_cell(g2, c2)
        h2_steps.append(h2)

    # ---- Head hoisted out of the recurrence: one matmul, one log-softmax, one store.
    h2_all = jnp.concatenate(h2_steps, axis=0)                       # (T*Bp, Hp)
    logits = (jnp.dot(h2_all.astype(bf16), wout_ref[...],
                      preferred_element_type=f32)
              + bout_ref[...])                                       # (T*Bp, C)
    m = jnp.max(logits, axis=-1, keepdims=True)
    shifted = logits - m
    logp = shifted - jnp.log(jnp.sum(jnp.exp(shifted), axis=-1, keepdims=True))
    o_ref[...] = logp                                                # full-tile store


# ----------------------------------------------------------------------------
# Wrapper: one gridless pallas_call, everything resident in VMEM (< 1 MiB).
# ----------------------------------------------------------------------------
def actuator_net_forward(x, params):
    """x: (B, T, input_size) float32.  Returns (B, T, num_classes) log-probs."""
    B, T, Din = x.shape
    w1ih, w1hh, b1, w2ih, w2hh, b2, wout, bout = params
    Hp = w1hh.shape[0]
    C = wout.shape[1]
    Bp = 8  # pad batch to a full sublane tile

    # Time-major, batch padded to 8 sublanes (tiny wrapper-side reorder of a (2,8,2)).
    x_tm = jnp.zeros((T, Bp, Din), jnp.float32).at[:, :B, :].set(
        jnp.transpose(x, (1, 0, 2)))
    x2d = x_tm.reshape(T * Bp, Din)

    kernel = functools.partial(_fused_forward_kernel, T=T, Bp=Bp, Hp=Hp)
    out = pl.pallas_call(
        kernel,
        out_shape=jax.ShapeDtypeStruct((T * Bp, C), jnp.float32),
        in_specs=[
            pl.BlockSpec((T * Bp, Din), lambda: (0, 0)),
            pl.BlockSpec((Din, 4 * Hp), lambda: (0, 0)),
            pl.BlockSpec((Hp, 4 * Hp), lambda: (0, 0)),
            pl.BlockSpec((1, 4 * Hp), lambda: (0, 0)),
            pl.BlockSpec((Hp, 4 * Hp), lambda: (0, 0)),
            pl.BlockSpec((Hp, 4 * Hp), lambda: (0, 0)),
            pl.BlockSpec((1, 4 * Hp), lambda: (0, 0)),
            pl.BlockSpec((Hp, C), lambda: (0, 0)),
            pl.BlockSpec((1, C), lambda: (0, 0)),
        ],
        out_specs=pl.BlockSpec((T * Bp, C), lambda: (0, 0)),
    )(x2d, w1ih, w1hh, b1, w2ih, w2hh, b2, wout, bout)

    # (T*Bp, C) -> (B, T, C): drop padded batch rows, return batch-major.
    return jnp.transpose(out.reshape(T, Bp, C)[:, :B, :], (1, 0, 2))


# ----------------------------------------------------------------------------
# Parameter init (PyTorch LSTM/Linear shapes) and padded, transposed repacking.
# ----------------------------------------------------------------------------
def init_raw_params(key, input_size, hidden_size, num_layers, num_classes):
    bound = 1.0 / math.sqrt(hidden_size)
    layers = []
    for layer in range(num_layers):
        d_in = input_size if layer == 0 else hidden_size
        key, k1, k2, k3, k4 = jax.random.split(key, 5)
        w_ih = jax.random.uniform(k1, (4 * hidden_size, d_in), jnp.float32, -bound, bound)
        w_hh = jax.random.uniform(k2, (4 * hidden_size, hidden_size), jnp.float32, -bound, bound)
        b_ih = jax.random.uniform(k3, (4 * hidden_size,), jnp.float32, -bound, bound)
        b_hh = jax.random.uniform(k4, (4 * hidden_size,), jnp.float32, -bound, bound)
        layers.append((w_ih, w_hh, b_ih, b_hh))
    key, k5, k6 = jax.random.split(key, 3)
    w_out = jax.random.uniform(k5, (num_classes, hidden_size), jnp.float32, -bound, bound)
    b_out = jax.random.uniform(k6, (num_classes,), jnp.float32, -bound, bound)
    # Present on the module but unused by forward():
    input_noise = 0.01 * jnp.ones((input_size,), jnp.float32)   # noqa: F841
    discrete_values = jnp.linspace(-15.0, 15.0, num_classes)    # noqa: F841
    return layers, w_out, b_out


def prepare_params(layers, w_out, b_out, hidden_size, hidden_pad):
    """Repack PyTorch-layout params into the padded, transposed, bf16 kernel layout."""
    H, Hp = hidden_size, hidden_pad
    assert len(layers) == 2, "fused kernel is written for num_layers=2"

    def pad_gate_rows(w):          # (4H, K) -> (4Hp, K): zero-pad each gate's output rows
        k = w.shape[1]
        return jnp.pad(w.reshape(4, H, k), ((0, 0), (0, Hp - H), (0, 0))).reshape(4 * Hp, k)

    def pad_in_cols(w):            # (4Hp, H) -> (4Hp, Hp): zero-pad hidden-input columns
        return jnp.pad(w, ((0, 0), (0, Hp - H)))

    def pad_bias(b):               # (4H,) -> (1, 4Hp)
        return jnp.pad(b.reshape(4, H), ((0, 0), (0, Hp - H))).reshape(1, 4 * Hp)

    (w_ih0, w_hh0, b_ih0, b_hh0), (w_ih1, w_hh1, b_ih1, b_hh1) = layers

    w1ih = pad_gate_rows(w_ih0).T.astype(jnp.bfloat16)                # (Din, 4Hp)
    w1hh = pad_in_cols(pad_gate_rows(w_hh0)).T.astype(jnp.bfloat16)   # (Hp, 4Hp)
    b1 = pad_bias(b_ih0 + b_hh0)                                      # (1, 4Hp) f32

    w2ih = pad_in_cols(pad_gate_rows(w_ih1)).T.astype(jnp.bfloat16)   # (Hp, 4Hp)
    w2hh = pad_in_cols(pad_gate_rows(w_hh1)).T.astype(jnp.bfloat16)   # (Hp, 4Hp)
    b2 = pad_bias(b_ih1 + b_hh1)                                      # (1, 4Hp) f32

    wout = jnp.pad(w_out, ((0, 0), (0, Hp - H))).T.astype(jnp.bfloat16)  # (Hp, C)
    bout = b_out.reshape(1, -1)                                          # (1, C) f32
    return (w1ih, w1hh, b1, w2ih, w2hh, b2, wout, bout)


# ----------------------------------------------------------------------------
# Pure-JAX f32 reference (unpadded params) for correctness check.
# ----------------------------------------------------------------------------
def ref_forward(x, layers, w_out, b_out):
    B, T, _ = x.shape
    h_seq = jnp.transpose(x, (1, 0, 2))  # (T, B, Din)
    for (w_ih, w_hh, b_ih, b_hh) in layers:
        H = w_hh.shape[1]
        w_ih_t, w_hh_t, bias = w_ih.T, w_hh.T, b_ih + b_hh

        def step(carry, x_t, w_ih_t=w_ih_t, w_hh_t=w_hh_t, bias=bias, H=H):
            h, c = carry
            gates = x_t @ w_ih_t + h @ w_hh_t + bias
            i = jax.nn.sigmoid(gates[:, 0 * H:1 * H])
            f = jax.nn.sigmoid(gates[:, 1 * H:2 * H])
            g = jnp.tanh(gates[:, 2 * H:3 * H])
            o = jax.nn.sigmoid(gates[:, 3 * H:4 * H])
            c_new = f * c + i * g
            h_new = o * jnp.tanh(c_new)
            return (h_new, c_new), h_new

        init = (jnp.zeros((B, H), jnp.float32), jnp.zeros((B, H), jnp.float32))
        _, h_seq = lax.scan(step, init, h_seq)
    logits = h_seq @ w_out.T + b_out
    return jnp.transpose(jax.nn.log_softmax(logits, axis=-1), (1, 0, 2))


if __name__ == "__main__":
    # Small shapes consistent with the module defaults (input_size=2, hidden=64,
    # num_layers=2); num_classes=128 kept small and lane-aligned.
    B, T = 2, 8
    INPUT_SIZE, HIDDEN, NUM_LAYERS, NUM_CLASSES = 2, 64, 2, 128
    HIDDEN_PAD = 128  # pad hidden to a full 128-lane vreg

    key = jax.random.PRNGKey(0)
    key, kx, kp = jax.random.split(key, 3)
    x = jax.random.normal(kx, (B, T, INPUT_SIZE), jnp.float32)
    layers, w_out, b_out = init_raw_params(kp, INPUT_SIZE, HIDDEN, NUM_LAYERS, NUM_CLASSES)
    params = prepare_params(layers, w_out, b_out, HIDDEN, HIDDEN_PAD)

    logp = jax.block_until_ready(jax.jit(actuator_net_forward)(x, params))
    ref = jax.block_until_ready(ref_forward(x, layers, w_out, b_out))

    assert logp.shape == (B, T, NUM_CLASSES), logp.shape
    # Tolerance accounts for bf16 weight quantization vs. the f32 reference
    # (|w| <= 1/8, f32 accumulation; observed error is well inside this bound).
    assert jnp.allclose(logp, ref, atol=2e-2, rtol=1e-2), float(jnp.max(jnp.abs(logp - ref)))
    # log-softmax rows should exp-sum to 1
    assert jnp.allclose(jnp.sum(jnp.exp(logp), axis=-1), 1.0, atol=1e-3)

    print("KERNEL_OK")
</pallas_src>

<mosaic_0001>
module attributes {stable_mosaic.version = 11 : i64} {
  func.func @_fused_forward_kernel(%arg0: memref<64x2xf32, #tpu.memory_space<vmem>>, %arg1: memref<2x512xbf16, #tpu.memory_space<vmem>>, %arg2: memref<128x512xbf16, #tpu.memory_space<vmem>>, %arg3: memref<1x512xf32, #tpu.memory_space<vmem>>, %arg4: memref<128x512xbf16, #tpu.memory_space<vmem>>, %arg5: memref<128x512xbf16, #tpu.memory_space<vmem>>, %arg6: memref<1x512xf32, #tpu.memory_space<vmem>>, %arg7: memref<128x128xbf16, #tpu.memory_space<vmem>>, %arg8: memref<1x128xf32, #tpu.memory_space<vmem>>, %arg9: memref<64x128xf32, #tpu.memory_space<vmem>>) attributes {dimension_semantics = [], scalar_prefetch = 0 : i64, scratch_operands = 0 : i64, tpu.core_type = #tpu.core_type<tc>} {
    %c0 = arith.constant 0 : index
    %c0_0 = arith.constant 0 : index
    %0 = vector.load %arg2[%c0, %c0_0] : memref<128x512xbf16, #tpu.memory_space<vmem>>, vector<128x512xbf16>
    %c0_1 = arith.constant 0 : index
    %c0_2 = arith.constant 0 : index
    %1 = vector.load %arg4[%c0_1, %c0_2] : memref<128x512xbf16, #tpu.memory_space<vmem>>, vector<128x512xbf16>
    %c0_3 = arith.constant 0 : index
    %c0_4 = arith.constant 0 : index
    %2 = vector.load %arg5[%c0_3, %c0_4] : memref<128x512xbf16, #tpu.memory_space<vmem>>, vector<128x512xbf16>
    %c0_5 = arith.constant 0 : index
    %c0_6 = arith.constant 0 : index
    %3 = vector.load %arg0[%c0_5, %c0_6] : memref<64x2xf32, #tpu.memory_space<vmem>>, vector<64x2xf32>
    %4 = arith.truncf %3 : vector<64x2xf32> to vector<64x2xbf16>
    %c0_7 = arith.constant 0 : index
    %c0_8 = arith.constant 0 : index
    %5 = vector.load %arg1[%c0_7, %c0_8] : memref<2x512xbf16, #tpu.memory_space<vmem>>, vector<2x512xbf16>
    %cst = arith.constant dense<0.000000e+00> : vector<64x512xf32>
    %6 = tpu.matmul %4, %5, %cst {dimension_numbers = #tpu.dot_dimension_numbers<[1], [0], [0], [1], [0, 0, 1, 1], [], []>} : vector<64x2xbf16>, vector<2x512xbf16>, vector<64x512xf32> -> vector<64x512xf32>
    %c0_9 = arith.constant 0 : index
    %c0_10 = arith.constant 0 : index
    %7 = vector.load %arg3[%c0_9, %c0_10] : memref<1x512xf32, #tpu.memory_space<vmem>>, vector<1x512xf32>
    %8 = vector.broadcast %7 : vector<1x512xf32> to vector<64x512xf32>
    %9 = arith.addf %6, %8 : vector<64x512xf32>
    %c0_11 = arith.constant 0 : index
    %c0_12 = arith.constant 0 : index
    %10 = vector.load %arg6[%c0_11, %c0_12] : memref<1x512xf32, #tpu.memory_space<vmem>>, vector<1x512xf32>
    %11 = vector.shape_cast %10 : vector<1x512xf32> to vector<1x512xf32>
    %12 = vector.broadcast %11 : vector<1x512xf32> to vector<8x512xf32>
    %cst_13 = arith.constant 0.000000e+00 : f32
    %13 = vector.broadcast %cst_13 : f32 to vector<8x128xf32>
    %14 = vector.extract_strided_slice %9 {offsets = [0, 0], sizes = [8, 512], strides = [1, 1]} : vector<64x512xf32> to vector<8x512xf32>
    %15 = arith.truncf %13 : vector<8x128xf32> to vector<8x128xbf16>
    %cst_14 = arith.constant dense<0.000000e+00> : vector<8x512xf32>
    %16 = tpu.matmul %15, %0, %cst_14 {dimension_numbers = #tpu.dot_dimension_numbers<[1], [0], [0], [1], [0, 0, 1, 1], [], []>} : vector<8x128xbf16>, vector<128x512xbf16>, vector<8x512xf32> -> vector<8x512xf32>
    %17 = arith.addf %14, %16 : vector<8x512xf32>
    %18 = vector.extract_strided_slice %17 {offsets = [0, 0], sizes = [8, 128], strides = [1, 1]} : vector<8x512xf32> to vector<8x128xf32>
    %19 = arith.negf %18 : vector<8x128xf32>
    %20 = math.exp %19 : vector<8x128xf32>
    %cst_15 = arith.constant 1.000000e+00 : f32
    %21 = vector.broadcast %cst_15 : f32 to vector<8x128xf32>
    %22 = arith.addf %21, %20 : vector<8x128xf32>
    %23 = arith.divf %21, %22 : vector<8x128xf32>
    %24 = vector.extract_strided_slice %17 {offsets = [0, 128], sizes = [8, 128], strides = [1, 1]} : vector<8x512xf32> to vector<8x128xf32>
    %25 = arith.negf %24 : vector<8x128xf32>
    %26 = math.exp %25 : vector<8x128xf32>
    %cst_16 = arith.constant 1.000000e+00 : f32
    %27 = vector.broadcast %cst_16 : f32 to vector<8x128xf32>
    %28 = arith.addf %27, %26 : vector<8x128xf32>
    %29 = arith.divf %27, %28 : vector<8x128xf32>
    %30 = vector.extract_strided_slice %17 {offsets = [0, 256], sizes = [8, 128], strides = [1, 1]} : vector<8x512xf32> to vector<8x128xf32>
    %31 = math.tanh %30 : vector<8x128xf32>
    %32 = vector.extract_strided_slice %17 {offsets = [0, 384], sizes = [8, 128], strides = [1, 1]} : vector<8x512xf32> to vector<8x128xf32>
    %33 = arith.negf %32 : vector<8x128xf32>
    %34 = math.exp %33 : vector<8x128xf32>
    %cst_17 = arith.constant 1.000000e+00 : f32
    %35 = vector.broadcast %cst_17 : f32 to vector<8x128xf32>
    %36 = arith.addf %35, %34 : vector<8x128xf32>
    %37 = arith.divf %35, %36 : vector<8x128xf32>
    %38 = arith.mulf %29, %13 : vector<8x128xf32>
    %39 = arith.mulf %23, %31 : vector<8x128xf32>
    %40 = arith.addf %38, %39 : vector<8x128xf32>
    %41 = math.tanh %40 : vector<8x128xf32>
    %42 = arith.mulf %37, %41 : vector<8x128xf32>
    %43 = arith.truncf %42 : vector<8x128xf32> to vector<8x128xbf16>
    %cst_18 = arith.constant dense<0.000000e+00> : vector<8x512xf32>
    %44 = tpu.matmul %43, %1, %cst_18 {dimension_numbers = #tpu.dot_dimension_numbers<[1], [0], [0], [1], [0, 0, 1, 1], [], []>} : vector<8x128xbf16>, vector<128x512xbf16>, vector<8x512xf32> -> vector<8x512xf32>
    %45 = arith.truncf %13 : vector<8x128xf32> to vector<8x128xbf16>
    %cst_19 = arith.constant dense<0.000000e+00> : vector<8x512xf32>
    %46 = tpu.matmul %45, %2, %cst_19 {dimension_numbers = #tpu.dot_dimension_numbers<[1], [0], [0], [1], [0, 0, 1, 1], [], []>} : vector<8x128xbf16>, vector<128x512xbf16>, vector<8x512xf32> -> vector<8x512xf32>
    %47 = arith.addf %44, %46 : vector<8x512xf32>
    %48 = arith.addf %47, %12 : vector<8x512xf32>
    %49 = vector.extract_strided_slice %48 {offsets = [0, 0], sizes = [8, 128], strides = [1, 1]} : vector<8x512xf32> to vector<8x128xf32>
    %50 = arith.negf %49 : vector<8x128xf32>
    %51 = math.exp %50 : vector<8x128xf32>
    %cst_20 = arith.constant 1.000000e+00 : f32
    %52 = vector.broadcast %cst_20 : f32 to vector<8x128xf32>
    %53 = arith.addf %52, %51 : vector<8x128xf32>
    %54 = arith.divf %52, %53 : vector<8x128xf32>
    %55 = vector.extract_strided_slice %48 {offsets = [0, 128], sizes = [8, 128], strides = [1, 1]} : vector<8x512xf32> to vector<8x128xf32>
    %56 = arith.negf %55 : vector<8x128xf32>
    %57 = math.exp %56 : vector<8x128xf32>
    %cst_21 = arith.constant 1.000000e+00 : f32
    %58 = vector.broadcast %cst_21 : f32 to vector<8x128xf32>
    %59 = arith.addf %58, %57 : vector<8x128xf32>
    %60 = arith.divf %58, %59 : vector<8x128xf32>
    %61 = vector.extract_strided_slice %48 {offsets = [0, 256], sizes = [8, 128], strides = [1, 1]} : vector<8x512xf32> to vector<8x128xf32>
    %62 = math.tanh %61 : vector<8x128xf32>
    %63 = vector.extract_strided_slice %48 {offsets = [0, 384], sizes = [8, 128], strides = [1, 1]} : vector<8x512xf32> to vector<8x128xf32>
    %64 = arith.negf %63 : vector<8x128xf32>
    %65 = math.exp %64 : vector<8x128xf32>
    %cst_22 = arith.constant 1.000000e+00 : f32
    %66 = vector.broadcast %cst_22 : f32 to vector<8x128xf32>
    %67 = arith.addf %66, %65 : vector<8x128xf32>
    %68 = arith.divf %66, %67 : vector<8x128xf32>
    %69 = arith.mulf %60, %13 : vector<8x128xf32>
    %70 = arith.mulf %54, %62 : vector<8x128xf32>
    %71 = arith.addf %69, %70 : vector<8x128xf32>
    %72 = math.tanh %71 : vector<8x128xf32>
    %73 = arith.mulf %68, %72 : vector<8x128xf32>
    %74 = vector.extract_strided_slice %9 {offsets = [8, 0], sizes = [8, 512], strides = [1, 1]} : vector<64x512xf32> to vector<8x512xf32>
    %75 = arith.truncf %42 : vector<8x128xf32> to vector<8x128xbf16>
    %cst_23 = arith.constant dense<0.000000e+00> : vector<8x512xf32>
    %76 = tpu.matmul %75, %0, %cst_23 {dimension_numbers = #tpu.dot_dimension_numbers<[1], [0], [0], [1], [0, 0, 1, 1], [], []>} : vector<8x128xbf16>, vector<128x512xbf16>, vector<8x512xf32> -> vector<8x512xf32>
    %77 = arith.addf %74, %76 : vector<8x512xf32>
    %78 = vector.extract_strided_slice %77 {offsets = [0, 0], sizes = [8, 128], strides = [1, 1]} : vector<8x512xf32> to vector<8x128xf32>
    %79 = arith.negf %78 : vector<8x128xf32>
    %80 = math.exp %79 : vector<8x128xf32>
    %cst_24 = arith.constant 1.000000e+00 : f32
    %81 = vector.broadcast %cst_24 : f32 to vector<8x128xf32>
    %82 = arith.addf %81, %80 : vector<8x128xf32>
    %83 = arith.divf %81, %82 : vector<8x128xf32>
    %84 = vector.extract_strided_slice %77 {offsets = [0, 128], sizes = [8, 128], strides = [1, 1]} : vector<8x512xf32> to vector<8x128xf32>
    %85 = arith.negf %84 : vector<8x128xf32>
    %86 = math.exp %85 : vector<8x128xf32>
    %cst_25 = arith.constant 1.000000e+00 : f32
    %87 = vector.broadcast %cst_25 : f32 to vector<8x128xf32>
    %88 = arith.addf %87, %86 : vector<8x128xf32>
    %89 = arith.divf %87, %88 : vector<8x128xf32>
    %90 = vector.extract_strided_slice %77 {offsets = [0, 256], sizes = [8, 128], strides = [1, 1]} : vector<8x512xf32> to vector<8x128xf32>
    %91 = math.tanh %90 : vector<8x128xf32>
    %92 = vector.extract_strided_slice %77 {offsets = [0, 384], sizes = [8, 128], strides = [1, 1]} : vector<8x512xf32> to vector<8x128xf32>
    %93 = arith.negf %92 : vector<8x128xf32>
    %94 = math.exp %93 : vector<8x128xf32>
    %cst_26 = arith.constant 1.000000e+00 : f32
    %95 = vector.broadcast %cst_26 : f32 to vector<8x128xf32>
    %96 = arith.addf %95, %94 : vector<8x128xf32>
    %97 = arith.divf %95, %96 : vector<8x128xf32>
    %98 = arith.mulf %89, %40 : vector<8x128xf32>
    %99 = arith.mulf %83, %91 : vector<8x128xf32>
    %100 = arith.addf %98, %99 : vector<8x128xf32>
    %101 = math.tanh %100 : vector<8x128xf32>
    %102 = arith.mulf %97, %101 : vector<8x128xf32>
    %103 = arith.truncf %102 : vector<8x128xf32> to vector<8x128xbf16>
    %cst_27 = arith.constant dense<0.000000e+00> : vector<8x512xf32>
    %104 = tpu.matmul %103, %1, %cst_27 {dimension_numbers = #tpu.dot_dimension_numbers<[1], [0], [0], [1], [0, 0, 1, 1], [], []>} : vector<8x128xbf16>, vector<128x512xbf16>, vector<8x512xf32> -> vector<8x512xf32>
    %105 = arith.truncf %73 : vector<8x128xf32> to vector<8x128xbf16>
    %cst_28 = arith.constant dense<0.000000e+00> : vector<8x512xf32>
    %106 = tpu.matmul %105, %2, %cst_28 {dimension_numbers = #tpu.dot_dimension_numbers<[1], [0], [0], [1], [0, 0, 1, 1], [], []>} : vector<8x128xbf16>, vector<128x512xbf16>, vector<8x512xf32> -> vector<8x512xf32>
    %107 = arith.addf %104, %106 : vector<8x512xf32>
    %108 = arith.addf %107, %12 : vector<8x512xf32>
    %109 = vector.extract_strided_slice %108 {offsets = [0, 0], sizes = [8, 128], strides = [1, 1]} : vector<8x512xf32> to vector<8x128xf32>
    %110 = arith.negf %109 : vector<8x128xf32>
    %111 = math.exp %110 : vector<8x128xf32>
    %cst_29 = arith.constant 1.000000e+00 : f32
    %112 = vector.broadcast %cst_29 : f32 to vector<8x128xf32>
    %113 = arith.addf %112, %111 : vector<8x128xf32>
    %114 = arith.divf %112, %113 : vector<8x128xf32>
    %115 = vector.extract_strided_slice %108 {offsets = [0, 128], sizes = [8, 128], strides = [1, 1]} : vector<8x512xf32> to vector<8x128xf32>
    %116 = arith.negf %115 : vector<8x128xf32>
    %117 = math.exp %116 : vector<8x128xf32>
    %cst_30 = arith.constant 1.000000e+00 : f32
    %118 = vector.broadcast %cst_30 : f32 to vector<8x128xf32>
    %119 = arith.addf %118, %117 : vector<8x128xf32>
    %120 = arith.divf %118, %119 : vector<8x128xf32>
    %121 = vector.extract_strided_slice %108 {offsets = [0, 256], sizes = [8, 128], strides = [1, 1]} : vector<8x512xf32> to vector<8x128xf32>
    %122 = math.tanh %121 : vector<8x128xf32>
    %123 = vector.extract_strided_slice %108 {offsets = [0, 384], sizes = [8, 128], strides = [1, 1]} : vector<8x512xf32> to vector<8x128xf32>
    %124 = arith.negf %123 : vector<8x128xf32>
    %125 = math.exp %124 : vector<8x128xf32>
    %cst_31 = arith.constant 1.000000e+00 : f32
    %126 = vector.broadcast %cst_31 : f32 to vector<8x128xf32>
    %127 = arith.addf %126, %125 : vector<8x128xf32>
    %128 = arith.divf %126, %127 : vector<8x128xf32>
    %129 = arith.mulf %120, %71 : vector<8x128xf32>
    %130 = arith.mulf %114, %122 : vector<8x128xf32>
    %131 = arith.addf %129, %130 : vector<8x128xf32>
    %132 = math.tanh %131 : vector<8x128xf32>
    %133 = arith.mulf %128, %132 : vector<8x128xf32>
    %134 = vector.extract_strided_slice %9 {offsets = [16, 0], sizes = [8, 512], strides = [1, 1]} : vector<64x512xf32> to vector<8x512xf32>
    %135 = arith.truncf %102 : vector<8x128xf32> to vector<8x128xbf16>
    %cst_32 = arith.constant dense<0.000000e+00> : vector<8x512xf32>
    %136 = tpu.matmul %135, %0, %cst_32 {dimension_numbers = #tpu.dot_dimension_numbers<[1], [0], [0], [1], [0, 0, 1, 1], [], []>} : vector<8x128xbf16>, vector<128x512xbf16>, vector<8x512xf32> -> vector<8x512xf32>
    %137 = arith.addf %134, %136 : vector<8x512xf32>
    %138 = vector.extract_strided_slice %137 {offsets = [0, 0], sizes = [8, 128], strides = [1, 1]} : vector<8x512xf32> to vector<8x128xf32>
    %139 = arith.negf %138 : vector<8x128xf32>
    %140 = math.exp %139 : vector<8x128xf32>
    %cst_33 = arith.constant 1.000000e+00 : f32
    %141 = vector.broadcast %cst_33 : f32 to vector<8x128xf32>
    %142 = arith.addf %141, %140 : vector<8x128xf32>
    %143 = arith.divf %141, %142 : vector<8x128xf32>
    %144 = vector.extract_strided_slice %137 {offsets = [0, 128], sizes = [8, 128], strides = [1, 1]} : vector<8x512xf32> to vector<8x128xf32>
    %145 = arith.negf %144 : vector<8x128xf32>
    %146 = math.exp %145 : vector<8x128xf32>
    %cst_34 = arith.constant 1.000000e+00 : f32
    %147 = vector.broadcast %cst_34 : f32 to vector<8x128xf32>
    %148 = arith.addf %147, %146 : vector<8x128xf32>
    %149 = arith.divf %147, %148 : vector<8x128xf32>
    %150 = vector.extract_strided_slice %137 {offsets = [0, 256], sizes = [8, 128], strides = [1, 1]} : vector<8x512xf32> to vector<8x128xf32>
    %151 = math.tanh %150 : vector<8x128xf32>
    %152 = vector.extract_strided_slice %137 {offsets = [0, 384], sizes = [8, 128], strides = [1, 1]} : vector<8x512xf32> to vector<8x128xf32>
    %153 = arith.negf %152 : vector<8x128xf32>
    %154 = math.exp %153 : vector<8x128xf32>
    %cst_35 = arith.constant 1.000000e+00 : f32
    %155 = vector.broadcast %cst_35 : f32 to vector<8x128xf32>
    %156 = arith.addf %155, %154 : vector<8x128xf32>
    %157 = arith.divf %155, %156 : vector<8x128xf32>
    %158 = arith.mulf %149, %100 : vector<8x128xf32>
    %159 = arith.mulf %143, %151 : vector<8x128xf32>
    %160 = arith.addf %158, %159 : vector<8x128xf32>
    %161 = math.tanh %160 : vector<8x128xf32>
    %162 = arith.mulf %157, %161 : vector<8x128xf32>
    %163 = arith.truncf %162 : vector<8x128xf32> to vector<8x128xbf16>
    %cst_36 = arith.constant dense<0.000000e+00> : vector<8x512xf32>
    %164 = tpu.matmul %163, %1, %cst_36 {dimension_numbers = #tpu.dot_dimension_numbers<[1], [0], [0], [1], [0, 0, 1, 1], [], []>} : vector<8x128xbf16>, vector<128x512xbf16>, vector<8x512xf32> -> vector<8x512xf32>
    %165 = arith.truncf %133 : vector<8x128xf32> to vector<8x128xbf16>
    %cst_37 = arith.constant dense<0.000000e+00> : vector<8x512xf32>
    %166 = tpu.matmul %165, %2, %cst_37 {dimension_numbers = #tpu.dot_dimension_numbers<[1], [0], [0], [1], [0, 0, 1, 1], [], []>} : vector<8x128xbf16>, vector<128x512xbf16>, vector<8x512xf32> -> vector<8x512xf32>
    %167 = arith.addf %164, %166 : vector<8x512xf32>
    %168 = arith.addf %167, %12 : vector<8x512xf32>
    %169 = vector.extract_strided_slice %168 {offsets = [0, 0], sizes = [8, 128], strides = [1, 1]} : vector<8x512xf32> to vector<8x128xf32>
    %170 = arith.negf %169 : vector<8x128xf32>
    %171 = math.exp %170 : vector<8x128xf32>
    %cst_38 = arith.constant 1.000000e+00 : f32
    %172 = vector.broadcast %cst_38 : f32 to vector<8x128xf32>
    %173 = arith.addf %172, %171 : vector<8x128xf32>
    %174 = arith.divf %172, %173 : vector<8x128xf32>
    %175 = vector.extract_strided_slice %168 {offsets = [0, 128], sizes = [8, 128], strides = [1, 1]} : vector<8x512xf32> to vector<8x128xf32>
    %176 = arith.negf %175 : vector<8x128xf32>
    %177 = math.exp %176 : vector<8x128xf32>
    %cst_39 = arith.constant 1.000000e+00 : f32
    %178 = vector.broadcast %cst_39 : f32 to vector<8x128xf32>
    %179 = arith.addf %178, %177 : vector<8x128xf32>
    %180 = arith.divf %178, %179 : vector<8x128xf32>
    %181 = vector.extract_strided_slice %168 {offsets = [0, 256], sizes = [8, 128], strides = [1, 1]} : vector<8x512xf32> to vector<8x128xf32>
    %182 = math.tanh %181 : vector<8x128xf32>
    %183 = vector.extract_strided_slice %168 {offsets = [0, 384], sizes = [8, 128], strides = [1, 1]} : vector<8x512xf32> to vector<8x128xf32>
    %184 = arith.negf %183 : vector<8x128xf32>
    %185 = math.exp %184 : vector<8x128xf32>
    %cst_40 = arith.constant 1.000000e+00 : f32
    %186 = vector.broadcast %cst_40 : f32 to vector<8x128xf32>
    %187 = arith.addf %186, %185 : vector<8x128xf32>
    %188 = arith.divf %186, %187 : vector<8x128xf32>
    %189 = arith.mulf %180, %131 : vector<8x128xf32>
    %190 = arith.mulf %174, %182 : vector<8x128xf32>
    %191 = arith.addf %189, %190 : vector<8x128xf32>
    %192 = math.tanh %191 : vector<8x128xf32>
    %193 = arith.mulf %188, %192 : vector<8x128xf32>
    %194 = vector.extract_strided_slice %9 {offsets = [24, 0], sizes = [8, 512], strides = [1, 1]} : vector<64x512xf32> to vector<8x512xf32>
    %195 = arith.truncf %162 : vector<8x128xf32> to vector<8x128xbf16>
    %cst_41 = arith.constant dense<0.000000e+00> : vector<8x512xf32>
    %196 = tpu.matmul %195, %0, %cst_41 {dimension_numbers = #tpu.dot_dimension_numbers<[1], [0], [0], [1], [0, 0, 1, 1], [], []>} : vector<8x128xbf16>, vector<128x512xbf16>, vector<8x512xf32> -> vector<8x512xf32>
    %197 = arith.addf %194, %196 : vector<8x512xf32>
    %198 = vector.extract_strided_slice %197 {offsets = [0, 0], sizes = [8, 128], strides = [1, 1]} : vector<8x512xf32> to vector<8x128xf32>
    %199 = arith.negf %198 : vector<8x128xf32>
    %200 = math.exp %199 : vector<8x128xf32>
    %cst_42 = arith.constant 1.000000e+00 : f32
    %201 = vector.broadcast %cst_42 : f32 to vector<8x128xf32>
    %202 = arith.addf %201, %200 : vector<8x128xf32>
    %203 = arith.divf %201, %202 : vector<8x128xf32>
    %204 = vector.extract_strided_slice %197 {offsets = [0, 128], sizes = [8, 128], strides = [1, 1]} : vector<8x512xf32> to vector<8x128xf32>
    %205 = arith.negf %204 : vector<8x128xf32>
    %206 = math.exp %205 : vector<8x128xf32>
    %cst_43 = arith.constant 1.000000e+00 : f32
    %207 = vector.broadcast %cst_43 : f32 to vector<8x128xf32>
    %208 = arith.addf %207, %206 : vector<8x128xf32>
    %209 = arith.divf %207, %208 : vector<8x128xf32>
    %210 = vector.extract_strided_slice %197 {offsets = [0, 256], sizes = [8, 128], strides = [1, 1]} : vector<8x512xf32> to vector<8x128xf32>
    %211 = math.tanh %210 : vector<8x128xf32>
    %212 = vector.extract_strided_slice %197 {offsets = [0, 384], sizes = [8, 128], strides = [1, 1]} : vector<8x512xf32> to vector<8x128xf32>
    %213 = arith.negf %212 : vector<8x128xf32>
    %214 = math.exp %213 : vector<8x128xf32>
    %cst_44 = arith.constant 1.000000e+00 : f32
    %215 = vector.broadcast %cst_44 : f32 to vector<8x128xf32>
    %216 = arith.addf %215, %214 : vector<8x128xf32>
    %217 = arith.divf %215, %216 : vector<8x128xf32>
    %218 = arith.mulf %209, %160 : vector<8x128xf32>
    %219 = arith.mulf %203, %211 : vector<8x128xf32>
    %220 = arith.addf %218, %219 : vector<8x128xf32>
    %221 = math.tanh %220 : vector<8x128xf32>
    %222 = arith.mulf %217, %221 : vector<8x128xf32>
    %223 = arith.truncf %222 : vector<8x128xf32> to vector<8x128xbf16>
    %cst_45 = arith.constant dense<0.000000e+00> : vector<8x512xf32>
    %224 = tpu.matmul %223, %1, %cst_45 {dimension_numbers = #tpu.dot_dimension_numbers<[1], [0], [0], [1], [0, 0, 1, 1], [], []>} : vector<8x128xbf16>, vector<128x512xbf16>, vector<8x512xf32> -> vector<8x512xf32>
    %225 = arith.truncf %193 : vector<8x128xf32> to vector<8x128xbf16>
    %cst_46 = arith.constant dense<0.000000e+00> : vector<8x512xf32>
    %226 = tpu.matmul %225, %2, %cst_46 {dimension_numbers = #tpu.dot_dimension_numbers<[1], [0], [0], [1], [0, 0, 1, 1], [], []>} : vector<8x128xbf16>, vector<128x512xbf16>, vector<8x512xf32> -> vector<8x512xf32>
    %227 = arith.addf %224, %226 : vector<8x512xf32>
    %228 = arith.addf %227, %12 : vector<8x512xf32>
    %229 = vector.extract_strided_slice %228 {offsets = [0, 0], sizes = [8, 128], strides = [1, 1]} : vector<8x512xf32> to vector<8x128xf32>
    %230 = arith.negf %229 : vector<8x128xf32>
    %231 = math.exp %230 : vector<8x128xf32>
    %cst_47 = arith.constant 1.000000e+00 : f32
    %232 = vector.broadcast %cst_47 : f32 to vector<8x128xf32>
    %233 = arith.addf %232, %231 : vector<8x128xf32>
    %234 = arith.divf %232, %233 : vector<8x128xf32>
    %235 = vector.extract_strided_slice %228 {offsets = [0, 128], sizes = [8, 128], strides = [1, 1]} : vector<8x512xf32> to vector<8x128xf32>
    %236 = arith.negf %235 : vector<8x128xf32>
    %237 = math.exp %236 : vector<8x128xf32>
    %cst_48 = arith.constant 1.000000e+00 : f32
    %238 = vector.broadcast %cst_48 : f32 to vector<8x128xf32>
    %239 = arith.addf %238, %237 : vector<8x128xf32>
    %240 = arith.divf %238, %239 : vector<8x128xf32>
    %241 = vector.extract_strided_slice %228 {offsets = [0, 256], sizes = [8, 128], strides = [1, 1]} : vector<8x512xf32> to vector<8x128xf32>
    %242 = math.tanh %241 : vector<8x128xf32>
    %243 = vector.extract_strided_slice %228 {offsets = [0, 384], sizes = [8, 128], strides = [1, 1]} : vector<8x512xf32> to vector<8x128xf32>
    %244 = arith.negf %243 : vector<8x128xf32>
    %245 = math.exp %244 : vector<8x128xf32>
    %cst_49 = arith.constant 1.000000e+00 : f32
    %246 = vector.broadcast %cst_49 : f32 to vector<8x128xf32>
    %247 = arith.addf %246, %245 : vector<8x128xf32>
    %248 = arith.divf %246, %247 : vector<8x128xf32>
    %249 = arith.mulf %240, %191 : vector<8x128xf32>
    %250 = arith.mulf %234, %242 : vector<8x128xf32>
    %251 = arith.addf %249, %250 : vector<8x128xf32>
    %252 = math.tanh %251 : vector<8x128xf32>
    %253 = arith.mulf %248, %252 : vector<8x128xf32>
    %254 = vector.extract_strided_slice %9 {offsets = [32, 0], sizes = [8, 512], strides = [1, 1]} : vector<64x512xf32> to vector<8x512xf32>
    %255 = arith.truncf %222 : vector<8x128xf32> to vector<8x128xbf16>
    %cst_50 = arith.constant dense<0.000000e+00> : vector<8x512xf32>
    %256 = tpu.matmul %255, %0, %cst_50 {dimension_numbers = #tpu.dot_dimension_numbers<[1], [0], [0], [1], [0, 0, 1, 1], [], []>} : vector<8x128xbf16>, vector<128x512xbf16>, vector<8x512xf32> -> vector<8x512xf32>
    %257 = arith.addf %254, %256 : vector<8x512xf32>
    %258 = vector.extract_strided_slice %257 {offsets = [0, 0], sizes = [8, 128], strides = [1, 1]} : vector<8x512xf32> to vector<8x128xf32>
    %259 = arith.negf %258 : vector<8x128xf32>
    %260 = math.exp %259 : vector<8x128xf32>
    %cst_51 = arith.constant 1.000000e+00 : f32
    %261 = vector.broadcast %cst_51 : f32 to vector<8x128xf32>
    %262 = arith.addf %261, %260 : vector<8x128xf32>
    %263 = arith.divf %261, %262 : vector<8x128xf32>
    %264 = vector.extract_strided_slice %257 {offsets = [0, 128], sizes = [8, 128], strides = [1, 1]} : vector<8x512xf32> to vector<8x128xf32>
    %265 = arith.negf %264 : vector<8x128xf32>
    %266 = math.exp %265 : vector<8x128xf32>
    %cst_52 = arith.constant 1.000000e+00 : f32
    %267 = vector.broadcast %cst_52 : f32 to vector<8x128xf32>
    %268 = arith.addf %267, %266 : vector<8x128xf32>
    %269 = arith.divf %267, %268 : vector<8x128xf32>
    %270 = vector.extract_strided_slice %257 {offsets = [0, 256], sizes = [8, 128], strides = [1, 1]} : vector<8x512xf32> to vector<8x128xf32>
    %271 = math.tanh %270 : vector<8x128xf32>
    %272 = vector.extract_strided_slice %257 {offsets = [0, 384], sizes = [8, 128], strides = [1, 1]} : vector<8x512xf32> to vector<8x128xf32>
    %273 = arith.negf %272 : vector<8x128xf32>
    %274 = math.exp %273 : vector<8x128xf32>
    %cst_53 = arith.constant 1.000000e+00 : f32
    %275 = vector.broadcast %cst_53 : f32 to vector<8x128xf32>
    %276 = arith.addf %275, %274 : vector<8x128xf32>
    %277 = arith.divf %275, %276 : vector<8x128xf32>
    %278 = arith.mulf %269, %220 : vector<8x128xf32>
    %279 = arith.mulf %263, %271 : vector<8x128xf32>
    %280 = arith.addf %278, %279 : vector<8x128xf32>
    %281 = math.tanh %280 : vector<8x128xf32>
    %282 = arith.mulf %277, %281 : vector<8x128xf32>
    %283 = arith.truncf %282 : vector<8x128xf32> to vector<8x128xbf16>
    %cst_54 = arith.constant dense<0.000000e+00> : vector<8x512xf32>
    %284 = tpu.matmul %283, %1, %cst_54 {dimension_numbers = #tpu.dot_dimension_numbers<[1], [0], [0], [1], [0, 0, 1, 1], [], []>} : vector<8x128xbf16>, vector<128x512xbf16>, vector<8x512xf32> -> vector<8x512xf32>
    %285 = arith.truncf %253 : vector<8x128xf32> to vector<8x128xbf16>
    %cst_55 = arith.constant dense<0.000000e+00> : vector<8x512xf32>
    %286 = tpu.matmul %285, %2, %cst_55 {dimension_numbers = #tpu.dot_dimension_numbers<[1], [0], [0], [1], [0, 0, 1, 1], [], []>} : vector<8x128xbf16>, vector<128x512xbf16>, vector<8x512xf32> -> vector<8x512xf32>
    %287 = arith.addf %284, %286 : vector<8x512xf32>
    %288 = arith.addf %287, %12 : vector<8x512xf32>
    %289 = vector.extract_strided_slice %288 {offsets = [0, 0], sizes = [8, 128], strides = [1, 1]} : vector<8x512xf32> to vector<8x128xf32>
    %290 = arith.negf %289 : vector<8x128xf32>
    %291 = math.exp %290 : vector<8x128xf32>
    %cst_56 = arith.constant 1.000000e+00 : f32
    %292 = vector.broadcast %cst_56 : f32 to vector<8x128xf32>
    %293 = arith.addf %292, %291 : vector<8x128xf32>
    %294 = arith.divf %292, %293 : vector<8x128xf32>
    %295 = vector.extract_strided_slice %288 {offsets = [0, 128], sizes = [8, 128], strides = [1, 1]} : vector<8x512xf32> to vector<8x128xf32>
    %296 = arith.negf %295 : vector<8x128xf32>
    %297 = math.exp %296 : vector<8x128xf32>
    %cst_57 = arith.constant 1.000000e+00 : f32
    %298 = vector.broadcast %cst_57 : f32 to vector<8x128xf32>
    %299 = arith.addf %298, %297 : vector<8x128xf32>
    %300 = arith.divf %298, %299 : vector<8x128xf32>
    %301 = vector.extract_strided_slice %288 {offsets = [0, 256], sizes = [8, 128], strides = [1, 1]} : vector<8x512xf32> to vector<8x128xf32>
    %302 = math.tanh %301 : vector<8x128xf32>
    %303 = vector.extract_strided_slice %288 {offsets = [0, 384], sizes = [8, 128], strides = [1, 1]} : vector<8x512xf32> to vector<8x128xf32>
    %304 = arith.negf %303 : vector<8x128xf32>
    %305 = math.exp %304 : vector<8x128xf32>
    %cst_58 = arith.constant 1.000000e+00 : f32
    %306 = vector.broadcast %cst_58 : f32 to vector<8x128xf32>
    %307 = arith.addf %306, %305 : vector<8x128xf32>
    %308 = arith.divf %306, %307 : vector<8x128xf32>
    %309 = arith.mulf %300, %251 : vector<8x128xf32>
    %310 = arith.mulf %294, %302 : vector<8x128xf32>
    %311 = arith.addf %309, %310 : vector<8x128xf32>
    %312 = math.tanh %311 : vector<8x128xf32>
    %313 = arith.mulf %308, %312 : vector<8x128xf32>
    %314 = vector.extract_strided_slice %9 {offsets = [40, 0], sizes = [8, 512], strides = [1, 1]} : vector<64x512xf32> to vector<8x512xf32>
    %315 = arith.truncf %282 : vector<8x128xf32> to vector<8x128xbf16>
    %cst_59 = arith.constant dense<0.000000e+00> : vector<8x512xf32>
    %316 = tpu.matmul %315, %0, %cst_59 {dimension_numbers = #tpu.dot_dimension_numbers<[1], [0], [0], [1], [0, 0, 1, 1], [], []>} : vector<8x128xbf16>, vector<128x512xbf16>, vector<8x512xf32> -> vector<8x512xf32>
    %317 = arith.addf %314, %316 : vector<8x512xf32>
    %318 = vector.extract_strided_slice %317 {offsets = [0, 0], sizes = [8, 128], strides = [1, 1]} : vector<8x512xf32> to vector<8x128xf32>
    %319 = arith.negf %318 : vector<8x128xf32>
    %320 = math.exp %319 : vector<8x128xf32>
    %cst_60 = arith.constant 1.000000e+00 : f32
    %321 = vector.broadcast %cst_60 : f32 to vector<8x128xf32>
    %322 = arith.addf %321, %320 : vector<8x128xf32>
    %323 = arith.divf %321, %322 : vector<8x128xf32>
    %324 = vector.extract_strided_slice %317 {offsets = [0, 128], sizes = [8, 128], strides = [1, 1]} : vector<8x512xf32> to vector<8x128xf32>
    %325 = arith.negf %324 : vector<8x128xf32>
    %326 = math.exp %325 : vector<8x128xf32>
    %cst_61 = arith.constant 1.000000e+00 : f32
    %327 = vector.broadcast %cst_61 : f32 to vector<8x128xf32>
    %328 = arith.addf %327, %326 : vector<8x128xf32>
    %329 = arith.divf %327, %328 : vector<8x128xf32>
    %330 = vector.extract_strided_slice %317 {offsets = [0, 256], sizes = [8, 128], strides = [1, 1]} : vector<8x512xf32> to vector<8x128xf32>
    %331 = math.tanh %330 : vector<8x128xf32>
    %332 = vector.extract_strided_slice %317 {offsets = [0, 384], sizes = [8, 128], strides = [1, 1]} : vector<8x512xf32> to vector<8x128xf32>
    %333 = arith.negf %332 : vector<8x128xf32>
    %334 = math.exp %333 : vector<8x128xf32>
    %cst_62 = arith.constant 1.000000e+00 : f32
    %335 = vector.broadcast %cst_62 : f32 to vector<8x128xf32>
    %336 = arith.addf %335, %334 : vector<8x128xf32>
    %337 = arith.divf %335, %336 : vector<8x128xf32>
    %338 = arith.mulf %329, %280 : vector<8x128xf32>
    %339 = arith.mulf %323, %331 : vector<8x128xf32>
    %340 = arith.addf %338, %339 : vector<8x128xf32>
    %341 = math.tanh %340 : vector<8x128xf32>
    %342 = arith.mulf %337, %341 : vector<8x128xf32>
    %343 = arith.truncf %342 : vector<8x128xf32> to vector<8x128xbf16>
    %cst_63 = arith.constant dense<0.000000e+00> : vector<8x512xf32>
    %344 = tpu.matmul %343, %1, %cst_63 {dimension_numbers = #tpu.dot_dimension_numbers<[1], [0], [0], [1], [0, 0, 1, 1], [], []>} : vector<8x128xbf16>, vector<128x512xbf16>, vector<8x512xf32> -> vector<8x512xf32>
    %345 = arith.truncf %313 : vector<8x128xf32> to vector<8x128xbf16>
    %cst_64 = arith.constant dense<0.000000e+00> : vector<8x512xf32>
    %346 = tpu.matmul %345, %2, %cst_64 {dimension_numbers = #tpu.dot_dimension_numbers<[1], [0], [0], [1], [0, 0, 1, 1], [], []>} : vector<8x128xbf16>, vector<128x512xbf16>, vector<8x512xf32> -> vector<8x512xf32>
    %347 = arith.addf %344, %346 : vector<8x512xf32>
    %348 = arith.addf %347, %12 : vector<8x512xf32>
    %349 = vector.extract_strided_slice %348 {offsets = [0, 0], sizes = [8, 128], strides = [1, 1]} : vector<8x512xf32> to vector<8x128xf32>
    %350 = arith.negf %349 : vector<8x128xf32>
    %351 = math.exp %350 : vector<8x128xf32>
    %cst_65 = arith.constant 1.000000e+00 : f32
    %352 = vector.broadcast %cst_65 : f32 to vector<8x128xf32>
    %353 = arith.addf %352, %351 : vector<8x128xf32>
    %354 = arith.divf %352, %353 : vector<8x128xf32>
    %355 = vector.extract_strided_slice %348 {offsets = [0, 128], sizes = [8, 128], strides = [1, 1]} : vector<8x512xf32> to vector<8x128xf32>
    %356 = arith.negf %355 : vector<8x128xf32>
    %357 = math.exp %356 : vector<8x128xf32>
    %cst_66 = arith.constant 1.000000e+00 : f32
    %358 = vector.broadcast %cst_66 : f32 to vector<8x128xf32>
    %359 = arith.addf %358, %357 : vector<8x128xf32>
    %360 = arith.divf %358, %359 : vector<8x128xf32>
    %361 = vector.extract_strided_slice %348 {offsets = [0, 256], sizes = [8, 128], strides = [1, 1]} : vector<8x512xf32> to vector<8x128xf32>
    %362 = math.tanh %361 : vector<8x128xf32>
    %363 = vector.extract_strided_slice %348 {offsets = [0, 384], sizes = [8, 128], strides = [1, 1]} : vector<8x512xf32> to vector<8x128xf32>
    %364 = arith.negf %363 : vector<8x128xf32>
    %365 = math.exp %364 : vector<8x128xf32>
    %cst_67 = arith.constant 1.000000e+00 : f32
    %366 = vector.broadcast %cst_67 : f32 to vector<8x128xf32>
    %367 = arith.addf %366, %365 : vector<8x128xf32>
    %368 = arith.divf %366, %367 : vector<8x128xf32>
    %369 = arith.mulf %360, %311 : vector<8x128xf32>
    %370 = arith.mulf %354, %362 : vector<8x128xf32>
    %371 = arith.addf %369, %370 : vector<8x128xf32>
    %372 = math.tanh %371 : vector<8x128xf32>
    %373 = arith.mulf %368, %372 : vector<8x128xf32>
    %374 = vector.extract_strided_slice %9 {offsets = [48, 0], sizes = [8, 512], strides = [1, 1]} : vector<64x512xf32> to vector<8x512xf32>
    %375 = arith.truncf %342 : vector<8x128xf32> to vector<8x128xbf16>
    %cst_68 = arith.constant dense<0.000000e+00> : vector<8x512xf32>
    %376 = tpu.matmul %375, %0, %cst_68 {dimension_numbers = #tpu.dot_dimension_numbers<[1], [0], [0], [1], [0, 0, 1, 1], [], []>} : vector<8x128xbf16>, vector<128x512xbf16>, vector<8x512xf32> -> vector<8x512xf32>
    %377 = arith.addf %374, %376 : vector<8x512xf32>
    %378 = vector.extract_strided_slice %377 {offsets = [0, 0], sizes = [8, 128], strides = [1, 1]} : vector<8x512xf32> to vector<8x128xf32>
    %379 = arith.negf %378 : vector<8x128xf32>
    %380 = math.exp %379 : vector<8x128xf32>
    %cst_69 = arith.constant 1.000000e+00 : f32
    %381 = vector.broadcast %cst_69 : f32 to vector<8x128xf32>
    %382 = arith.addf %381, %380 : vector<8x128xf32>
    %383 = arith.divf %381, %382 : vector<8x128xf32>
    %384 = vector.extract_strided_slice %377 {offsets = [0, 128], sizes = [8, 128], strides = [1, 1]} : vector<8x512xf32> to vector<8x128xf32>
    %385 = arith.negf %384 : vector<8x128xf32>
    %386 = math.exp %385 : vector<8x128xf32>
    %cst_70 = arith.constant 1.000000e+00 : f32
    %387 = vector.broadcast %cst_70 : f32 to vector<8x128xf32>
    %388 = arith.addf %387, %386 : vector<8x128xf32>
    %389 = arith.divf %387, %388 : vector<8x128xf32>
    %390 = vector.extract_strided_slice %377 {offsets = [0, 256], sizes = [8, 128], strides = [1, 1]} : vector<8x512xf32> to vector<8x128xf32>
    %391 = math.tanh %390 : vector<8x128xf32>
    %392 = vector.extract_strided_slice %377 {offsets = [0, 384], sizes = [8, 128], strides = [1, 1]} : vector<8x512xf32> to vector<8x128xf32>
    %393 = arith.negf %392 : vector<8x128xf32>
    %394 = math.exp %393 : vector<8x128xf32>
    %cst_71 = arith.constant 1.000000e+00 : f32
    %395 = vector.broadcast %cst_71 : f32 to vector<8x128xf32>
    %396 = arith.addf %395, %394 : vector<8x128xf32>
    %397 = arith.divf %395, %396 : vector<8x128xf32>
    %398 = arith.mulf %389, %340 : vector<8x128xf32>
    %399 = arith.mulf %383, %391 : vector<8x128xf32>
    %400 = arith.addf %398, %399 : vector<8x128xf32>
    %401 = math.tanh %400 : vector<8x128xf32>
    %402 = arith.mulf %397, %401 : vector<8x128xf32>
    %403 = arith.truncf %402 : vector<8x128xf32> to vector<8x128xbf16>
    %cst_72 = arith.constant dense<0.000000e+00> : vector<8x512xf32>
    %404 = tpu.matmul %403, %1, %cst_72 {dimension_numbers = #tpu.dot_dimension_numbers<[1], [0], [0], [1], [0, 0, 1, 1], [], []>} : vector<8x128xbf16>, vector<128x512xbf16>, vector<8x512xf32> -> vector<8x512xf32>
    %405 = arith.truncf %373 : vector<8x128xf32> to vector<8x128xbf16>
    %cst_73 = arith.constant dense<0.000000e+00> : vector<8x512xf32>
    %406 = tpu.matmul %405, %2, %cst_73 {dimension_numbers = #tpu.dot_dimension_numbers<[1], [0], [0], [1], [0, 0, 1, 1], [], []>} : vector<8x128xbf16>, vector<128x512xbf16>, vector<8x512xf32> -> vector<8x512xf32>
    %407 = arith.addf %404, %406 : vector<8x512xf32>
    %408 = arith.addf %407, %12 : vector<8x512xf32>
    %409 = vector.extract_strided_slice %408 {offsets = [0, 0], sizes = [8, 128], strides = [1, 1]} : vector<8x512xf32> to vector<8x128xf32>
    %410 = arith.negf %409 : vector<8x128xf32>
    %411 = math.exp %410 : vector<8x128xf32>
    %cst_74 = arith.constant 1.000000e+00 : f32
    %412 = vector.broadcast %cst_74 : f32 to vector<8x128xf32>
    %413 = arith.addf %412, %411 : vector<8x128xf32>
    %414 = arith.divf %412, %413 : vector<8x128xf32>
    %415 = vector.extract_strided_slice %408 {offsets = [0, 128], sizes = [8, 128], strides = [1, 1]} : vector<8x512xf32> to vector<8x128xf32>
    %416 = arith.negf %415 : vector<8x128xf32>
    %417 = math.exp %416 : vector<8x128xf32>
    %cst_75 = arith.constant 1.000000e+00 : f32
    %418 = vector.broadcast %cst_75 : f32 to vector<8x128xf32>
    %419 = arith.addf %418, %417 : vector<8x128xf32>
    %420 = arith.divf %418, %419 : vector<8x128xf32>
    %421 = vector.extract_strided_slice %408 {offsets = [0, 256], sizes = [8, 128], strides = [1, 1]} : vector<8x512xf32> to vector<8x128xf32>
    %422 = math.tanh %421 : vector<8x128xf32>
    %423 = vector.extract_strided_slice %408 {offsets = [0, 384], sizes = [8, 128], strides = [1, 1]} : vector<8x512xf32> to vector<8x128xf32>
    %424 = arith.negf %423 : vector<8x128xf32>
    %425 = math.exp %424 : vector<8x128xf32>
    %cst_76 = arith.constant 1.000000e+00 : f32
    %426 = vector.broadcast %cst_76 : f32 to vector<8x128xf32>
    %427 = arith.addf %426, %425 : vector<8x128xf32>
    %428 = arith.divf %426, %427 : vector<8x128xf32>
    %429 = arith.mulf %420, %371 : vector<8x128xf32>
    %430 = arith.mulf %414, %422 : vector<8x128xf32>
    %431 = arith.addf %429, %430 : vector<8x128xf32>
    %432 = math.tanh %431 : vector<8x128xf32>
    %433 = arith.mulf %428, %432 : vector<8x128xf32>
    %434 = vector.extract_strided_slice %9 {offsets = [56, 0], sizes = [8, 512], strides = [1, 1]} : vector<64x512xf32> to vector<8x512xf32>
    %435 = arith.truncf %402 : vector<8x128xf32> to vector<8x128xbf16>
    %cst_77 = arith.constant dense<0.000000e+00> : vector<8x512xf32>
    %436 = tpu.matmul %435, %0, %cst_77 {dimension_numbers = #tpu.dot_dimension_numbers<[1], [0], [0], [1], [0, 0, 1, 1], [], []>} : vector<8x128xbf16>, vector<128x512xbf16>, vector<8x512xf32> -> vector<8x512xf32>
    %437 = arith.addf %434, %436 : vector<8x512xf32>
    %438 = vector.extract_strided_slice %437 {offsets = [0, 0], sizes = [8, 128], strides = [1, 1]} : vector<8x512xf32> to vector<8x128xf32>
    %439 = arith.negf %438 : vector<8x128xf32>
    %440 = math.exp %439 : vector<8x128xf32>
    %cst_78 = arith.constant 1.000000e+00 : f32
    %441 = vector.broadcast %cst_78 : f32 to vector<8x128xf32>
    %442 = arith.addf %441, %440 : vector<8x128xf32>
    %443 = arith.divf %441, %442 : vector<8x128xf32>
    %444 = vector.extract_strided_slice %437 {offsets = [0, 128], sizes = [8, 128], strides = [1, 1]} : vector<8x512xf32> to vector<8x128xf32>
    %445 = arith.negf %444 : vector<8x128xf32>
    %446 = math.exp %445 : vector<8x128xf32>
    %cst_79 = arith.constant 1.000000e+00 : f32
    %447 = vector.broadcast %cst_79 : f32 to vector<8x128xf32>
    %448 = arith.addf %447, %446 : vector<8x128xf32>
    %449 = arith.divf %447, %448 : vector<8x128xf32>
    %450 = vector.extract_strided_slice %437 {offsets = [0, 256], sizes = [8, 128], strides = [1, 1]} : vector<8x512xf32> to vector<8x128xf32>
    %451 = math.tanh %450 : vector<8x128xf32>
    %452 = vector.extract_strided_slice %437 {offsets = [0, 384], sizes = [8, 128], strides = [1, 1]} : vector<8x512xf32> to vector<8x128xf32>
    %453 = arith.negf %452 : vector<8x128xf32>
    %454 = math.exp %453 : vector<8x128xf32>
    %cst_80 = arith.constant 1.000000e+00 : f32
    %455 = vector.broadcast %cst_80 : f32 to vector<8x128xf32>
    %456 = arith.addf %455, %454 : vector<8x128xf32>
    %457 = arith.divf %455, %456 : vector<8x128xf32>
    %458 = arith.mulf %449, %400 : vector<8x128xf32>
    %459 = arith.mulf %443, %451 : vector<8x128xf32>
    %460 = arith.addf %458, %459 : vector<8x128xf32>
    %461 = math.tanh %460 : vector<8x128xf32>
    %462 = arith.mulf %457, %461 : vector<8x128xf32>
    %463 = arith.truncf %462 : vector<8x128xf32> to vector<8x128xbf16>
    %cst_81 = arith.constant dense<0.000000e+00> : vector<8x512xf32>
    %464 = tpu.matmul %463, %1, %cst_81 {dimension_numbers = #tpu.dot_dimension_numbers<[1], [0], [0], [1], [0, 0, 1, 1], [], []>} : vector<8x128xbf16>, vector<128x512xbf16>, vector<8x512xf32> -> vector<8x512xf32>
    %465 = arith.truncf %433 : vector<8x128xf32> to vector<8x128xbf16>
    %cst_82 = arith.constant dense<0.000000e+00> : vector<8x512xf32>
    %466 = tpu.matmul %465, %2, %cst_82 {dimension_numbers = #tpu.dot_dimension_numbers<[1], [0], [0], [1], [0, 0, 1, 1], [], []>} : vector<8x128xbf16>, vector<128x512xbf16>, vector<8x512xf32> -> vector<8x512xf32>
    %467 = arith.addf %464, %466 : vector<8x512xf32>
    %468 = arith.addf %467, %12 : vector<8x512xf32>
    %469 = vector.extract_strided_slice %468 {offsets = [0, 0], sizes = [8, 128], strides = [1, 1]} : vector<8x512xf32> to vector<8x128xf32>
    %470 = arith.negf %469 : vector<8x128xf32>
    %471 = math.exp %470 : vector<8x128xf32>
    %cst_83 = arith.constant 1.000000e+00 : f32
    %472 = vector.broadcast %cst_83 : f32 to vector<8x128xf32>
    %473 = arith.addf %472, %471 : vector<8x128xf32>
    %474 = arith.divf %472, %473 : vector<8x128xf32>
    %475 = vector.extract_strided_slice %468 {offsets = [0, 128], sizes = [8, 128], strides = [1, 1]} : vector<8x512xf32> to vector<8x128xf32>
    %476 = arith.negf %475 : vector<8x128xf32>
    %477 = math.exp %476 : vector<8x128xf32>
    %cst_84 = arith.constant 1.000000e+00 : f32
    %478 = vector.broadcast %cst_84 : f32 to vector<8x128xf32>
    %479 = arith.addf %478, %477 : vector<8x128xf32>
    %480 = arith.divf %478, %479 : vector<8x128xf32>
    %481 = vector.extract_strided_slice %468 {offsets = [0, 256], sizes = [8, 128], strides = [1, 1]} : vector<8x512xf32> to vector<8x128xf32>
    %482 = math.tanh %481 : vector<8x128xf32>
    %483 = vector.extract_strided_slice %468 {offsets = [0, 384], sizes = [8, 128], strides = [1, 1]} : vector<8x512xf32> to vector<8x128xf32>
    %484 = arith.negf %483 : vector<8x128xf32>
    %485 = math.exp %484 : vector<8x128xf32>
    %cst_85 = arith.constant 1.000000e+00 : f32
    %486 = vector.broadcast %cst_85 : f32 to vector<8x128xf32>
    %487 = arith.addf %486, %485 : vector<8x128xf32>
    %488 = arith.divf %486, %487 : vector<8x128xf32>
    %489 = arith.mulf %480, %431 : vector<8x128xf32>
    %490 = arith.mulf %474, %482 : vector<8x128xf32>
    %491 = arith.addf %489, %490 : vector<8x128xf32>
    %492 = math.tanh %491 : vector<8x128xf32>
    %493 = arith.mulf %488, %492 : vector<8x128xf32>
    %494 = tpu.concatenate %73, %133, %193, %253, %313, %373, %433, %493 in 0 : vector<8x128xf32>, vector<8x128xf32>, vector<8x128xf32>, vector<8x128xf32>, vector<8x128xf32>, vector<8x128xf32>, vector<8x128xf32>, vector<8x128xf32> -> vector<64x128xf32>
    %495 = arith.truncf %494 : vector<64x128xf32> to vector<64x128xbf16>
    %c0_86 = arith.constant 0 : index
    %c0_87 = arith.constant 0 : index
    %496 = vector.load %arg7[%c0_86, %c0_87] : memref<128x128xbf16, #tpu.memory_space<vmem>>, vector<128x128xbf16>
    %cst_88 = arith.constant dense<0.000000e+00> : vector<64x128xf32>
    %497 = tpu.matmul %495, %496, %cst_88 {dimension_numbers = #tpu.dot_dimension_numbers<[1], [0], [0], [1], [0, 0, 1, 1], [], []>} : vector<64x128xbf16>, vector<128x128xbf16>, vector<64x128xf32> -> vector<64x128xf32>
    %c0_89 = arith.constant 0 : index
    %c0_90 = arith.constant 0 : index
    %498 = vector.load %arg8[%c0_89, %c0_90] : memref<1x128xf32, #tpu.memory_space<vmem>>, vector<1x128xf32>
    %499 = vector.broadcast %498 : vector<1x128xf32> to vector<64x128xf32>
    %500 = arith.addf %497, %499 : vector<64x128xf32>
    %cst_91 = arith.constant dense<0xFF800000> : vector<64xf32>
    %501 = vector.multi_reduction <maximumf>, %500, %cst_91 [1] : vector<64x128xf32> to vector<64xf32>
    %502 = vector.shape_cast %501 : vector<64xf32> to vector<64x1xf32>
    %503 = vector.broadcast %502 : vector<64x1xf32> to vector<64x128xf32>
    %504 = arith.subf %500, %503 : vector<64x128xf32>
    %505 = math.exp %504 : vector<64x128xf32>
    %cst_92 = arith.constant dense<0.000000e+00> : vector<64xf32>
    %506 = vector.multi_reduction <add>, %505, %cst_92 [1] : vector<64x128xf32> to vector<64xf32>
    %507 = vector.shape_cast %506 : vector<64xf32> to vector<64x1xf32>
    %508 = math.log %507 : vector<64x1xf32>
    %509 = vector.broadcast %508 : vector<64x1xf32> to vector<64x128xf32>
    %510 = arith.subf %504, %509 : vector<64x128xf32>
    %c0_93 = arith.constant 0 : index
    %c0_94 = arith.constant 0 : index
    %511 = vector.load %arg9[%c0_93, %c0_94] : memref<64x128xf32, #tpu.memory_space<vmem>>, vector<64x128xf32>
    tpu.vector_store %arg9[%c0_93, %c0_94], %510 {strides = array<i32>} : memref<64x128xf32, #tpu.memory_space<vmem>>, vector<64x128xf32>,
    return
  }
}

</mosaic_0001>

<llo_original>
// kernel: actuator_net_forward.1
$region0: #{actuator_net_forward.1}
  #allocation0 [shape = 'u32[]', space=smem, size = 0x4, offset = 0x4, fixed_abs, tag = 'smem constant byte address 0x4 - core index']
  #allocation1 [shape = 'u32[72,128]{1,0:T(1,128)}', space=vmem, size = 0x9000, scoped, tag = 'internal scratch']
  %s0 = inlined_call_operand.vmem [shape: f32[64,2], index: 0, kind: input, shape index: {}]
  %s1 = inlined_call_operand.vmem [shape: bf16[2,512], index: 1, kind: input, shape index: {}]
  %s2 = inlined_call_operand.hbm [shape: bf16[128,512], index: 2, kind: input, shape index: {}]
  %s3 = inlined_call_operand.vmem [shape: f32[1,512], index: 3, kind: input, shape index: {}]
  %s4 = inlined_call_operand.hbm [shape: bf16[128,512], index: 4, kind: input, shape index: {}]
  %s5 = inlined_call_operand.hbm [shape: bf16[128,512], index: 5, kind: input, shape index: {}]
  %s6 = inlined_call_operand.vmem [shape: f32[1,512], index: 6, kind: input, shape index: {}]
  %s7 = inlined_call_operand.vmem [shape: bf16[128,128], index: 7, kind: input, shape index: {}]
  %s8 = inlined_call_operand.vmem [shape: f32[1,128], index: 8, kind: input, shape index: {}]
  %s9 = inlined_call_operand.vmem [shape: f32[64,128], index: 9, kind: output, shape index: {}]
  %s10 = sld [smem:[#allocation0]]
  $region58: #{actuator_net_forward.1} parent=0
    _
  %s12 = ssub.s32 1, %s10
  %s13 = scalar_select 0, %s12, %s10
  $region1: #{actuator_net_forward.1} parent=0
    #allocation2 [shape = 'u8[131072]{0}', space=vmem, size = 0x20000, scoped, tag = 'input window, operand 2, single buffered']
    #allocation3 [shape = 's32[1]{0}', space=sflag, size = 0x4, scoped, tag = 'scoped memory for actuator_net_forward.1']
    #allocation4 [shape = 'u8[131072]{0}', space=vmem, size = 0x20000, scoped, tag = 'input window, operand 4, single buffered']
    #allocation5 [shape = 's32[1]{0}', space=sflag, size = 0x4, scoped, tag = 'scoped memory for actuator_net_forward.1']
    #allocation6 [shape = 'u8[131072]{0}', space=vmem, size = 0x20000, scoped, tag = 'input window, operand 5, single buffered']
    %14 = vsyncpa [#allocation3], 0
    %15 = vsyncpa [#allocation5], 0
    // Predicated region
    $region2: #{actuator_net_forward.1} parent=1 // pred_check
      _
    $region3: #{actuator_net_forward.1} parent=1 // pred_check_branch
      %17 = sbr.rel (0) target = $region5
    $region4: #{actuator_net_forward.1} parent=1 // pred_region
      _
    $region5: #{actuator_net_forward.1} parent=1 // pred_fallthru
      _
    // Predicated region
    $region6: #{actuator_net_forward.1} parent=1 // pred_check
      _
    $region7: #{actuator_net_forward.1} parent=1 // pred_check_branch
      %19 = sbr.rel (0) target = $region9
    $region8: #{actuator_net_forward.1} parent=1 // pred_region
      _
    $region9: #{actuator_net_forward.1} parent=1 // pred_fallthru
      _
    // Predicated region
    $region10: #{actuator_net_forward.1} parent=1 // pred_check
      _
    $region11: #{actuator_net_forward.1} parent=1 // pred_check_branch
      %21 = sbr.rel (0) target = $region13
    $region12: #{actuator_net_forward.1} parent=1 // pred_region
      %23 = vsyncadd [#allocation3], 0
      %s24 = sshll.u32 %s2, 4
      %s25 = int_to_ptr.hbm [resolvable:$true] %s24
      %s26 = sshll.u32 [#allocation2], 4
      %s27 = int_to_ptr.vmem [resolvable:$true] %s26
      %32 = dma.hbm_to_vmem [thread:$0]  %s25, 4096, %s27, [#allocation3], 256, 256, 16
    $region13: #{actuator_net_forward.1} parent=1 // pred_fallthru
      _
    // Predicated region
    $region14: #{actuator_net_forward.1} parent=1 // pred_check
      _
    $region15: #{actuator_net_forward.1} parent=1 // pred_check_branch
      %34 = sbr.rel (0) target = $region17
    $region16: #{actuator_net_forward.1} parent=1 // pred_region
      _
    $region17: #{actuator_net_forward.1} parent=1 // pred_fallthru
      _
    // Predicated region
    $region18: #{actuator_net_forward.1} parent=1 // pred_check
      _
    $region19: #{actuator_net_forward.1} parent=1 // pred_check_branch
      %36 = sbr.rel (0) target = $region21
    $region20: #{actuator_net_forward.1} parent=1 // pred_region
      %38 = vsyncadd [#allocation5], 0
      %s39 = sshll.u32 %s4, 4
      %s40 = int_to_ptr.hbm [resolvable:$true] %s39
      %s41 = sshll.u32 [#allocation4], 4
      %s42 = int_to_ptr.vmem [resolvable:$true] %s41
      %47 = dma.hbm_to_vmem [thread:$0]  %s40, 4096, %s42, [#allocation5], 256, 256, 16
    $region21: #{actuator_net_forward.1} parent=1 // pred_fallthru
      _
    // Predicated region
    $region22: #{actuator_net_forward.1} parent=1 // pred_check
      _
    $region23: #{actuator_net_forward.1} parent=1 // pred_check_branch
      %49 = sbr.rel (0) target = $region25
    $region24: #{actuator_net_forward.1} parent=1 // pred_region
      %51 = vsyncadd [#allocation5], 0
      %s52 = sshll.u32 %s5, 4
      %s53 = int_to_ptr.hbm [resolvable:$true] %s52
      %s54 = sshll.u32 [#allocation6], 4
      %s55 = int_to_ptr.vmem [resolvable:$true] %s54
      %60 = dma.hbm_to_vmem [thread:$0]  %s53, 4096, %s55, [#allocation5], 256, 256, 16
    $region25: #{actuator_net_forward.1} parent=1 // pred_fallthru
      _
    // Predicated region
    $region26: #{actuator_net_forward.1} parent=1 // pred_check
      _
    $region27: #{actuator_net_forward.1} parent=1 // pred_check_branch
      %62 = sbr.rel (0) target = $region29
    $region28: #{actuator_net_forward.1} parent=1 // pred_region
      _
    $region29: #{actuator_net_forward.1} parent=1 // pred_fallthru
      _
    // Predicated region
    $region30: #{actuator_net_forward.1} parent=1 // pred_check
      _
    $region31: #{actuator_net_forward.1} parent=1 // pred_check_branch
      %64 = sbr.rel (0) target = $region33
    $region32: #{actuator_net_forward.1} parent=1 // pred_region
      _
    $region33: #{actuator_net_forward.1} parent=1 // pred_fallthru
      _
    // Predicated region
    $region34: #{actuator_net_forward.1} parent=1 // pred_check
      _
    $region35: #{actuator_net_forward.1} parent=1 // pred_check_branch
      %66 = sbr.rel (0) target = $region37
    $region36: #{actuator_net_forward.1} parent=1 // pred_region
      _
    $region37: #{actuator_net_forward.1} parent=1 // pred_fallthru
      _
    // Predicated region
    $region38: #{actuator_net_forward.1} parent=1 // pred_check
      _
    $region39: #{actuator_net_forward.1} parent=1 // pred_check_branch
      %68 = sbr.rel (0) target = $region41
    $region40: #{actuator_net_forward.1} parent=1 // pred_region
      %70 = dma.done [#allocation3], 4096
    $region41: #{actuator_net_forward.1} parent=1 // pred_fallthru
      _
    // Predicated region
    $region42: #{actuator_net_forward.1} parent=1 // pred_check
      _
    $region43: #{actuator_net_forward.1} parent=1 // pred_check_branch
      %72 = sbr.rel (0) target = $region45
    $region44: #{actuator_net_forward.1} parent=1 // pred_region
      %74 = dma.done [#allocation5], 4096
    $region45: #{actuator_net_forward.1} parent=1 // pred_fallthru
      _
    // Predicated region
    $region46: #{actuator_net_forward.1} parent=1 // pred_check
      _
    $region47: #{actuator_net_forward.1} parent=1 // pred_check_branch
      %76 = sbr.rel (0) target = $region49
    $region48: #{actuator_net_forward.1} parent=1 // pred_region
      %78 = dma.done [#allocation5], 4096
    $region49: #{actuator_net_forward.1} parent=1 // pred_fallthru
      _
    %v80 = vld [vmem:[#allocation2] sm:$0xff]
    %v81 = vld [vmem:[#allocation2 + $0x8] sm:$0xff]
    %v82 = vld [vmem:[#allocation2 + $0x10] sm:$0xff]
    %v83 = vld [vmem:[#allocation2 + $0x18] sm:$0xff]
    %v84 = vld [vmem:[#allocation2 + $0x20] sm:$0xff]
    %v85 = vld [vmem:[#allocation2 + $0x28] sm:$0xff]
    %v86 = vld [vmem:[#allocation2 + $0x30] sm:$0xff]
    %v87 = vld [vmem:[#allocation2 + $0x38] sm:$0xff]
    %v88 = vld [vmem:[#allocation2 + $0x40] sm:$0xff]
    %v89 = vld [vmem:[#allocation2 + $0x48] sm:$0xff]
    %v90 = vld [vmem:[#allocation2 + $0x50] sm:$0xff]
    %v91 = vld [vmem:[#allocation2 + $0x58] sm:$0xff]
    %v92 = vld [vmem:[#allocation2 + $0x60] sm:$0xff]
    %v93 = vld [vmem:[#allocation2 + $0x68] sm:$0xff]
    %v94 = vld [vmem:[#allocation2 + $0x70] sm:$0xff]
    %v95 = vld [vmem:[#allocation2 + $0x78] sm:$0xff]
    %v96 = vld [vmem:[#allocation2 + $0x80] sm:$0xff]
    %v97 = vld [vmem:[#allocation2 + $0x88] sm:$0xff]
    %v98 = vld [vmem:[#allocation2 + $0x90] sm:$0xff]
    %v99 = vld [vmem:[#allocation2 + $0x98] sm:$0xff]
    %v100 = vld [vmem:[#allocation2 + $0xa0] sm:$0xff]
    %v101 = vld [vmem:[#allocation2 + $0xa8] sm:$0xff]
    %v102 = vld [vmem:[#allocation2 + $0xb0] sm:$0xff]
    %v103 = vld [vmem:[#allocation2 + $0xb8] sm:$0xff]
    %v104 = vld [vmem:[#allocation2 + $0xc0] sm:$0xff]
    %v105 = vld [vmem:[#allocation2 + $0xc8] sm:$0xff]
    %v106 = vld [vmem:[#allocation2 + $0xd0] sm:$0xff]
    %v107 = vld [vmem:[#allocation2 + $0xd8] sm:$0xff]
    %v108 = vld [vmem:[#allocation2 + $0xe0] sm:$0xff]
    %v109 = vld [vmem:[#allocation2 + $0xe8] sm:$0xff]
    %v110 = vld [vmem:[#allocation2 + $0xf0] sm:$0xff]
    %v111 = vld [vmem:[#allocation2 + $0xf8] sm:$0xff]
    %v112 = vld [vmem:[#allocation4] sm:$0xff]
    %v113 = vld [vmem:[#allocation4 + $0x8] sm:$0xff]
    %v114 = vld [vmem:[#allocation4 + $0x10] sm:$0xff]
    %v115 = vld [vmem:[#allocation4 + $0x18] sm:$0xff]
    %v116 = vld [vmem:[#allocation4 + $0x20] sm:$0xff]
    %v117 = vld [vmem:[#allocation4 + $0x28] sm:$0xff]
    %v118 = vld [vmem:[#allocation4 + $0x30] sm:$0xff]
    %v119 = vld [vmem:[#allocation4 + $0x38] sm:$0xff]
    %v120 = vld [vmem:[#allocation4 + $0x40] sm:$0xff]
    %v121 = vld [vmem:[#allocation4 + $0x48] sm:$0xff]
    %v122 = vld [vmem:[#allocation4 + $0x50] sm:$0xff]
    %v123 = vld [vmem:[#allocation4 + $0x58] sm:$0xff]
    %v124 = vld [vmem:[#allocation4 + $0x60] sm:$0xff]
    %v125 = vld [vmem:[#allocation4 + $0x68] sm:$0xff]
    %v126 = vld [vmem:[#allocation4 + $0x70] sm:$0xff]
    %v127 = vld [vmem:[#allocation4 + $0x78] sm:$0xff]
    %v128 = vld [vmem:[#allocation4 + $0x80] sm:$0xff]
    %v129 = vld [vmem:[#allocation4 + $0x88] sm:$0xff]
    %v130 = vld [vmem:[#allocation4 + $0x90] sm:$0xff]
    %v131 = vld [vmem:[#allocation4 + $0x98] sm:$0xff]
    %v132 = vld [vmem:[#allocation4 + $0xa0] sm:$0xff]
    %v133 = vld [vmem:[#allocation4 + $0xa8] sm:$0xff]
    %v134 = vld [vmem:[#allocation4 + $0xb0] sm:$0xff]
    %v135 = vld [vmem:[#allocation4 + $0xb8] sm:$0xff]
    %v136 = vld [vmem:[#allocation4 + $0xc0] sm:$0xff]
    %v137 = vld [vmem:[#allocation4 + $0xc8] sm:$0xff]
    %v138 = vld [vmem:[#allocation4 + $0xd0] sm:$0xff]
    %v139 = vld [vmem:[#allocation4 + $0xd8] sm:$0xff]
    %v140 = vld [vmem:[#allocation4 + $0xe0] sm:$0xff]
    %v141 = vld [vmem:[#allocation4 + $0xe8] sm:$0xff]
    %v142 = vld [vmem:[#allocation4 + $0xf0] sm:$0xff]
    %v143 = vld [vmem:[#allocation4 + $0xf8] sm:$0xff]
    %v144 = vld [vmem:[#allocation6] sm:$0xff]
    %v145 = vld [vmem:[#allocation6 + $0x8] sm:$0xff]
    %v146 = vld [vmem:[#allocation6 + $0x10] sm:$0xff]
    %v147 = vld [vmem:[#allocation6 + $0x18] sm:$0xff]
    %v148 = vld [vmem:[#allocation6 + $0x20] sm:$0xff]
    %v149 = vld [vmem:[#allocation6 + $0x28] sm:$0xff]
    %v150 = vld [vmem:[#allocation6 + $0x30] sm:$0xff]
    %v151 = vld [vmem:[#allocation6 + $0x38] sm:$0xff]
    %v152 = vld [vmem:[#allocation6 + $0x40] sm:$0xff]
    %v153 = vld [vmem:[#allocation6 + $0x48] sm:$0xff]
    %v154 = vld [vmem:[#allocation6 + $0x50] sm:$0xff]
    %v155 = vld [vmem:[#allocation6 + $0x58] sm:$0xff]
    %v156 = vld [vmem:[#allocation6 + $0x60] sm:$0xff]
    %v157 = vld [vmem:[#allocation6 + $0x68] sm:$0xff]
    %v158 = vld [vmem:[#allocation6 + $0x70] sm:$0xff]
    %v159 = vld [vmem:[#allocation6 + $0x78] sm:$0xff]
    %v160 = vld [vmem:[#allocation6 + $0x80] sm:$0xff]
    %v161 = vld [vmem:[#allocation6 + $0x88] sm:$0xff]
    %v162 = vld [vmem:[#allocation6 + $0x90] sm:$0xff]
    %v163 = vld [vmem:[#allocation6 + $0x98] sm:$0xff]
    %v164 = vld [vmem:[#allocation6 + $0xa0] sm:$0xff]
    %v165 = vld [vmem:[#allocation6 + $0xa8] sm:$0xff]
    %v166 = vld [vmem:[#allocation6 + $0xb0] sm:$0xff]
    %v167 = vld [vmem:[#allocation6 + $0xb8] sm:$0xff]
    %v168 = vld [vmem:[#allocation6 + $0xc0] sm:$0xff]
    %v169 = vld [vmem:[#allocation6 + $0xc8] sm:$0xff]
    %v170 = vld [vmem:[#allocation6 + $0xd0] sm:$0xff]
    %v171 = vld [vmem:[#allocation6 + $0xd8] sm:$0xff]
    %v172 = vld [vmem:[#allocation6 + $0xe0] sm:$0xff]
    %v173 = vld [vmem:[#allocation6 + $0xe8] sm:$0xff]
    %v174 = vld [vmem:[#allocation6 + $0xf0] sm:$0xff]
    %v175 = vld [vmem:[#allocation6 + $0xf8] sm:$0xff]
    %v176 = vld [vmem:[%s0] sm:$0xff]
    %v177 = vld [vmem:[%s0 + $0x8] sm:$0xff]
    %v178 = vld [vmem:[%s0 + $0x10] sm:$0xff]
    %v179 = vld [vmem:[%s0 + $0x18] sm:$0xff]
    %v180 = vld [vmem:[%s0 + $0x20] sm:$0xff]
    %v181 = vld [vmem:[%s0 + $0x28] sm:$0xff]
    %v182 = vld [vmem:[%s0 + $0x30] sm:$0xff]
    %v183 = vld [vmem:[%s0 + $0x38] sm:$0xff]
    %v184 = vpack.c.bf16 %v177, %v176
    %v185 = vpack.c.bf16 %v179, %v178
    %v186 = vpack.c.bf16 %v181, %v180
    %v187 = vpack.c.bf16 %v183, %v182
    %v188 = vld [vmem:[%s1] sm:$0xf]
    %v189 = vld [vmem:[%s3] sm:$0xf]
    %v191 = vperm.slane %v189, 0
    %v192 = vperm.slane %v189, 1
    %v193 = vperm.slane %v189, 2
    %v194 = vperm.slane %v189, 3
    %200 = vst [vmem:[#allocation1] ss:$9 sm:$0xff] %v188
    %v201 = vld [vmem:[#allocation1] sm:$0xff]
    %v202 = vld [vmem:[#allocation1 + $0x9] sm:$0xff]
    %v203 = vld [vmem:[#allocation1 + $0x12] sm:$0xff]
    %v204 = vld [vmem:[#allocation1 + $0x1b] sm:$0xff]
    %vm205 = vcmask 15360
    %v207 = vsel %vm205, %v184, 0
    %v210 = vsel %vm205, %v185, 0
    %v213 = vsel %vm205, %v186, 0
    %v216 = vsel %vm205, %v187, 0
    %vm218 = vcmask 1040384
    %v219 = vsel %vm218, %v201, 0
    %v221 = vsel %vm218, %v202, 0
    %v223 = vsel %vm218, %v203, 0
    %v225 = vsel %vm218, %v204, 0
    %227 = vmatpush.bf16.msra.mxu0 0
    %228 = vmatpush.bf16.msra.mxu0 0
    %229 = vmatpush.bf16.msra.mxu0 0
    %230 = vmatpush.bf16.msra.mxu0 0
    %231 = vmatpush.bf16.msra.mxu0 0
    %232 = vmatpush.bf16.msra.mxu0 0
    %233 = vmatpush.bf16.msra.mxu0 0
    %234 = vmatpush.bf16.msra.mxu0 %v219
    %235 = vmatmul.bf16.gmra.mxu0 %v207
    %v236 = vpop.f32.mrf.mxu0
    %v237 = vadd.f32 %v191, %v236
    %v238 = vpop.f32.mrf.mxu0
    %v239 = vadd.f32 %v191, %v238
    %240 = vmatmul.bf16.gmra.mxu0 %v210
    %v241 = vpop.f32.mrf.mxu0
    %v242 = vadd.f32 %v191, %v241
    %v243 = vpop.f32.mrf.mxu0
    %v244 = vadd.f32 %v191, %v243
    %245 = vmatmul.bf16.gmra.mxu0 %v213
    %v246 = vpop.f32.mrf.mxu0
    %v247 = vadd.f32 %v191, %v246
    %v248 = vpop.f32.mrf.mxu0
    %v249 = vadd.f32 %v191, %v248
    %250 = vmatmul.bf16.gmra.mxu0 %v216
    %v251 = vpop.f32.mrf.mxu0
    %v252 = vadd.f32 %v191, %v251
    %v253 = vpop.f32.mrf.mxu0
    %v254 = vadd.f32 %v191, %v253
    %255 = vdwg.mxu0
    %256 = vmatpush.bf16.msra.mxu0 0
    %257 = vmatpush.bf16.msra.mxu0 0
    %258 = vmatpush.bf16.msra.mxu0 0
    %259 = vmatpush.bf16.msra.mxu0 0
    %260 = vmatpush.bf16.msra.mxu0 0
    %261 = vmatpush.bf16.msra.mxu0 0
    %262 = vmatpush.bf16.msra.mxu0 0
    %263 = vmatpush.bf16.msra.mxu0 %v221
    %264 = vmatmul.bf16.gmra.mxu0 %v207
    %v265 = vpop.f32.mrf.mxu0
    %v266 = vadd.f32 %v192, %v265
    %v267 = vpop.f32.mrf.mxu0
    %v268 = vadd.f32 %v192, %v267
    %269 = vmatmul.bf16.gmra.mxu0 %v210
    %v270 = vpop.f32.mrf.mxu0
    %v271 = vadd.f32 %v192, %v270
    %v272 = vpop.f32.mrf.mxu0
    %v273 = vadd.f32 %v192, %v272
    %274 = vmatmul.bf16.gmra.mxu0 %v213
    %v275 = vpop.f32.mrf.mxu0
    %v276 = vadd.f32 %v192, %v275
    %v277 = vpop.f32.mrf.mxu0
    %v278 = vadd.f32 %v192, %v277
    %279 = vmatmul.bf16.gmra.mxu0 %v216
    %v280 = vpop.f32.mrf.mxu0
    %v281 = vadd.f32 %v192, %v280
    %v282 = vpop.f32.mrf.mxu0
    %v283 = vadd.f32 %v192, %v282
    %284 = vdwg.mxu0
    %285 = vmatpush.bf16.msra.mxu0 0
    %286 = vmatpush.bf16.msra.mxu0 0
    %287 = vmatpush.bf16.msra.mxu0 0
    %288 = vmatpush.bf16.msra.mxu0 0
    %289 = vmatpush.bf16.msra.mxu0 0
    %290 = vmatpush.bf16.msra.mxu0 0
    %291 = vmatpush.bf16.msra.mxu0 0
    %292 = vmatpush.bf16.msra.mxu0 %v223
    %293 = vmatmul.bf16.gmra.mxu0 %v207
    %v294 = vpop.f32.mrf.mxu0
    %v295 = vadd.f32 %v193, %v294
    %v296 = vpop.f32.mrf.mxu0
    %v297 = vadd.f32 %v193, %v296
    %298 = vmatmul.bf16.gmra.mxu0 %v210
    %v299 = vpop.f32.mrf.mxu0
    %v300 = vadd.f32 %v193, %v299
    %v301 = vpop.f32.mrf.mxu0
    %v302 = vadd.f32 %v193, %v301
    %303 = vmatmul.bf16.gmra.mxu0 %v213
    %v304 = vpop.f32.mrf.mxu0
    %v305 = vadd.f32 %v193, %v304
    %v306 = vpop.f32.mrf.mxu0
    %v307 = vadd.f32 %v193, %v306
    %308 = vmatmul.bf16.gmra.mxu0 %v216
    %v309 = vpop.f32.mrf.mxu0
    %v310 = vadd.f32 %v193, %v309
    %v311 = vpop.f32.mrf.mxu0
    %v312 = vadd.f32 %v193, %v311
    %313 = vdwg.mxu0
    %314 = vmatpush.bf16.msra.mxu0 0
    %315 = vmatpush.bf16.msra.mxu0 0
    %316 = vmatpush.bf16.msra.mxu0 0
    %317 = vmatpush.bf16.msra.mxu0 0
    %318 = vmatpush.bf16.msra.mxu0 0
    %319 = vmatpush.bf16.msra.mxu0 0
    %320 = vmatpush.bf16.msra.mxu0 0
    %321 = vmatpush.bf16.msra.mxu0 %v225
    %322 = vmatmul.bf16.gmra.mxu0 %v207
    %v323 = vpop.f32.mrf.mxu0
    %v324 = vadd.f32 %v194, %v323
    %v325 = vpop.f32.mrf.mxu0
    %v326 = vadd.f32 %v194, %v325
    %327 = vmatmul.bf16.gmra.mxu0 %v210
    %v328 = vpop.f32.mrf.mxu0
    %v329 = vadd.f32 %v194, %v328
    %v330 = vpop.f32.mrf.mxu0
    %v331 = vadd.f32 %v194, %v330
    %332 = vmatmul.bf16.gmra.mxu0 %v213
    %v333 = vpop.f32.mrf.mxu0
    %v334 = vadd.f32 %v194, %v333
    %v335 = vpop.f32.mrf.mxu0
    %v336 = vadd.f32 %v194, %v335
    %337 = vmatmul.bf16.gmra.mxu0 %v216
    %v338 = vpop.f32.mrf.mxu0
    %v339 = vadd.f32 %v194, %v338
    %v340 = vpop.f32.mrf.mxu0
    %v341 = vadd.f32 %v194, %v340
    %342 = vdwg.mxu0
    %v343 = vld [vmem:[%s6] sm:$0xf]
    %v345 = vperm.slane %v343, 0
    %v346 = vperm.slane %v343, 1
    %v347 = vperm.slane %v343, 2
    %v348 = vperm.slane %v343, 3
    %v385 = vunpack.c.l.b16 %v80
    %v386 = vunpack.c.h.b16 %v80
    %v387 = vunpack.c.l.b16 %v81
    %v388 = vunpack.c.h.b16 %v81
    %v389 = vunpack.c.l.b16 %v82
    %v390 = vunpack.c.h.b16 %v82
    %v391 = vunpack.c.l.b16 %v83
    %v392 = vunpack.c.h.b16 %v83
    %v393 = vunpack.c.l.b16 %v84
    %v394 = vunpack.c.h.b16 %v84
    %v395 = vunpack.c.l.b16 %v85
    %v396 = vunpack.c.h.b16 %v85
    %v397 = vunpack.c.l.b16 %v86
    %v398 = vunpack.c.h.b16 %v86
    %v399 = vunpack.c.l.b16 %v87
    %v400 = vunpack.c.h.b16 %v87
    %v401 = vunpack.c.l.b16 %v88
    %v402 = vunpack.c.h.b16 %v88
    %v403 = vunpack.c.l.b16 %v89
    %v404 = vunpack.c.h.b16 %v89
    %v405 = vunpack.c.l.b16 %v90
    %v406 = vunpack.c.h.b16 %v90
    %v407 = vunpack.c.l.b16 %v91
    %v408 = vunpack.c.h.b16 %v91
    %v409 = vunpack.c.l.b16 %v92
    %v410 = vunpack.c.h.b16 %v92
    %v411 = vunpack.c.l.b16 %v93
    %v412 = vunpack.c.h.b16 %v93
    %v413 = vunpack.c.l.b16 %v94
    %v414 = vunpack.c.h.b16 %v94
    %v415 = vunpack.c.l.b16 %v95
    %v416 = vunpack.c.h.b16 %v95
    %v417 = vunpack.c.l.b16 %v96
    %v418 = vunpack.c.h.b16 %v96
    %v419 = vunpack.c.l.b16 %v97
    %v420 = vunpack.c.h.b16 %v97
    %v421 = vunpack.c.l.b16 %v98
    %v422 = vunpack.c.h.b16 %v98
    %v423 = vunpack.c.l.b16 %v99
    %v424 = vunpack.c.h.b16 %v99
    %v425 = vunpack.c.l.b16 %v100
    %v426 = vunpack.c.h.b16 %v100
    %v427 = vunpack.c.l.b16 %v101
    %v428 = vunpack.c.h.b16 %v101
    %v429 = vunpack.c.l.b16 %v102
    %v430 = vunpack.c.h.b16 %v102
    %v431 = vunpack.c.l.b16 %v103
    %v432 = vunpack.c.h.b16 %v103
    %v433 = vunpack.c.l.b16 %v104
    %v434 = vunpack.c.h.b16 %v104
    %v435 = vunpack.c.l.b16 %v105
    %v436 = vunpack.c.h.b16 %v105
    %v437 = vunpack.c.l.b16 %v106
    %v438 = vunpack.c.h.b16 %v106
    %v439 = vunpack.c.l.b16 %v107
    %v440 = vunpack.c.h.b16 %v107
    %v441 = vunpack.c.l.b16 %v108
    %v442 = vunpack.c.h.b16 %v108
    %v443 = vunpack.c.l.b16 %v109
    %v444 = vunpack.c.h.b16 %v109
    %v445 = vunpack.c.l.b16 %v110
    %v446 = vunpack.c.h.b16 %v110
    %v447 = vunpack.c.l.b16 %v111
    %v448 = vunpack.c.h.b16 %v111
    %v449 = vpack.c.b16 %v389, %v385
    %v450 = vpack.c.b16 %v390, %v386
    %v451 = vpack.c.b16 %v391, %v387
    %v452 = vpack.c.b16 %v392, %v388
    %v453 = vpack.c.b16 %v397, %v393
    %v454 = vpack.c.b16 %v398, %v394
    %v455 = vpack.c.b16 %v399, %v395
    %v456 = vpack.c.b16 %v400, %v396
    %v457 = vpack.c.b16 %v405, %v401
    %v458 = vpack.c.b16 %v406, %v402
    %v459 = vpack.c.b16 %v407, %v403
    %v460 = vpack.c.b16 %v408, %v404
    %v461 = vpack.c.b16 %v413, %v409
    %v462 = vpack.c.b16 %v414, %v410
    %v463 = vpack.c.b16 %v415, %v411
    %v464 = vpack.c.b16 %v416, %v412
    %v465 = vpack.c.b16 %v421, %v417
    %v466 = vpack.c.b16 %v422, %v418
    %v467 = vpack.c.b16 %v423, %v419
    %v468 = vpack.c.b16 %v424, %v420
    %v469 = vpack.c.b16 %v429, %v425
    %v470 = vpack.c.b16 %v430, %v426
    %v471 = vpack.c.b16 %v431, %v427
    %v472 = vpack.c.b16 %v432, %v428
    %v473 = vpack.c.b16 %v437, %v433
    %v474 = vpack.c.b16 %v438, %v434
    %v475 = vpack.c.b16 %v439, %v435
    %v476 = vpack.c.b16 %v440, %v436
    %v477 = vpack.c.b16 %v445, %v441
    %v478 = vpack.c.b16 %v446, %v442
    %v479 = vpack.c.b16 %v447, %v443
    %v480 = vpack.c.b16 %v448, %v444
    %513 = vmatpush.bf16.msra.mxu0 %v477
    %514 = vmatpush.bf16.msra.mxu0 %v473
    %515 = vmatpush.bf16.msra.mxu0 %v469
    %516 = vmatpush.bf16.msra.mxu0 %v465
    %517 = vmatpush.bf16.msra.mxu0 %v461
    %518 = vmatpush.bf16.msra.mxu0 %v457
    %519 = vmatpush.bf16.msra.mxu0 %v453
    %520 = vmatpush.bf16.msra.mxu0 %v449
    %521 = vmatmul.bf16.gmra.mxu0 0
    %v522 = vpop.f32.mrf.mxu0
    %v523 = vadd.f32 0.0, %v522
    %v524 = vpop.f32.mrf.mxu0
    %525 = vdwg.mxu0
    %526 = vmatpush.bf16.msra.mxu0 %v478
    %527 = vmatpush.bf16.msra.mxu0 %v474
    %528 = vmatpush.bf16.msra.mxu0 %v470
    %529 = vmatpush.bf16.msra.mxu0 %v466
    %530 = vmatpush.bf16.msra.mxu0 %v462
    %531 = vmatpush.bf16.msra.mxu0 %v458
    %532 = vmatpush.bf16.msra.mxu0 %v454
    %533 = vmatpush.bf16.msra.mxu0 %v450
    %534 = vmatmul.bf16.gmra.mxu0 0
    %v535 = vpop.f32.mrf.mxu0
    %v536 = vadd.f32 0.0, %v535
    %v537 = vpop.f32.mrf.mxu0
    %538 = vdwg.mxu0
    %539 = vmatpush.bf16.msra.mxu0 %v479
    %540 = vmatpush.bf16.msra.mxu0 %v475
    %541 = vmatpush.bf16.msra.mxu0 %v471
    %542 = vmatpush.bf16.msra.mxu0 %v467
    %543 = vmatpush.bf16.msra.mxu0 %v463
    %544 = vmatpush.bf16.msra.mxu0 %v459
    %545 = vmatpush.bf16.msra.mxu0 %v455
    %546 = vmatpush.bf16.msra.mxu0 %v451
    %547 = vmatmul.bf16.gmra.mxu0 0
    %v548 = vpop.f32.mrf.mxu0
    %v549 = vadd.f32 0.0, %v548
    %v550 = vpop.f32.mrf.mxu0
    %551 = vdwg.mxu0
    %552 = vmatpush.bf16.msra.mxu0 %v480
    %553 = vmatpush.bf16.msra.mxu0 %v476
    %554 = vmatpush.bf16.msra.mxu0 %v472
    %555 = vmatpush.bf16.msra.mxu0 %v468
    %556 = vmatpush.bf16.msra.mxu0 %v464
    %557 = vmatpush.bf16.msra.mxu0 %v460
    %558 = vmatpush.bf16.msra.mxu0 %v456
    %559 = vmatpush.bf16.msra.mxu0 %v452
    %560 = vmatmul.bf16.gmra.mxu0 0
    %v561 = vpop.f32.mrf.mxu0
    %v562 = vadd.f32 0.0, %v561
    %v563 = vpop.f32.mrf.mxu0
    %564 = vdwg.mxu0
    %v565 = vadd.f32 %v237, %v523
    %v566 = vadd.f32 %v266, %v536
    %v567 = vadd.f32 %v295, %v549
    %v568 = vadd.f32 %v324, %v562
    %v569 = vxor.u32 %v565, 2147483648
    %v570 = vmul.f32 %v569, 1.442695
    %v571 = vpow.pop %v570
    %v572 = vadd.f32 %v571, 1.0
    %v573 = vrcp.pop %v572
    %v574 = vmul.f32 %v572, %v573
    %v575 = vsub.f32 1.0, %v574
    %v576 = vmul.f32 %v573, %v575
    %v577 = vadd.f32 %v573, %v576
    %vm578 = vweird.f32 %v572
    %vm579 = vweird.f32 %v573
    %vm580 = vmor %vm578, %vm579
    %v581 = vsel %vm580, %v573, %v577
    %v582 = vand.u32 2147483647, %v572
    %vm583 = vcmp.eq.f32.partialorder %v582, 8.507059e+37
    %v584 = vand.u32 %v572, 2147483648
    %v585 = vor.u32 1.1754944e-38, %v584
    %v586 = vsel %vm583, %v585, %v581
    %v587 = vmul.f32 1.0, %v586
    %v588 = vxor.u32 %v566, 2147483648
    %v589 = vmul.f32 %v588, 1.442695
    %v590 = vpow.pop %v589
    %v591 = vadd.f32 %v590, 1.0
    %v592 = vrcp.pop %v591
    %v593 = vmul.f32 %v591, %v592
    %v594 = vsub.f32 1.0, %v593
    %v595 = vmul.f32 %v592, %v594
    %v596 = vadd.f32 %v592, %v595
    %vm597 = vweird.f32 %v591
    %vm598 = vweird.f32 %v592
    %vm599 = vmor %vm597, %vm598
    %v600 = vsel %vm599, %v592, %v596
    %v601 = vand.u32 2147483647, %v591
    %vm602 = vcmp.eq.f32.partialorder %v601, 8.507059e+37
    %v603 = vand.u32 %v591, 2147483648
    %v604 = vor.u32 1.1754944e-38, %v603
    %v605 = vsel %vm602, %v604, %v600
    %v606 = vmul.f32 1.0, %v605
    %v607 = vtanh.pop %v567
    %v608 = vxor.u32 %v568, 2147483648
    %v609 = vmul.f32 %v608, 1.442695
    %v610 = vpow.pop %v609
    %v611 = vadd.f32 %v610, 1.0
    %v612 = vrcp.pop %v611
    %v613 = vmul.f32 %v611, %v612
    %v614 = vsub.f32 1.0, %v613
    %v615 = vmul.f32 %v612, %v614
    %v616 = vadd.f32 %v612, %v615
    %vm617 = vweird.f32 %v611
    %vm618 = vweird.f32 %v612
    %vm619 = vmor %vm617, %vm618
    %v620 = vsel %vm619, %v612, %v616
    %v621 = vand.u32 2147483647, %v611
    %vm622 = vcmp.eq.f32.partialorder %v621, 8.507059e+37
    %v623 = vand.u32 %v611, 2147483648
    %v624 = vor.u32 1.1754944e-38, %v623
    %v625 = vsel %vm622, %v624, %v620
    %v626 = vmul.f32 1.0, %v625
    %v627 = vmul.f32 %v606, 0.0
    %v628 = vmul.f32 %v587, %v607
    %v629 = vadd.f32 %v627, %v628
    %v630 = vtanh.pop %v629
    %v631 = vmul.f32 %v626, %v630
    %v632 = vpack.c.bf16 %v631, %v631
    %v665 = vunpack.c.l.b16 %v144
    %v666 = vunpack.c.h.b16 %v144
    %v667 = vunpack.c.l.b16 %v145
    %v668 = vunpack.c.h.b16 %v145
    %v669 = vunpack.c.l.b16 %v146
    %v670 = vunpack.c.h.b16 %v146
    %v671 = vunpack.c.l.b16 %v147
    %v672 = vunpack.c.h.b16 %v147
    %v673 = vunpack.c.l.b16 %v148
    %v674 = vunpack.c.h.b16 %v148
    %v675 = vunpack.c.l.b16 %v149
    %v676 = vunpack.c.h.b16 %v149
    %v677 = vunpack.c.l.b16 %v150
    %v678 = vunpack.c.h.b16 %v150
    %v679 = vunpack.c.l.b16 %v151
    %v680 = vunpack.c.h.b16 %v151
    %v681 = vunpack.c.l.b16 %v152
    %v682 = vunpack.c.h.b16 %v152
    %v683 = vunpack.c.l.b16 %v153
    %v684 = vunpack.c.h.b16 %v153
    %v685 = vunpack.c.l.b16 %v154
    %v686 = vunpack.c.h.b16 %v154
    %v687 = vunpack.c.l.b16 %v155
    %v688 = vunpack.c.h.b16 %v155
    %v689 = vunpack.c.l.b16 %v156
    %v690 = vunpack.c.h.b16 %v156
    %v691 = vunpack.c.l.b16 %v157
    %v692 = vunpack.c.h.b16 %v157
    %v693 = vunpack.c.l.b16 %v158
    %v694 = vunpack.c.h.b16 %v158
    %v695 = vunpack.c.l.b16 %v159
    %v696 = vunpack.c.h.b16 %v159
    %v697 = vunpack.c.l.b16 %v160
    %v698 = vunpack.c.h.b16 %v160
    %v699 = vunpack.c.l.b16 %v161
    %v700 = vunpack.c.h.b16 %v161
    %v701 = vunpack.c.l.b16 %v162
    %v702 = vunpack.c.h.b16 %v162
    %v703 = vunpack.c.l.b16 %v163
    %v704 = vunpack.c.h.b16 %v163
    %v705 = vunpack.c.l.b16 %v164
    %v706 = vunpack.c.h.b16 %v164
    %v707 = vunpack.c.l.b16 %v165
    %v708 = vunpack.c.h.b16 %v165
    %v709 = vunpack.c.l.b16 %v166
    %v710 = vunpack.c.h.b16 %v166
    %v711 = vunpack.c.l.b16 %v167
    %v712 = vunpack.c.h.b16 %v167
    %v713 = vunpack.c.l.b16 %v168
    %v714 = vunpack.c.h.b16 %v168
    %v715 = vunpack.c.l.b16 %v169
    %v716 = vunpack.c.h.b16 %v169
    %v717 = vunpack.c.l.b16 %v170
    %v718 = vunpack.c.h.b16 %v170
    %v719 = vunpack.c.l.b16 %v171
    %v720 = vunpack.c.h.b16 %v171
    %v721 = vunpack.c.l.b16 %v172
    %v722 = vunpack.c.h.b16 %v172
    %v723 = vunpack.c.l.b16 %v173
    %v724 = vunpack.c.h.b16 %v173
    %v725 = vunpack.c.l.b16 %v174
    %v726 = vunpack.c.h.b16 %v174
    %v727 = vunpack.c.l.b16 %v175
    %v728 = vunpack.c.h.b16 %v175
    %v729 = vpack.c.b16 %v669, %v665
    %v730 = vpack.c.b16 %v670, %v666
    %v731 = vpack.c.b16 %v671, %v667
    %v732 = vpack.c.b16 %v672, %v668
    %v733 = vpack.c.b16 %v677, %v673
    %v734 = vpack.c.b16 %v678, %v674
    %v735 = vpack.c.b16 %v679, %v675
    %v736 = vpack.c.b16 %v680, %v676
    %v737 = vpack.c.b16 %v685, %v681
    %v738 = vpack.c.b16 %v686, %v682
    %v739 = vpack.c.b16 %v687, %v683
    %v740 = vpack.c.b16 %v688, %v684
    %v741 = vpack.c.b16 %v693, %v689
    %v742 = vpack.c.b16 %v694, %v690
    %v743 = vpack.c.b16 %v695, %v691
    %v744 = vpack.c.b16 %v696, %v692
    %v745 = vpack.c.b16 %v701, %v697
    %v746 = vpack.c.b16 %v702, %v698
    %v747 = vpack.c.b16 %v703, %v699
    %v748 = vpack.c.b16 %v704, %v700
    %v749 = vpack.c.b16 %v709, %v705
    %v750 = vpack.c.b16 %v710, %v706
    %v751 = vpack.c.b16 %v711, %v707
    %v752 = vpack.c.b16 %v712, %v708
    %v753 = vpack.c.b16 %v717, %v713
    %v754 = vpack.c.b16 %v718, %v714
    %v755 = vpack.c.b16 %v719, %v715
    %v756 = vpack.c.b16 %v720, %v716
    %v757 = vpack.c.b16 %v725, %v721
    %v758 = vpack.c.b16 %v726, %v722
    %v759 = vpack.c.b16 %v727, %v723
    %v760 = vpack.c.b16 %v728, %v724
    %793 = vmatpush.bf16.msra.mxu0 %v757
    %794 = vmatpush.bf16.msra.mxu0 %v753
    %795 = vmatpush.bf16.msra.mxu0 %v749
    %796 = vmatpush.bf16.msra.mxu0 %v745
    %797 = vmatpush.bf16.msra.mxu0 %v741
    %798 = vmatpush.bf16.msra.mxu0 %v737
    %799 = vmatpush.bf16.msra.mxu0 %v733
    %800 = vmatpush.bf16.msra.mxu0 %v729
    %801 = vmatmul.bf16.gmra.mxu0 0
    %v802 = vpop.f32.mrf.mxu0
    %v803 = vadd.f32 0.0, %v802
    %v804 = vpop.f32.mrf.mxu0
    %805 = vdwg.mxu0
    %806 = vmatpush.bf16.msra.mxu0 %v758
    %807 = vmatpush.bf16.msra.mxu0 %v754
    %808 = vmatpush.bf16.msra.mxu0 %v750
    %809 = vmatpush.bf16.msra.mxu0 %v746
    %810 = vmatpush.bf16.msra.mxu0 %v742
    %811 = vmatpush.bf16.msra.mxu0 %v738
    %812 = vmatpush.bf16.msra.mxu0 %v734
    %813 = vmatpush.bf16.msra.mxu0 %v730
    %814 = vmatmul.bf16.gmra.mxu0 0
    %v815 = vpop.f32.mrf.mxu0
    %v816 = vadd.f32 0.0, %v815
    %v817 = vpop.f32.mrf.mxu0
    %818 = vdwg.mxu0
    %819 = vmatpush.bf16.msra.mxu0 %v759
    %820 = vmatpush.bf16.msra.mxu0 %v755
    %821 = vmatpush.bf16.msra.mxu0 %v751
    %822 = vmatpush.bf16.msra.mxu0 %v747
    %823 = vmatpush.bf16.msra.mxu0 %v743
    %824 = vmatpush.bf16.msra.mxu0 %v739
    %825 = vmatpush.bf16.msra.mxu0 %v735
    %826 = vmatpush.bf16.msra.mxu0 %v731
    %827 = vmatmul.bf16.gmra.mxu0 0
    %v828 = vpop.f32.mrf.mxu0
    %v829 = vadd.f32 0.0, %v828
    %v830 = vpop.f32.mrf.mxu0
    %831 = vdwg.mxu0
    %832 = vmatpush.bf16.msra.mxu0 %v760
    %833 = vmatpush.bf16.msra.mxu0 %v756
    %834 = vmatpush.bf16.msra.mxu0 %v752
    %835 = vmatpush.bf16.msra.mxu0 %v748
    %836 = vmatpush.bf16.msra.mxu0 %v744
    %837 = vmatpush.bf16.msra.mxu0 %v740
    %838 = vmatpush.bf16.msra.mxu0 %v736
    %839 = vmatpush.bf16.msra.mxu0 %v732
    %840 = vmatmul.bf16.gmra.mxu0 0
    %v841 = vpop.f32.mrf.mxu0
    %v842 = vadd.f32 0.0, %v841
    %v843 = vpop.f32.mrf.mxu0
    %844 = vdwg.mxu0
    %v877 = vunpack.c.l.b16 %v112
    %v878 = vunpack.c.h.b16 %v112
    %v879 = vunpack.c.l.b16 %v113
    %v880 = vunpack.c.h.b16 %v113
    %v881 = vunpack.c.l.b16 %v114
    %v882 = vunpack.c.h.b16 %v114
    %v883 = vunpack.c.l.b16 %v115
    %v884 = vunpack.c.h.b16 %v115
    %v885 = vunpack.c.l.b16 %v116
    %v886 = vunpack.c.h.b16 %v116
    %v887 = vunpack.c.l.b16 %v117
    %v888 = vunpack.c.h.b16 %v117
    %v889 = vunpack.c.l.b16 %v118
    %v890 = vunpack.c.h.b16 %v118
    %v891 = vunpack.c.l.b16 %v119
    %v892 = vunpack.c.h.b16 %v119
    %v893 = vunpack.c.l.b16 %v120
    %v894 = vunpack.c.h.b16 %v120
    %v895 = vunpack.c.l.b16 %v121
    %v896 = vunpack.c.h.b16 %v121
    %v897 = vunpack.c.l.b16 %v122
    %v898 = vunpack.c.h.b16 %v122
    %v899 = vunpack.c.l.b16 %v123
    %v900 = vunpack.c.h.b16 %v123
    %v901 = vunpack.c.l.b16 %v124
    %v902 = vunpack.c.h.b16 %v124
    %v903 = vunpack.c.l.b16 %v125
    %v904 = vunpack.c.h.b16 %v125
    %v905 = vunpack.c.l.b16 %v126
    %v906 = vunpack.c.h.b16 %v126
    %v907 = vunpack.c.l.b16 %v127
    %v908 = vunpack.c.h.b16 %v127
    %v909 = vunpack.c.l.b16 %v128
    %v910 = vunpack.c.h.b16 %v128
    %v911 = vunpack.c.l.b16 %v129
    %v912 = vunpack.c.h.b16 %v129
    %v913 = vunpack.c.l.b16 %v130
    %v914 = vunpack.c.h.b16 %v130
    %v915 = vunpack.c.l.b16 %v131
    %v916 = vunpack.c.h.b16 %v131
    %v917 = vunpack.c.l.b16 %v132
    %v918 = vunpack.c.h.b16 %v132
    %v919 = vunpack.c.l.b16 %v133
    %v920 = vunpack.c.h.b16 %v133
    %v921 = vunpack.c.l.b16 %v134
    %v922 = vunpack.c.h.b16 %v134
    %v923 = vunpack.c.l.b16 %v135
    %v924 = vunpack.c.h.b16 %v135
    %v925 = vunpack.c.l.b16 %v136
    %v926 = vunpack.c.h.b16 %v136
    %v927 = vunpack.c.l.b16 %v137
    %v928 = vunpack.c.h.b16 %v137
    %v929 = vunpack.c.l.b16 %v138
    %v930 = vunpack.c.h.b16 %v138
    %v931 = vunpack.c.l.b16 %v139
    %v932 = vunpack.c.h.b16 %v139
    %v933 = vunpack.c.l.b16 %v140
    %v934 = vunpack.c.h.b16 %v140
    %v935 = vunpack.c.l.b16 %v141
    %v936 = vunpack.c.h.b16 %v141
    %v937 = vunpack.c.l.b16 %v142
    %v938 = vunpack.c.h.b16 %v142
    %v939 = vunpack.c.l.b16 %v143
    %v940 = vunpack.c.h.b16 %v143
    %v941 = vpack.c.b16 %v881, %v877
    %v942 = vpack.c.b16 %v882, %v878
    %v943 = vpack.c.b16 %v883, %v879
    %v944 = vpack.c.b16 %v884, %v880
    %v945 = vpack.c.b16 %v889, %v885
    %v946 = vpack.c.b16 %v890, %v886
    %v947 = vpack.c.b16 %v891, %v887
    %v948 = vpack.c.b16 %v892, %v888
    %v949 = vpack.c.b16 %v897, %v893
    %v950 = vpack.c.b16 %v898, %v894
    %v951 = vpack.c.b16 %v899, %v895
    %v952 = vpack.c.b16 %v900, %v896
    %v953 = vpack.c.b16 %v905, %v901
    %v954 = vpack.c.b16 %v906, %v902
    %v955 = vpack.c.b16 %v907, %v903
    %v956 = vpack.c.b16 %v908, %v904
    %v957 = vpack.c.b16 %v913, %v909
    %v958 = vpack.c.b16 %v914, %v910
    %v959 = vpack.c.b16 %v915, %v911
    %v960 = vpack.c.b16 %v916, %v912
    %v961 = vpack.c.b16 %v921, %v917
    %v962 = vpack.c.b16 %v922, %v918
    %v963 = vpack.c.b16 %v923, %v919
    %v964 = vpack.c.b16 %v924, %v920
    %v965 = vpack.c.b16 %v929, %v925
    %v966 = vpack.c.b16 %v930, %v926
    %v967 = vpack.c.b16 %v931, %v927
    %v968 = vpack.c.b16 %v932, %v928
    %v969 = vpack.c.b16 %v937, %v933
    %v970 = vpack.c.b16 %v938, %v934
    %v971 = vpack.c.b16 %v939, %v935
    %v972 = vpack.c.b16 %v940, %v936
    %1005 = vmatpush.bf16.msra.mxu0 %v969
    %1006 = vmatpush.bf16.msra.mxu0 %v965
    %1007 = vmatpush.bf16.msra.mxu0 %v961
    %1008 = vmatpush.bf16.msra.mxu0 %v957
    %1009 = vmatpush.bf16.msra.mxu0 %v953
    %1010 = vmatpush.bf16.msra.mxu0 %v949
    %1011 = vmatpush.bf16.msra.mxu0 %v945
    %1012 = vmatpush.bf16.msra.mxu0 %v941
    %1013 = vmatmul.bf16.gmra.mxu0 %v632
    %v1014 = vpop.f32.mrf.mxu0
    %v1015 = vadd.f32 %v803, %v1014
    %v1016 = vpop.f32.mrf.mxu0
    %1017 = vdwg.mxu0
    %1018 = vmatpush.bf16.msra.mxu0 %v970
    %1019 = vmatpush.bf16.msra.mxu0 %v966
    %1020 = vmatpush.bf16.msra.mxu0 %v962
    %1021 = vmatpush.bf16.msra.mxu0 %v958
    %1022 = vmatpush.bf16.msra.mxu0 %v954
    %1023 = vmatpush.bf16.msra.mxu0 %v950
    %1024 = vmatpush.bf16.msra.mxu0 %v946
    %1025 = vmatpush.bf16.msra.mxu0 %v942
    %1026 = vmatmul.bf16.gmra.mxu0 %v632
    %v1027 = vpop.f32.mrf.mxu0
    %v1028 = vadd.f32 %v816, %v1027
    %v1029 = vpop.f32.mrf.mxu0
    %1030 = vdwg.mxu0
    %1031 = vmatpush.bf16.msra.mxu0 %v971
    %1032 = vmatpush.bf16.msra.mxu0 %v967
    %1033 = vmatpush.bf16.msra.mxu0 %v963
    %1034 = vmatpush.bf16.msra.mxu0 %v959
    %1035 = vmatpush.bf16.msra.mxu0 %v955
    %1036 = vmatpush.bf16.msra.mxu0 %v951
    %1037 = vmatpush.bf16.msra.mxu0 %v947
    %1038 = vmatpush.bf16.msra.mxu0 %v943
    %1039 = vmatmul.bf16.gmra.mxu0 %v632
    %v1040 = vpop.f32.mrf.mxu0
    %v1041 = vadd.f32 %v829, %v1040
    %v1042 = vpop.f32.mrf.mxu0
    %1043 = vdwg.mxu0
    %1044 = vmatpush.bf16.msra.mxu0 %v972
    %1045 = vmatpush.bf16.msra.mxu0 %v968
    %1046 = vmatpush.bf16.msra.mxu0 %v964
    %1047 = vmatpush.bf16.msra.mxu0 %v960
    %1048 = vmatpush.bf16.msra.mxu0 %v956
    %1049 = vmatpush.bf16.msra.mxu0 %v952
    %1050 = vmatpush.bf16.msra.mxu0 %v948
    %1051 = vmatpush.bf16.msra.mxu0 %v944
    %1052 = vmatmul.bf16.gmra.mxu0 %v632
    %v1053 = vpop.f32.mrf.mxu0
    %v1054 = vadd.f32 %v842, %v1053
    %v1055 = vpop.f32.mrf.mxu0
    %1056 = vdwg.mxu0
    %v1057 = vadd.f32 %v1015, %v345
    %v1058 = vadd.f32 %v1028, %v346
    %v1059 = vadd.f32 %v1041, %v347
    %v1060 = vadd.f32 %v1054, %v348
    %v1061 = vxor.u32 %v1057, 2147483648
    %v1062 = vmul.f32 %v1061, 1.442695
    %v1063 = vpow.pop %v1062
    %v1064 = vadd.f32 %v1063, 1.0
    %v1065 = vrcp.pop %v1064
    %v1066 = vmul.f32 %v1064, %v1065
    %v1067 = vsub.f32 1.0, %v1066
    %v1068 = vmul.f32 %v1065, %v1067
    %v1069 = vadd.f32 %v1065, %v1068
    %vm1070 = vweird.f32 %v1064
    %vm1071 = vweird.f32 %v1065
    %vm1072 = vmor %vm1070, %vm1071
    %v1073 = vsel %vm1072, %v1065, %v1069
    %v1074 = vand.u32 2147483647, %v1064
    %vm1075 = vcmp.eq.f32.partialorder %v1074, 8.507059e+37
    %v1076 = vand.u32 %v1064, 2147483648
    %v1077 = vor.u32 1.1754944e-38, %v1076
    %v1078 = vsel %vm1075, %v1077, %v1073
    %v1079 = vmul.f32 1.0, %v1078
    %v1080 = vxor.u32 %v1058, 2147483648
    %v1081 = vmul.f32 %v1080, 1.442695
    %v1082 = vpow.pop %v1081
    %v1083 = vadd.f32 %v1082, 1.0
    %v1084 = vrcp.pop %v1083
    %v1085 = vmul.f32 %v1083, %v1084
    %v1086 = vsub.f32 1.0, %v1085
    %v1087 = vmul.f32 %v1084, %v1086
    %v1088 = vadd.f32 %v1084, %v1087
    %vm1089 = vweird.f32 %v1083
    %vm1090 = vweird.f32 %v1084
    %vm1091 = vmor %vm1089, %vm1090
    %v1092 = vsel %vm1091, %v1084, %v1088
    %v1093 = vand.u32 2147483647, %v1083
    %vm1094 = vcmp.eq.f32.partialorder %v1093, 8.507059e+37
    %v1095 = vand.u32 %v1083, 2147483648
    %v1096 = vor.u32 1.1754944e-38, %v1095
    %v1097 = vsel %vm1094, %v1096, %v1092
    %v1098 = vmul.f32 1.0, %v1097
    %v1099 = vtanh.pop %v1059
    %v1100 = vxor.u32 %v1060, 2147483648
    %v1101 = vmul.f32 %v1100, 1.442695
    %v1102 = vpow.pop %v1101
    %v1103 = vadd.f32 %v1102, 1.0
    %v1104 = vrcp.pop %v1103
    %v1105 = vmul.f32 %v1103, %v1104
    %v1106 = vsub.f32 1.0, %v1105
    %v1107 = vmul.f32 %v1104, %v1106
    %v1108 = vadd.f32 %v1104, %v1107
    %vm1109 = vweird.f32 %v1103
    %vm1110 = vweird.f32 %v1104
    %vm1111 = vmor %vm1109, %vm1110
    %v1112 = vsel %vm1111, %v1104, %v1108
    %v1113 = vand.u32 2147483647, %v1103
    %vm1114 = vcmp.eq.f32.partialorder %v1113, 8.507059e+37
    %v1115 = vand.u32 %v1103, 2147483648
    %v1116 = vor.u32 1.1754944e-38, %v1115
    %v1117 = vsel %vm1114, %v1116, %v1112
    %v1118 = vmul.f32 1.0, %v1117
    %v1119 = vmul.f32 %v1098, 0.0
    %v1120 = vmul.f32 %v1079, %v1099
    %v1121 = vadd.f32 %v1119, %v1120
    %v1122 = vtanh.pop %v1121
    %v1123 = vmul.f32 %v1118, %v1122
    %1124 = vmatpush.bf16.msra.mxu0 %v477
    %1125 = vmatpush.bf16.msra.mxu0 %v473
    %1126 = vmatpush.bf16.msra.mxu0 %v469
    %1127 = vmatpush.bf16.msra.mxu0 %v465
    %1128 = vmatpush.bf16.msra.mxu0 %v461
    %1129 = vmatpush.bf16.msra.mxu0 %v457
    %1130 = vmatpush.bf16.msra.mxu0 %v453
    %1131 = vmatpush.bf16.msra.mxu0 %v449
    %1132 = vmatmul.bf16.gmra.mxu0 %v632
    %v1133 = vpop.f32.mrf.mxu0
    %v1134 = vadd.f32 0.0, %v1133
    %v1135 = vpop.f32.mrf.mxu0
    %1136 = vdwg.mxu0
    %1137 = vmatpush.bf16.msra.mxu0 %v478
    %1138 = vmatpush.bf16.msra.mxu0 %v474
    %1139 = vmatpush.bf16.msra.mxu0 %v470
    %1140 = vmatpush.bf16.msra.mxu0 %v466
    %1141 = vmatpush.bf16.msra.mxu0 %v462
    %1142 = vmatpush.bf16.msra.mxu0 %v458
    %1143 = vmatpush.bf16.msra.mxu0 %v454
    %1144 = vmatpush.bf16.msra.mxu0 %v450
    %1145 = vmatmul.bf16.gmra.mxu0 %v632
    %v1146 = vpop.f32.mrf.mxu0
    %v1147 = vadd.f32 0.0, %v1146
    %v1148 = vpop.f32.mrf.mxu0
    %1149 = vdwg.mxu0
    %1150 = vmatpush.bf16.msra.mxu0 %v479
    %1151 = vmatpush.bf16.msra.mxu0 %v475
    %1152 = vmatpush.bf16.msra.mxu0 %v471
    %1153 = vmatpush.bf16.msra.mxu0 %v467
    %1154 = vmatpush.bf16.msra.mxu0 %v463
    %1155 = vmatpush.bf16.msra.mxu0 %v459
    %1156 = vmatpush.bf16.msra.mxu0 %v455
    %1157 = vmatpush.bf16.msra.mxu0 %v451
    %1158 = vmatmul.bf16.gmra.mxu0 %v632
    %v1159 = vpop.f32.mrf.mxu0
    %v1160 = vadd.f32 0.0, %v1159
    %v1161 = vpop.f32.mrf.mxu0
    %1162 = vdwg.mxu0
    %1163 = vmatpush.bf16.msra.mxu0 %v480
    %1164 = vmatpush.bf16.msra.mxu0 %v476
    %1165 = vmatpush.bf16.msra.mxu0 %v472
    %1166 = vmatpush.bf16.msra.mxu0 %v468
    %1167 = vmatpush.bf16.msra.mxu0 %v464
    %1168 = vmatpush.bf16.msra.mxu0 %v460
    %1169 = vmatpush.bf16.msra.mxu0 %v456
    %1170 = vmatpush.bf16.msra.mxu0 %v452
    %1171 = vmatmul.bf16.gmra.mxu0 %v632
    %v1172 = vpop.f32.mrf.mxu0
    %v1173 = vadd.f32 0.0, %v1172
    %v1174 = vpop.f32.mrf.mxu0
    %1175 = vdwg.mxu0
    %v1176 = vadd.f32 %v239, %v1134
    %v1177 = vadd.f32 %v268, %v1147
    %v1178 = vadd.f32 %v297, %v1160
    %v1179 = vadd.f32 %v326, %v1173
    %v1180 = vxor.u32 %v1176, 2147483648
    %v1181 = vmul.f32 %v1180, 1.442695
    %v1182 = vpow.pop %v1181
    %v1183 = vadd.f32 %v1182, 1.0
    %v1184 = vrcp.pop %v1183
    %v1185 = vmul.f32 %v1183, %v1184
    %v1186 = vsub.f32 1.0, %v1185
    %v1187 = vmul.f32 %v1184, %v1186
    %v1188 = vadd.f32 %v1184, %v1187
    %vm1189 = vweird.f32 %v1183
    %vm1190 = vweird.f32 %v1184
    %vm1191 = vmor %vm1189, %vm1190
    %v1192 = vsel %vm1191, %v1184, %v1188
    %v1193 = vand.u32 2147483647, %v1183
    %vm1194 = vcmp.eq.f32.partialorder %v1193, 8.507059e+37
    %v1195 = vand.u32 %v1183, 2147483648
    %v1196 = vor.u32 1.1754944e-38, %v1195
    %v1197 = vsel %vm1194, %v1196, %v1192
    %v1198 = vmul.f32 1.0, %v1197
    %v1199 = vxor.u32 %v1177, 2147483648
    %v1200 = vmul.f32 %v1199, 1.442695
    %v1201 = vpow.pop %v1200
    %v1202 = vadd.f32 %v1201, 1.0
    %v1203 = vrcp.pop %v1202
    %v1204 = vmul.f32 %v1202, %v1203
    %v1205 = vsub.f32 1.0, %v1204
    %v1206 = vmul.f32 %v1203, %v1205
    %v1207 = vadd.f32 %v1203, %v1206
    %vm1208 = vweird.f32 %v1202
    %vm1209 = vweird.f32 %v1203
    %vm1210 = vmor %vm1208, %vm1209
    %v1211 = vsel %vm1210, %v1203, %v1207
    %v1212 = vand.u32 2147483647, %v1202
    %vm1213 = vcmp.eq.f32.partialorder %v1212, 8.507059e+37
    %v1214 = vand.u32 %v1202, 2147483648
    %v1215 = vor.u32 1.1754944e-38, %v1214
    %v1216 = vsel %vm1213, %v1215, %v1211
    %v1217 = vmul.f32 1.0, %v1216
    %v1218 = vtanh.pop %v1178
    %v1219 = vxor.u32 %v1179, 2147483648
    %v1220 = vmul.f32 %v1219, 1.442695
    %v1221 = vpow.pop %v1220
    %v1222 = vadd.f32 %v1221, 1.0
    %v1223 = vrcp.pop %v1222
    %v1224 = vmul.f32 %v1222, %v1223
    %v1225 = vsub.f32 1.0, %v1224
    %v1226 = vmul.f32 %v1223, %v1225
    %v1227 = vadd.f32 %v1223, %v1226
    %vm1228 = vweird.f32 %v1222
    %vm1229 = vweird.f32 %v1223
    %vm1230 = vmor %vm1228, %vm1229
    %v1231 = vsel %vm1230, %v1223, %v1227
    %v1232 = vand.u32 2147483647, %v1222
    %vm1233 = vcmp.eq.f32.partialorder %v1232, 8.507059e+37
    %v1234 = vand.u32 %v1222, 2147483648
    %v1235 = vor.u32 1.1754944e-38, %v1234
    %v1236 = vsel %vm1233, %v1235, %v1231
    %v1237 = vmul.f32 1.0, %v1236
    %v1238 = vmul.f32 %v1217, %v629
    %v1239 = vmul.f32 %v1198, %v1218
    %v1240 = vadd.f32 %v1238, %v1239
    %v1241 = vtanh.pop %v1240
    %v1242 = vmul.f32 %v1237, %v1241
    %v1243 = vpack.c.bf16 %v1242, %v1242
    %v1244 = vpack.c.bf16 %v1123, %v1123
    %1245 = vmatpush.bf16.msra.mxu0 %v757
    %1246 = vmatpush.bf16.msra.mxu0 %v753
    %1247 = vmatpush.bf16.msra.mxu0 %v749
    %1248 = vmatpush.bf16.msra.mxu0 %v745
    %1249 = vmatpush.bf16.msra.mxu0 %v741
    %1250 = vmatpush.bf16.msra.mxu0 %v737
    %1251 = vmatpush.bf16.msra.mxu0 %v733
    %1252 = vmatpush.bf16.msra.mxu0 %v729
    %1253 = vmatmul.bf16.gmra.mxu0 %v1244
    %v1254 = vpop.f32.mrf.mxu0
    %v1255 = vadd.f32 0.0, %v1254
    %v1256 = vpop.f32.mrf.mxu0
    %1257 = vdwg.mxu0
    %1258 = vmatpush.bf16.msra.mxu0 %v758
    %1259 = vmatpush.bf16.msra.mxu0 %v754
    %1260 = vmatpush.bf16.msra.mxu0 %v750
    %1261 = vmatpush.bf16.msra.mxu0 %v746
    %1262 = vmatpush.bf16.msra.mxu0 %v742
    %1263 = vmatpush.bf16.msra.mxu0 %v738
    %1264 = vmatpush.bf16.msra.mxu0 %v734
    %1265 = vmatpush.bf16.msra.mxu0 %v730
    %1266 = vmatmul.bf16.gmra.mxu0 %v1244
    %v1267 = vpop.f32.mrf.mxu0
    %v1268 = vadd.f32 0.0, %v1267
    %v1269 = vpop.f32.mrf.mxu0
    %1270 = vdwg.mxu0
    %1271 = vmatpush.bf16.msra.mxu0 %v759
    %1272 = vmatpush.bf16.msra.mxu0 %v755
    %1273 = vmatpush.bf16.msra.mxu0 %v751
    %1274 = vmatpush.bf16.msra.mxu0 %v747
    %1275 = vmatpush.bf16.msra.mxu0 %v743
    %1276 = vmatpush.bf16.msra.mxu0 %v739
    %1277 = vmatpush.bf16.msra.mxu0 %v735
    %1278 = vmatpush.bf16.msra.mxu0 %v731
    %1279 = vmatmul.bf16.gmra.mxu0 %v1244
    %v1280 = vpop.f32.mrf.mxu0
    %v1281 = vadd.f32 0.0, %v1280
    %v1282 = vpop.f32.mrf.mxu0
    %1283 = vdwg.mxu0
    %1284 = vmatpush.bf16.msra.mxu0 %v760
    %1285 = vmatpush.bf16.msra.mxu0 %v756
    %1286 = vmatpush.bf16.msra.mxu0 %v752
    %1287 = vmatpush.bf16.msra.mxu0 %v748
    %1288 = vmatpush.bf16.msra.mxu0 %v744
    %1289 = vmatpush.bf16.msra.mxu0 %v740
    %1290 = vmatpush.bf16.msra.mxu0 %v736
    %1291 = vmatpush.bf16.msra.mxu0 %v732
    %1292 = vmatmul.bf16.gmra.mxu0 %v1244
    %v1293 = vpop.f32.mrf.mxu0
    %v1294 = vadd.f32 0.0, %v1293
    %v1295 = vpop.f32.mrf.mxu0
    %1296 = vdwg.mxu0
    %1297 = vmatpush.bf16.msra.mxu0 %v969
    %1298 = vmatpush.bf16.msra.mxu0 %v965
    %1299 = vmatpush.bf16.msra.mxu0 %v961
    %1300 = vmatpush.bf16.msra.mxu0 %v957
    %1301 = vmatpush.bf16.msra.mxu0 %v953
    %1302 = vmatpush.bf16.msra.mxu0 %v949
    %1303 = vmatpush.bf16.msra.mxu0 %v945
    %1304 = vmatpush.bf16.msra.mxu0 %v941
    %1305 = vmatmul.bf16.gmra.mxu0 %v1243
    %v1306 = vpop.f32.mrf.mxu0
    %v1307 = vadd.f32 %v1255, %v1306
    %v1308 = vpop.f32.mrf.mxu0
    %1309 = vdwg.mxu0
    %1310 = vmatpush.bf16.msra.mxu0 %v970
    %1311 = vmatpush.bf16.msra.mxu0 %v966
    %1312 = vmatpush.bf16.msra.mxu0 %v962
    %1313 = vmatpush.bf16.msra.mxu0 %v958
    %1314 = vmatpush.bf16.msra.mxu0 %v954
    %1315 = vmatpush.bf16.msra.mxu0 %v950
    %1316 = vmatpush.bf16.msra.mxu0 %v946
    %1317 = vmatpush.bf16.msra.mxu0 %v942
    %1318 = vmatmul.bf16.gmra.mxu0 %v1243
    %v1319 = vpop.f32.mrf.mxu0
    %v1320 = vadd.f32 %v1268, %v1319
    %v1321 = vpop.f32.mrf.mxu0
    %1322 = vdwg.mxu0
    %1323 = vmatpush.bf16.msra.mxu0 %v971
    %1324 = vmatpush.bf16.msra.mxu0 %v967
    %1325 = vmatpush.bf16.msra.mxu0 %v963
    %1326 = vmatpush.bf16.msra.mxu0 %v959
    %1327 = vmatpush.bf16.msra.mxu0 %v955
    %1328 = vmatpush.bf16.msra.mxu0 %v951
    %1329 = vmatpush.bf16.msra.mxu0 %v947
    %1330 = vmatpush.bf16.msra.mxu0 %v943
    %1331 = vmatmul.bf16.gmra.mxu0 %v1243
    %v1332 = vpop.f32.mrf.mxu0
    %v1333 = vadd.f32 %v1281, %v1332
    %v1334 = vpop.f32.mrf.mxu0
    %1335 = vdwg.mxu0
    %1336 = vmatpush.bf16.msra.mxu0 %v972
    %1337 = vmatpush.bf16.msra.mxu0 %v968
    %1338 = vmatpush.bf16.msra.mxu0 %v964
    %1339 = vmatpush.bf16.msra.mxu0 %v960
    %1340 = vmatpush.bf16.msra.mxu0 %v956
    %1341 = vmatpush.bf16.msra.mxu0 %v952
    %1342 = vmatpush.bf16.msra.mxu0 %v948
    %1343 = vmatpush.bf16.msra.mxu0 %v944
    %1344 = vmatmul.bf16.gmra.mxu0 %v1243
    %v1345 = vpop.f32.mrf.mxu0
    %v1346 = vadd.f32 %v1294, %v1345
    %v1347 = vpop.f32.mrf.mxu0
    %1348 = vdwg.mxu0
    %v1349 = vadd.f32 %v1307, %v345
    %v1350 = vadd.f32 %v1320, %v346
    %v1351 = vadd.f32 %v1333, %v347
    %v1352 = vadd.f32 %v1346, %v348
    %v1353 = vxor.u32 %v1349, 2147483648
    %v1354 = vmul.f32 %v1353, 1.442695
    %v1355 = vpow.pop %v1354
    %v1356 = vadd.f32 %v1355, 1.0
    %v1357 = vrcp.pop %v1356
    %v1358 = vmul.f32 %v1356, %v1357
    %v1359 = vsub.f32 1.0, %v1358
    %v1360 = vmul.f32 %v1357, %v1359
    %v1361 = vadd.f32 %v1357, %v1360
    %vm1362 = vweird.f32 %v1356
    %vm1363 = vweird.f32 %v1357
    %vm1364 = vmor %vm1362, %vm1363
    %v1365 = vsel %vm1364, %v1357, %v1361
    %v1366 = vand.u32 2147483647, %v1356
    %vm1367 = vcmp.eq.f32.partialorder %v1366, 8.507059e+37
    %v1368 = vand.u32 %v1356, 2147483648
    %v1369 = vor.u32 1.1754944e-38, %v1368
    %v1370 = vsel %vm1367, %v1369, %v1365
    %v1371 = vmul.f32 1.0, %v1370
    %v1372 = vxor.u32 %v1350, 2147483648
    %v1373 = vmul.f32 %v1372, 1.442695
    %v1374 = vpow.pop %v1373
    %v1375 = vadd.f32 %v1374, 1.0
    %v1376 = vrcp.pop %v1375
    %v1377 = vmul.f32 %v1375, %v1376
    %v1378 = vsub.f32 1.0, %v1377
    %v1379 = vmul.f32 %v1376, %v1378
    %v1380 = vadd.f32 %v1376, %v1379
    %vm1381 = vweird.f32 %v1375
    %vm1382 = vweird.f32 %v1376
    %vm1383 = vmor %vm1381, %vm1382
    %v1384 = vsel %vm1383, %v1376, %v1380
    %v1385 = vand.u32 2147483647, %v1375
    %vm1386 = vcmp.eq.f32.partialorder %v1385, 8.507059e+37
    %v1387 = vand.u32 %v1375, 2147483648
    %v1388 = vor.u32 1.1754944e-38, %v1387
    %v1389 = vsel %vm1386, %v1388, %v1384
    %v1390 = vmul.f32 1.0, %v1389
    %v1391 = vtanh.pop %v1351
    %v1392 = vxor.u32 %v1352, 2147483648
    %v1393 = vmul.f32 %v1392, 1.442695
    %v1394 = vpow.pop %v1393
    %v1395 = vadd.f32 %v1394, 1.0
    %v1396 = vrcp.pop %v1395
    %v1397 = vmul.f32 %v1395, %v1396
    %v1398 = vsub.f32 1.0, %v1397
    %v1399 = vmul.f32 %v1396, %v1398
    %v1400 = vadd.f32 %v1396, %v1399
    %vm1401 = vweird.f32 %v1395
    %vm1402 = vweird.f32 %v1396
    %vm1403 = vmor %vm1401, %vm1402
    %v1404 = vsel %vm1403, %v1396, %v1400
    %v1405 = vand.u32 2147483647, %v1395
    %vm1406 = vcmp.eq.f32.partialorder %v1405, 8.507059e+37
    %v1407 = vand.u32 %v1395, 2147483648
    %v1408 = vor.u32 1.1754944e-38, %v1407
    %v1409 = vsel %vm1406, %v1408, %v1404
    %v1410 = vmul.f32 1.0, %v1409
    %v1411 = vmul.f32 %v1390, %v1121
    %v1412 = vmul.f32 %v1371, %v1391
    %v1413 = vadd.f32 %v1411, %v1412
    %v1414 = vtanh.pop %v1413
    %v1415 = vmul.f32 %v1410, %v1414
    %1416 = vmatpush.bf16.msra.mxu0 %v477
    %1417 = vmatpush.bf16.msra.mxu0 %v473
    %1418 = vmatpush.bf16.msra.mxu0 %v469
    %1419 = vmatpush.bf16.msra.mxu0 %v465
    %1420 = vmatpush.bf16.msra.mxu0 %v461
    %1421 = vmatpush.bf16.msra.mxu0 %v457
    %1422 = vmatpush.bf16.msra.mxu0 %v453
    %1423 = vmatpush.bf16.msra.mxu0 %v449
    %1424 = vmatmul.bf16.gmra.mxu0 %v1243
    %v1425 = vpop.f32.mrf.mxu0
    %v1426 = vadd.f32 0.0, %v1425
    %v1427 = vpop.f32.mrf.mxu0
    %1428 = vdwg.mxu0
    %1429 = vmatpush.bf16.msra.mxu0 %v478
    %1430 = vmatpush.bf16.msra.mxu0 %v474
    %1431 = vmatpush.bf16.msra.mxu0 %v470
    %1432 = vmatpush.bf16.msra.mxu0 %v466
    %1433 = vmatpush.bf16.msra.mxu0 %v462
    %1434 = vmatpush.bf16.msra.mxu0 %v458
    %1435 = vmatpush.bf16.msra.mxu0 %v454
    %1436 = vmatpush.bf16.msra.mxu0 %v450
    %1437 = vmatmul.bf16.gmra.mxu0 %v1243
    %v1438 = vpop.f32.mrf.mxu0
    %v1439 = vadd.f32 0.0, %v1438
    %v1440 = vpop.f32.mrf.mxu0
    %1441 = vdwg.mxu0
    %1442 = vmatpush.bf16.msra.mxu0 %v479
    %1443 = vmatpush.bf16.msra.mxu0 %v475
    %1444 = vmatpush.bf16.msra.mxu0 %v471
    %1445 = vmatpush.bf16.msra.mxu0 %v467
    %1446 = vmatpush.bf16.msra.mxu0 %v463
    %1447 = vmatpush.bf16.msra.mxu0 %v459
    %1448 = vmatpush.bf16.msra.mxu0 %v455
    %1449 = vmatpush.bf16.msra.mxu0 %v451
    %1450 = vmatmul.bf16.gmra.mxu0 %v1243
    %v1451 = vpop.f32.mrf.mxu0
    %v1452 = vadd.f32 0.0, %v1451
    %v1453 = vpop.f32.mrf.mxu0
    %1454 = vdwg.mxu0
    %1455 = vmatpush.bf16.msra.mxu0 %v480
    %1456 = vmatpush.bf16.msra.mxu0 %v476
    %1457 = vmatpush.bf16.msra.mxu0 %v472
    %1458 = vmatpush.bf16.msra.mxu0 %v468
    %1459 = vmatpush.bf16.msra.mxu0 %v464
    %1460 = vmatpush.bf16.msra.mxu0 %v460
    %1461 = vmatpush.bf16.msra.mxu0 %v456
    %1462 = vmatpush.bf16.msra.mxu0 %v452
    %1463 = vmatmul.bf16.gmra.mxu0 %v1243
    %v1464 = vpop.f32.mrf.mxu0
    %v1465 = vadd.f32 0.0, %v1464
    %v1466 = vpop.f32.mrf.mxu0
    %1467 = vdwg.mxu0
    %v1468 = vadd.f32 %v242, %v1426
    %v1469 = vadd.f32 %v271, %v1439
    %v1470 = vadd.f32 %v300, %v1452
    %v1471 = vadd.f32 %v329, %v1465
    %v1472 = vxor.u32 %v1468, 2147483648
    %v1473 = vmul.f32 %v1472, 1.442695
    %v1474 = vpow.pop %v1473
    %v1475 = vadd.f32 %v1474, 1.0
    %v1476 = vrcp.pop %v1475
    %v1477 = vmul.f32 %v1475, %v1476
    %v1478 = vsub.f32 1.0, %v1477
    %v1479 = vmul.f32 %v1476, %v1478
    %v1480 = vadd.f32 %v1476, %v1479
    %vm1481 = vweird.f32 %v1475
    %vm1482 = vweird.f32 %v1476
    %vm1483 = vmor %vm1481, %vm1482
    %v1484 = vsel %vm1483, %v1476, %v1480
    %v1485 = vand.u32 2147483647, %v1475
    %vm1486 = vcmp.eq.f32.partialorder %v1485, 8.507059e+37
    %v1487 = vand.u32 %v1475, 2147483648
    %v1488 = vor.u32 1.1754944e-38, %v1487
    %v1489 = vsel %vm1486, %v1488, %v1484
    %v1490 = vmul.f32 1.0, %v1489
    %v1491 = vxor.u32 %v1469, 2147483648
    %v1492 = vmul.f32 %v1491, 1.442695
    %v1493 = vpow.pop %v1492
    %v1494 = vadd.f32 %v1493, 1.0
    %v1495 = vrcp.pop %v1494
    %v1496 = vmul.f32 %v1494, %v1495
    %v1497 = vsub.f32 1.0, %v1496
    %v1498 = vmul.f32 %v1495, %v1497
    %v1499 = vadd.f32 %v1495, %v1498
    %vm1500 = vweird.f32 %v1494
    %vm1501 = vweird.f32 %v1495
    %vm1502 = vmor %vm1500, %vm1501
    %v1503 = vsel %vm1502, %v1495, %v1499
    %v1504 = vand.u32 2147483647, %v1494
    %vm1505 = vcmp.eq.f32.partialorder %v1504, 8.507059e+37
    %v1506 = vand.u32 %v1494, 2147483648
    %v1507 = vor.u32 1.1754944e-38, %v1506
    %v1508 = vsel %vm1505, %v1507, %v1503
    %v1509 = vmul.f32 1.0, %v1508
    %v1510 = vtanh.pop %v1470
    %v1511 = vxor.u32 %v1471, 2147483648
    %v1512 = vmul.f32 %v1511, 1.442695
    %v1513 = vpow.pop %v1512
    %v1514 = vadd.f32 %v1513, 1.0
    %v1515 = vrcp.pop %v1514
    %v1516 = vmul.f32 %v1514, %v1515
    %v1517 = vsub.f32 1.0, %v1516
    %v1518 = vmul.f32 %v1515, %v1517
    %v1519 = vadd.f32 %v1515, %v1518
    %vm1520 = vweird.f32 %v1514
    %vm1521 = vweird.f32 %v1515
    %vm1522 = vmor %vm1520, %vm1521
    %v1523 = vsel %vm1522, %v1515, %v1519
    %v1524 = vand.u32 2147483647, %v1514
    %vm1525 = vcmp.eq.f32.partialorder %v1524, 8.507059e+37
    %v1526 = vand.u32 %v1514, 2147483648
    %v1527 = vor.u32 1.1754944e-38, %v1526
    %v1528 = vsel %vm1525, %v1527, %v1523
    %v1529 = vmul.f32 1.0, %v1528
    %v1530 = vmul.f32 %v1509, %v1240
    %v1531 = vmul.f32 %v1490, %v1510
    %v1532 = vadd.f32 %v1530, %v1531
    %v1533 = vtanh.pop %v1532
    %v1534 = vmul.f32 %v1529, %v1533
    %v1535 = vpack.c.bf16 %v1534, %v1534
    %v1536 = vpack.c.bf16 %v1415, %v1415
    %1537 = vmatpush.bf16.msra.mxu0 %v757
    %1538 = vmatpush.bf16.msra.mxu0 %v753
    %1539 = vmatpush.bf16.msra.mxu0 %v749
    %1540 = vmatpush.bf16.msra.mxu0 %v745
    %1541 = vmatpush.bf16.msra.mxu0 %v741
    %1542 = vmatpush.bf16.msra.mxu0 %v737
    %1543 = vmatpush.bf16.msra.mxu0 %v733
    %1544 = vmatpush.bf16.msra.mxu0 %v729
    %1545 = vmatmul.bf16.gmra.mxu0 %v1536
    %v1546 = vpop.f32.mrf.mxu0
    %v1547 = vadd.f32 0.0, %v1546
    %v1548 = vpop.f32.mrf.mxu0
    %1549 = vdwg.mxu0
    %1550 = vmatpush.bf16.msra.mxu0 %v758
    %1551 = vmatpush.bf16.msra.mxu0 %v754
    %1552 = vmatpush.bf16.msra.mxu0 %v750
    %1553 = vmatpush.bf16.msra.mxu0 %v746
    %1554 = vmatpush.bf16.msra.mxu0 %v742
    %1555 = vmatpush.bf16.msra.mxu0 %v738
    %1556 = vmatpush.bf16.msra.mxu0 %v734
    %1557 = vmatpush.bf16.msra.mxu0 %v730
    %1558 = vmatmul.bf16.gmra.mxu0 %v1536
    %v1559 = vpop.f32.mrf.mxu0
    %v1560 = vadd.f32 0.0, %v1559
    %v1561 = vpop.f32.mrf.mxu0
    %1562 = vdwg.mxu0
    %1563 = vmatpush.bf16.msra.mxu0 %v759
    %1564 = vmatpush.bf16.msra.mxu0 %v755
    %1565 = vmatpush.bf16.msra.mxu0 %v751
    %1566 = vmatpush.bf16.msra.mxu0 %v747
    %1567 = vmatpush.bf16.msra.mxu0 %v743
    %1568 = vmatpush.bf16.msra.mxu0 %v739
    %1569 = vmatpush.bf16.msra.mxu0 %v735
    %1570 = vmatpush.bf16.msra.mxu0 %v731
    %1571 = vmatmul.bf16.gmra.mxu0 %v1536
    %v1572 = vpop.f32.mrf.mxu0
    %v1573 = vadd.f32 0.0, %v1572
    %v1574 = vpop.f32.mrf.mxu0
    %1575 = vdwg.mxu0
    %1576 = vmatpush.bf16.msra.mxu0 %v760
    %1577 = vmatpush.bf16.msra.mxu0 %v756
    %1578 = vmatpush.bf16.msra.mxu0 %v752
    %1579 = vmatpush.bf16.msra.mxu0 %v748
    %1580 = vmatpush.bf16.msra.mxu0 %v744
    %1581 = vmatpush.bf16.msra.mxu0 %v740
    %1582 = vmatpush.bf16.msra.mxu0 %v736
    %1583 = vmatpush.bf16.msra.mxu0 %v732
    %1584 = vmatmul.bf16.gmra.mxu0 %v1536
    %v1585 = vpop.f32.mrf.mxu0
    %v1586 = vadd.f32 0.0, %v1585
    %v1587 = vpop.f32.mrf.mxu0
    %1588 = vdwg.mxu0
    %1589 = vmatpush.bf16.msra.mxu0 %v969
    %1590 = vmatpush.bf16.msra.mxu0 %v965
    %1591 = vmatpush.bf16.msra.mxu0 %v961
    %1592 = vmatpush.bf16.msra.mxu0 %v957
    %1593 = vmatpush.bf16.msra.mxu0 %v953
    %1594 = vmatpush.bf16.msra.mxu0 %v949
    %1595 = vmatpush.bf16.msra.mxu0 %v945
    %1596 = vmatpush.bf16.msra.mxu0 %v941
    %1597 = vmatmul.bf16.gmra.mxu0 %v1535
    %v1598 = vpop.f32.mrf.mxu0
    %v1599 = vadd.f32 %v1547, %v1598
    %v1600 = vpop.f32.mrf.mxu0
    %1601 = vdwg.mxu0
    %1602 = vmatpush.bf16.msra.mxu0 %v970
    %1603 = vmatpush.bf16.msra.mxu0 %v966
    %1604 = vmatpush.bf16.msra.mxu0 %v962
    %1605 = vmatpush.bf16.msra.mxu0 %v958
    %1606 = vmatpush.bf16.msra.mxu0 %v954
    %1607 = vmatpush.bf16.msra.mxu0 %v950
    %1608 = vmatpush.bf16.msra.mxu0 %v946
    %1609 = vmatpush.bf16.msra.mxu0 %v942
    %1610 = vmatmul.bf16.gmra.mxu0 %v1535
    %v1611 = vpop.f32.mrf.mxu0
    %v1612 = vadd.f32 %v1560, %v1611
    %v1613 = vpop.f32.mrf.mxu0
    %1614 = vdwg.mxu0
    %1615 = vmatpush.bf16.msra.mxu0 %v971
    %1616 = vmatpush.bf16.msra.mxu0 %v967
    %1617 = vmatpush.bf16.msra.mxu0 %v963
    %1618 = vmatpush.bf16.msra.mxu0 %v959
    %1619 = vmatpush.bf16.msra.mxu0 %v955
    %1620 = vmatpush.bf16.msra.mxu0 %v951
    %1621 = vmatpush.bf16.msra.mxu0 %v947
    %1622 = vmatpush.bf16.msra.mxu0 %v943
    %1623 = vmatmul.bf16.gmra.mxu0 %v1535
    %v1624 = vpop.f32.mrf.mxu0
    %v1625 = vadd.f32 %v1573, %v1624
    %v1626 = vpop.f32.mrf.mxu0
    %1627 = vdwg.mxu0
    %1628 = vmatpush.bf16.msra.mxu0 %v972
    %1629 = vmatpush.bf16.msra.mxu0 %v968
    %1630 = vmatpush.bf16.msra.mxu0 %v964
    %1631 = vmatpush.bf16.msra.mxu0 %v960
    %1632 = vmatpush.bf16.msra.mxu0 %v956
    %1633 = vmatpush.bf16.msra.mxu0 %v952
    %1634 = vmatpush.bf16.msra.mxu0 %v948
    %1635 = vmatpush.bf16.msra.mxu0 %v944
    %1636 = vmatmul.bf16.gmra.mxu0 %v1535
    %v1637 = vpop.f32.mrf.mxu0
    %v1638 = vadd.f32 %v1586, %v1637
    %v1639 = vpop.f32.mrf.mxu0
    %1640 = vdwg.mxu0
    %v1641 = vadd.f32 %v1599, %v345
    %v1642 = vadd.f32 %v1612, %v346
    %v1643 = vadd.f32 %v1625, %v347
    %v1644 = vadd.f32 %v1638, %v348
    %v1645 = vxor.u32 %v1641, 2147483648
    %v1646 = vmul.f32 %v1645, 1.442695
    %v1647 = vpow.pop %v1646
    %v1648 = vadd.f32 %v1647, 1.0
    %v1649 = vrcp.pop %v1648
    %v1650 = vmul.f32 %v1648, %v1649
    %v1651 = vsub.f32 1.0, %v1650
    %v1652 = vmul.f32 %v1649, %v1651
    %v1653 = vadd.f32 %v1649, %v1652
    %vm1654 = vweird.f32 %v1648
    %vm1655 = vweird.f32 %v1649
    %vm1656 = vmor %vm1654, %vm1655
    %v1657 = vsel %vm1656, %v1649, %v1653
    %v1658 = vand.u32 2147483647, %v1648
    %vm1659 = vcmp.eq.f32.partialorder %v1658, 8.507059e+37
    %v1660 = vand.u32 %v1648, 2147483648
    %v1661 = vor.u32 1.1754944e-38, %v1660
    %v1662 = vsel %vm1659, %v1661, %v1657
    %v1663 = vmul.f32 1.0, %v1662
    %v1664 = vxor.u32 %v1642, 2147483648
    %v1665 = vmul.f32 %v1664, 1.442695
    %v1666 = vpow.pop %v1665
    %v1667 = vadd.f32 %v1666, 1.0
    %v1668 = vrcp.pop %v1667
    %v1669 = vmul.f32 %v1667, %v1668
    %v1670 = vsub.f32 1.0, %v1669
    %v1671 = vmul.f32 %v1668, %v1670
    %v1672 = vadd.f32 %v1668, %v1671
    %vm1673 = vweird.f32 %v1667
    %vm1674 = vweird.f32 %v1668
    %vm1675 = vmor %vm1673, %vm1674
    %v1676 = vsel %vm1675, %v1668, %v1672
    %v1677 = vand.u32 2147483647, %v1667
    %vm1678 = vcmp.eq.f32.partialorder %v1677, 8.507059e+37
    %v1679 = vand.u32 %v1667, 2147483648
    %v1680 = vor.u32 1.1754944e-38, %v1679
    %v1681 = vsel %vm1678, %v1680, %v1676
    %v1682 = vmul.f32 1.0, %v1681
    %v1683 = vtanh.pop %v1643
    %v1684 = vxor.u32 %v1644, 2147483648
    %v1685 = vmul.f32 %v1684, 1.442695
    %v1686 = vpow.pop %v1685
    %v1687 = vadd.f32 %v1686, 1.0
    %v1688 = vrcp.pop %v1687
    %v1689 = vmul.f32 %v1687, %v1688
    %v1690 = vsub.f32 1.0, %v1689
    %v1691 = vmul.f32 %v1688, %v1690
    %v1692 = vadd.f32 %v1688, %v1691
    %vm1693 = vweird.f32 %v1687
    %vm1694 = vweird.f32 %v1688
    %vm1695 = vmor %vm1693, %vm1694
    %v1696 = vsel %vm1695, %v1688, %v1692
    %v1697 = vand.u32 2147483647, %v1687
    %vm1698 = vcmp.eq.f32.partialorder %v1697, 8.507059e+37
    %v1699 = vand.u32 %v1687, 2147483648
    %v1700 = vor.u32 1.1754944e-38, %v1699
    %v1701 = vsel %vm1698, %v1700, %v1696
    %v1702 = vmul.f32 1.0, %v1701
    %v1703 = vmul.f32 %v1682, %v1413
    %v1704 = vmul.f32 %v1663, %v1683
    %v1705 = vadd.f32 %v1703, %v1704
    %v1706 = vtanh.pop %v1705
    %v1707 = vmul.f32 %v1702, %v1706
    %1708 = vmatpush.bf16.msra.mxu0 %v477
    %1709 = vmatpush.bf16.msra.mxu0 %v473
    %1710 = vmatpush.bf16.msra.mxu0 %v469
    %1711 = vmatpush.bf16.msra.mxu0 %v465
    %1712 = vmatpush.bf16.msra.mxu0 %v461
    %1713 = vmatpush.bf16.msra.mxu0 %v457
    %1714 = vmatpush.bf16.msra.mxu0 %v453
    %1715 = vmatpush.bf16.msra.mxu0 %v449
    %1716 = vmatmul.bf16.gmra.mxu0 %v1535
    %v1717 = vpop.f32.mrf.mxu0
    %v1718 = vadd.f32 0.0, %v1717
    %v1719 = vpop.f32.mrf.mxu0
    %1720 = vdwg.mxu0
    %1721 = vmatpush.bf16.msra.mxu0 %v478
    %1722 = vmatpush.bf16.msra.mxu0 %v474
    %1723 = vmatpush.bf16.msra.mxu0 %v470
    %1724 = vmatpush.bf16.msra.mxu0 %v466
    %1725 = vmatpush.bf16.msra.mxu0 %v462
    %1726 = vmatpush.bf16.msra.mxu0 %v458
    %1727 = vmatpush.bf16.msra.mxu0 %v454
    %1728 = vmatpush.bf16.msra.mxu0 %v450
    %1729 = vmatmul.bf16.gmra.mxu0 %v1535
    %v1730 = vpop.f32.mrf.mxu0
    %v1731 = vadd.f32 0.0, %v1730
    %v1732 = vpop.f32.mrf.mxu0
    %1733 = vdwg.mxu0
    %1734 = vmatpush.bf16.msra.mxu0 %v479
    %1735 = vmatpush.bf16.msra.mxu0 %v475
    %1736 = vmatpush.bf16.msra.mxu0 %v471
    %1737 = vmatpush.bf16.msra.mxu0 %v467
    %1738 = vmatpush.bf16.msra.mxu0 %v463
    %1739 = vmatpush.bf16.msra.mxu0 %v459
    %1740 = vmatpush.bf16.msra.mxu0 %v455
    %1741 = vmatpush.bf16.msra.mxu0 %v451
    %1742 = vmatmul.bf16.gmra.mxu0 %v1535
    %v1743 = vpop.f32.mrf.mxu0
    %v1744 = vadd.f32 0.0, %v1743
    %v1745 = vpop.f32.mrf.mxu0
    %1746 = vdwg.mxu0
    %1747 = vmatpush.bf16.msra.mxu0 %v480
    %1748 = vmatpush.bf16.msra.mxu0 %v476
    %1749 = vmatpush.bf16.msra.mxu0 %v472
    %1750 = vmatpush.bf16.msra.mxu0 %v468
    %1751 = vmatpush.bf16.msra.mxu0 %v464
    %1752 = vmatpush.bf16.msra.mxu0 %v460
    %1753 = vmatpush.bf16.msra.mxu0 %v456
    %1754 = vmatpush.bf16.msra.mxu0 %v452
    %1755 = vmatmul.bf16.gmra.mxu0 %v1535
    %v1756 = vpop.f32.mrf.mxu0
    %v1757 = vadd.f32 0.0, %v1756
    %v1758 = vpop.f32.mrf.mxu0
    %1759 = vdwg.mxu0
    %v1760 = vadd.f32 %v244, %v1718
    %v1761 = vadd.f32 %v273, %v1731
    %v1762 = vadd.f32 %v302, %v1744
    %v1763 = vadd.f32 %v331, %v1757
    %v1764 = vxor.u32 %v1760, 2147483648
    %v1765 = vmul.f32 %v1764, 1.442695
    %v1766 = vpow.pop %v1765
    %v1767 = vadd.f32 %v1766, 1.0
    %v1768 = vrcp.pop %v1767
    %v1769 = vmul.f32 %v1767, %v1768
    %v1770 = vsub.f32 1.0, %v1769
    %v1771 = vmul.f32 %v1768, %v1770
    %v1772 = vadd.f32 %v1768, %v1771
    %vm1773 = vweird.f32 %v1767
    %vm1774 = vweird.f32 %v1768
    %vm1775 = vmor %vm1773, %vm1774
    %v1776 = vsel %vm1775, %v1768, %v1772
    %v1777 = vand.u32 2147483647, %v1767
    %vm1778 = vcmp.eq.f32.partialorder %v1777, 8.507059e+37
    %v1779 = vand.u32 %v1767, 2147483648
    %v1780 = vor.u32 1.1754944e-38, %v1779
    %v1781 = vsel %vm1778, %v1780, %v1776
    %v1782 = vmul.f32 1.0, %v1781
    %v1783 = vxor.u32 %v1761, 2147483648
    %v1784 = vmul.f32 %v1783, 1.442695
    %v1785 = vpow.pop %v1784
    %v1786 = vadd.f32 %v1785, 1.0
    %v1787 = vrcp.pop %v1786
    %v1788 = vmul.f32 %v1786, %v1787
    %v1789 = vsub.f32 1.0, %v1788
    %v1790 = vmul.f32 %v1787, %v1789
    %v1791 = vadd.f32 %v1787, %v1790
    %vm1792 = vweird.f32 %v1786
    %vm1793 = vweird.f32 %v1787
    %vm1794 = vmor %vm1792, %vm1793
    %v1795 = vsel %vm1794, %v1787, %v1791
    %v1796 = vand.u32 2147483647, %v1786
    %vm1797 = vcmp.eq.f32.partialorder %v1796, 8.507059e+37
    %v1798 = vand.u32 %v1786, 2147483648
    %v1799 = vor.u32 1.1754944e-38, %v1798
    %v1800 = vsel %vm1797, %v1799, %v1795
    %v1801 = vmul.f32 1.0, %v1800
    %v1802 = vtanh.pop %v1762
    %v1803 = vxor.u32 %v1763, 2147483648
    %v1804 = vmul.f32 %v1803, 1.442695
    %v1805 = vpow.pop %v1804
    %v1806 = vadd.f32 %v1805, 1.0
    %v1807 = vrcp.pop %v1806
    %v1808 = vmul.f32 %v1806, %v1807
    %v1809 = vsub.f32 1.0, %v1808
    %v1810 = vmul.f32 %v1807, %v1809
    %v1811 = vadd.f32 %v1807, %v1810
    %vm1812 = vweird.f32 %v1806
    %vm1813 = vweird.f32 %v1807
    %vm1814 = vmor %vm1812, %vm1813
    %v1815 = vsel %vm1814, %v1807, %v1811
    %v1816 = vand.u32 2147483647, %v1806
    %vm1817 = vcmp.eq.f32.partialorder %v1816, 8.507059e+37
    %v1818 = vand.u32 %v1806, 2147483648
    %v1819 = vor.u32 1.1754944e-38, %v1818
    %v1820 = vsel %vm1817, %v1819, %v1815
    %v1821 = vmul.f32 1.0, %v1820
    %v1822 = vmul.f32 %v1801, %v1532
    %v1823 = vmul.f32 %v1782, %v1802
    %v1824 = vadd.f32 %v1822, %v1823
    %v1825 = vtanh.pop %v1824
    %v1826 = vmul.f32 %v1821, %v1825
    %v1827 = vpack.c.bf16 %v1826, %v1826
    %v1828 = vpack.c.bf16 %v1707, %v1707
    %1829 = vmatpush.bf16.msra.mxu0 %v757
    %1830 = vmatpush.bf16.msra.mxu0 %v753
    %1831 = vmatpush.bf16.msra.mxu0 %v749
    %1832 = vmatpush.bf16.msra.mxu0 %v745
    %1833 = vmatpush.bf16.msra.mxu0 %v741
    %1834 = vmatpush.bf16.msra.mxu0 %v737
    %1835 = vmatpush.bf16.msra.mxu0 %v733
    %1836 = vmatpush.bf16.msra.mxu0 %v729
    %1837 = vmatmul.bf16.gmra.mxu0 %v1828
    %v1838 = vpop.f32.mrf.mxu0
    %v1839 = vadd.f32 0.0, %v1838
    %v1840 = vpop.f32.mrf.mxu0
    %1841 = vdwg.mxu0
    %1842 = vmatpush.bf16.msra.mxu0 %v758
    %1843 = vmatpush.bf16.msra.mxu0 %v754
    %1844 = vmatpush.bf16.msra.mxu0 %v750
    %1845 = vmatpush.bf16.msra.mxu0 %v746
    %1846 = vmatpush.bf16.msra.mxu0 %v742
    %1847 = vmatpush.bf16.msra.mxu0 %v738
    %1848 = vmatpush.bf16.msra.mxu0 %v734
    %1849 = vmatpush.bf16.msra.mxu0 %v730
    %1850 = vmatmul.bf16.gmra.mxu0 %v1828
    %v1851 = vpop.f32.mrf.mxu0
    %v1852 = vadd.f32 0.0, %v1851
    %v1853 = vpop.f32.mrf.mxu0
    %1854 = vdwg.mxu0
    %1855 = vmatpush.bf16.msra.mxu0 %v759
    %1856 = vmatpush.bf16.msra.mxu0 %v755
    %1857 = vmatpush.bf16.msra.mxu0 %v751
    %1858 = vmatpush.bf16.msra.mxu0 %v747
    %1859 = vmatpush.bf16.msra.mxu0 %v743
    %1860 = vmatpush.bf16.msra.mxu0 %v739
    %1861 = vmatpush.bf16.msra.mxu0 %v735
    %1862 = vmatpush.bf16.msra.mxu0 %v731
    %1863 = vmatmul.bf16.gmra.mxu0 %v1828
    %v1864 = vpop.f32.mrf.mxu0
    %v1865 = vadd.f32 0.0, %v1864
    %v1866 = vpop.f32.mrf.mxu0
    %1867 = vdwg.mxu0
    %1868 = vmatpush.bf16.msra.mxu0 %v760
    %1869 = vmatpush.bf16.msra.mxu0 %v756
    %1870 = vmatpush.bf16.msra.mxu0 %v752
    %1871 = vmatpush.bf16.msra.mxu0 %v748
    %1872 = vmatpush.bf16.msra.mxu0 %v744
    %1873 = vmatpush.bf16.msra.mxu0 %v740
    %1874 = vmatpush.bf16.msra.mxu0 %v736
    %1875 = vmatpush.bf16.msra.mxu0 %v732
    %1876 = vmatmul.bf16.gmra.mxu0 %v1828
    %v1877 = vpop.f32.mrf.mxu0
    %v1878 = vadd.f32 0.0, %v1877
    %v1879 = vpop.f32.mrf.mxu0
    %1880 = vdwg.mxu0
    %1881 = vmatpush.bf16.msra.mxu0 %v969
    %1882 = vmatpush.bf16.msra.mxu0 %v965
    %1883 = vmatpush.bf16.msra.mxu0 %v961
    %1884 = vmatpush.bf16.msra.mxu0 %v957
    %1885 = vmatpush.bf16.msra.mxu0 %v953
    %1886 = vmatpush.bf16.msra.mxu0 %v949
    %1887 = vmatpush.bf16.msra.mxu0 %v945
    %1888 = vmatpush.bf16.msra.mxu0 %v941
    %1889 = vmatmul.bf16.gmra.mxu0 %v1827
    %v1890 = vpop.f32.mrf.mxu0
    %v1891 = vadd.f32 %v1839, %v1890
    %v1892 = vpop.f32.mrf.mxu0
    %1893 = vdwg.mxu0
    %1894 = vmatpush.bf16.msra.mxu0 %v970
    %1895 = vmatpush.bf16.msra.mxu0 %v966
    %1896 = vmatpush.bf16.msra.mxu0 %v962
    %1897 = vmatpush.bf16.msra.mxu0 %v958
    %1898 = vmatpush.bf16.msra.mxu0 %v954
    %1899 = vmatpush.bf16.msra.mxu0 %v950
    %1900 = vmatpush.bf16.msra.mxu0 %v946
    %1901 = vmatpush.bf16.msra.mxu0 %v942
    %1902 = vmatmul.bf16.gmra.mxu0 %v1827
    %v1903 = vpop.f32.mrf.mxu0
    %v1904 = vadd.f32 %v1852, %v1903
    %v1905 = vpop.f32.mrf.mxu0
    %1906 = vdwg.mxu0
    %1907 = vmatpush.bf16.msra.mxu0 %v971
    %1908 = vmatpush.bf16.msra.mxu0 %v967
    %1909 = vmatpush.bf16.msra.mxu0 %v963
    %1910 = vmatpush.bf16.msra.mxu0 %v959
    %1911 = vmatpush.bf16.msra.mxu0 %v955
    %1912 = vmatpush.bf16.msra.mxu0 %v951
    %1913 = vmatpush.bf16.msra.mxu0 %v947
    %1914 = vmatpush.bf16.msra.mxu0 %v943
    %1915 = vmatmul.bf16.gmra.mxu0 %v1827
    %v1916 = vpop.f32.mrf.mxu0
    %v1917 = vadd.f32 %v1865, %v1916
    %v1918 = vpop.f32.mrf.mxu0
    %1919 = vdwg.mxu0
    %1920 = vmatpush.bf16.msra.mxu0 %v972
    %1921 = vmatpush.bf16.msra.mxu0 %v968
    %1922 = vmatpush.bf16.msra.mxu0 %v964
    %1923 = vmatpush.bf16.msra.mxu0 %v960
    %1924 = vmatpush.bf16.msra.mxu0 %v956
    %1925 = vmatpush.bf16.msra.mxu0 %v952
    %1926 = vmatpush.bf16.msra.mxu0 %v948
    %1927 = vmatpush.bf16.msra.mxu0 %v944
    %1928 = vmatmul.bf16.gmra.mxu0 %v1827
    %v1929 = vpop.f32.mrf.mxu0
    %v1930 = vadd.f32 %v1878, %v1929
    %v1931 = vpop.f32.mrf.mxu0
    %1932 = vdwg.mxu0
    %v1933 = vadd.f32 %v1891, %v345
    %v1934 = vadd.f32 %v1904, %v346
    %v1935 = vadd.f32 %v1917, %v347
    %v1936 = vadd.f32 %v1930, %v348
    %v1937 = vxor.u32 %v1933, 2147483648
    %v1938 = vmul.f32 %v1937, 1.442695
    %v1939 = vpow.pop %v1938
    %v1940 = vadd.f32 %v1939, 1.0
    %v1941 = vrcp.pop %v1940
    %v1942 = vmul.f32 %v1940, %v1941
    %v1943 = vsub.f32 1.0, %v1942
    %v1944 = vmul.f32 %v1941, %v1943
    %v1945 = vadd.f32 %v1941, %v1944
    %vm1946 = vweird.f32 %v1940
    %vm1947 = vweird.f32 %v1941
    %vm1948 = vmor %vm1946, %vm1947
    %v1949 = vsel %vm1948, %v1941, %v1945
    %v1950 = vand.u32 2147483647, %v1940
    %vm1951 = vcmp.eq.f32.partialorder %v1950, 8.507059e+37
    %v1952 = vand.u32 %v1940, 2147483648
    %v1953 = vor.u32 1.1754944e-38, %v1952
    %v1954 = vsel %vm1951, %v1953, %v1949
    %v1955 = vmul.f32 1.0, %v1954
    %v1956 = vxor.u32 %v1934, 2147483648
    %v1957 = vmul.f32 %v1956, 1.442695
    %v1958 = vpow.pop %v1957
    %v1959 = vadd.f32 %v1958, 1.0
    %v1960 = vrcp.pop %v1959
    %v1961 = vmul.f32 %v1959, %v1960
    %v1962 = vsub.f32 1.0, %v1961
    %v1963 = vmul.f32 %v1960, %v1962
    %v1964 = vadd.f32 %v1960, %v1963
    %vm1965 = vweird.f32 %v1959
    %vm1966 = vweird.f32 %v1960
    %vm1967 = vmor %vm1965, %vm1966
    %v1968 = vsel %vm1967, %v1960, %v1964
    %v1969 = vand.u32 2147483647, %v1959
    %vm1970 = vcmp.eq.f32.partialorder %v1969, 8.507059e+37
    %v1971 = vand.u32 %v1959, 2147483648
    %v1972 = vor.u32 1.1754944e-38, %v1971
    %v1973 = vsel %vm1970, %v1972, %v1968
    %v1974 = vmul.f32 1.0, %v1973
    %v1975 = vtanh.pop %v1935
    %v1976 = vxor.u32 %v1936, 2147483648
    %v1977 = vmul.f32 %v1976, 1.442695
    %v1978 = vpow.pop %v1977
    %v1979 = vadd.f32 %v1978, 1.0
    %v1980 = vrcp.pop %v1979
    %v1981 = vmul.f32 %v1979, %v1980
    %v1982 = vsub.f32 1.0, %v1981
    %v1983 = vmul.f32 %v1980, %v1982
    %v1984 = vadd.f32 %v1980, %v1983
    %vm1985 = vweird.f32 %v1979
    %vm1986 = vweird.f32 %v1980
    %vm1987 = vmor %vm1985, %vm1986
    %v1988 = vsel %vm1987, %v1980, %v1984
    %v1989 = vand.u32 2147483647, %v1979
    %vm1990 = vcmp.eq.f32.partialorder %v1989, 8.507059e+37
    %v1991 = vand.u32 %v1979, 2147483648
    %v1992 = vor.u32 1.1754944e-38, %v1991
    %v1993 = vsel %vm1990, %v1992, %v1988
    %v1994 = vmul.f32 1.0, %v1993
    %v1995 = vmul.f32 %v1974, %v1705
    %v1996 = vmul.f32 %v1955, %v1975
    %v1997 = vadd.f32 %v1995, %v1996
    %v1998 = vtanh.pop %v1997
    %v1999 = vmul.f32 %v1994, %v1998
    %2000 = vmatpush.bf16.msra.mxu0 %v477
    %2001 = vmatpush.bf16.msra.mxu0 %v473
    %2002 = vmatpush.bf16.msra.mxu0 %v469
    %2003 = vmatpush.bf16.msra.mxu0 %v465
    %2004 = vmatpush.bf16.msra.mxu0 %v461
    %2005 = vmatpush.bf16.msra.mxu0 %v457
    %2006 = vmatpush.bf16.msra.mxu0 %v453
    %2007 = vmatpush.bf16.msra.mxu0 %v449
    %2008 = vmatmul.bf16.gmra.mxu0 %v1827
    %v2009 = vpop.f32.mrf.mxu0
    %v2010 = vadd.f32 0.0, %v2009
    %v2011 = vpop.f32.mrf.mxu0
    %2012 = vdwg.mxu0
    %2013 = vmatpush.bf16.msra.mxu0 %v478
    %2014 = vmatpush.bf16.msra.mxu0 %v474
    %2015 = vmatpush.bf16.msra.mxu0 %v470
    %2016 = vmatpush.bf16.msra.mxu0 %v466
    %2017 = vmatpush.bf16.msra.mxu0 %v462
    %2018 = vmatpush.bf16.msra.mxu0 %v458
    %2019 = vmatpush.bf16.msra.mxu0 %v454
    %2020 = vmatpush.bf16.msra.mxu0 %v450
    %2021 = vmatmul.bf16.gmra.mxu0 %v1827
    %v2022 = vpop.f32.mrf.mxu0
    %v2023 = vadd.f32 0.0, %v2022
    %v2024 = vpop.f32.mrf.mxu0
    %2025 = vdwg.mxu0
    %2026 = vmatpush.bf16.msra.mxu0 %v479
    %2027 = vmatpush.bf16.msra.mxu0 %v475
    %2028 = vmatpush.bf16.msra.mxu0 %v471
    %2029 = vmatpush.bf16.msra.mxu0 %v467
    %2030 = vmatpush.bf16.msra.mxu0 %v463
    %2031 = vmatpush.bf16.msra.mxu0 %v459
    %2032 = vmatpush.bf16.msra.mxu0 %v455
    %2033 = vmatpush.bf16.msra.mxu0 %v451
    %2034 = vmatmul.bf16.gmra.mxu0 %v1827
    %v2035 = vpop.f32.mrf.mxu0
    %v2036 = vadd.f32 0.0, %v2035
    %v2037 = vpop.f32.mrf.mxu0
    %2038 = vdwg.mxu0
    %2039 = vmatpush.bf16.msra.mxu0 %v480
    %2040 = vmatpush.bf16.msra.mxu0 %v476
    %2041 = vmatpush.bf16.msra.mxu0 %v472
    %2042 = vmatpush.bf16.msra.mxu0 %v468
    %2043 = vmatpush.bf16.msra.mxu0 %v464
    %2044 = vmatpush.bf16.msra.mxu0 %v460
    %2045 = vmatpush.bf16.msra.mxu0 %v456
    %2046 = vmatpush.bf16.msra.mxu0 %v452
    %2047 = vmatmul.bf16.gmra.mxu0 %v1827
    %v2048 = vpop.f32.mrf.mxu0
    %v2049 = vadd.f32 0.0, %v2048
    %v2050 = vpop.f32.mrf.mxu0
    %2051 = vdwg.mxu0
    %v2052 = vadd.f32 %v247, %v2010
    %v2053 = vadd.f32 %v276, %v2023
    %v2054 = vadd.f32 %v305, %v2036
    %v2055 = vadd.f32 %v334, %v2049
    %v2056 = vxor.u32 %v2052, 2147483648
    %v2057 = vmul.f32 %v2056, 1.442695
    %v2058 = vpow.pop %v2057
    %v2059 = vadd.f32 %v2058, 1.0
    %v2060 = vrcp.pop %v2059
    %v2061 = vmul.f32 %v2059, %v2060
    %v2062 = vsub.f32 1.0, %v2061
    %v2063 = vmul.f32 %v2060, %v2062
    %v2064 = vadd.f32 %v2060, %v2063
    %vm2065 = vweird.f32 %v2059
    %vm2066 = vweird.f32 %v2060
    %vm2067 = vmor %vm2065, %vm2066
    %v2068 = vsel %vm2067, %v2060, %v2064
    %v2069 = vand.u32 2147483647, %v2059
    %vm2070 = vcmp.eq.f32.partialorder %v2069, 8.507059e+37
    %v2071 = vand.u32 %v2059, 2147483648
    %v2072 = vor.u32 1.1754944e-38, %v2071
    %v2073 = vsel %vm2070, %v2072, %v2068
    %v2074 = vmul.f32 1.0, %v2073
    %v2075 = vxor.u32 %v2053, 2147483648
    %v2076 = vmul.f32 %v2075, 1.442695
    %v2077 = vpow.pop %v2076
    %v2078 = vadd.f32 %v2077, 1.0
    %v2079 = vrcp.pop %v2078
    %v2080 = vmul.f32 %v2078, %v2079
    %v2081 = vsub.f32 1.0, %v2080
    %v2082 = vmul.f32 %v2079, %v2081
    %v2083 = vadd.f32 %v2079, %v2082
    %vm2084 = vweird.f32 %v2078
    %vm2085 = vweird.f32 %v2079
    %vm2086 = vmor %vm2084, %vm2085
    %v2087 = vsel %vm2086, %v2079, %v2083
    %v2088 = vand.u32 2147483647, %v2078
    %vm2089 = vcmp.eq.f32.partialorder %v2088, 8.507059e+37
    %v2090 = vand.u32 %v2078, 2147483648
    %v2091 = vor.u32 1.1754944e-38, %v2090
    %v2092 = vsel %vm2089, %v2091, %v2087
    %v2093 = vmul.f32 1.0, %v2092
    %v2094 = vtanh.pop %v2054
    %v2095 = vxor.u32 %v2055, 2147483648
    %v2096 = vmul.f32 %v2095, 1.442695
    %v2097 = vpow.pop %v2096
    %v2098 = vadd.f32 %v2097, 1.0
    %v2099 = vrcp.pop %v2098
    %v2100 = vmul.f32 %v2098, %v2099
    %v2101 = vsub.f32 1.0, %v2100
    %v2102 = vmul.f32 %v2099, %v2101
    %v2103 = vadd.f32 %v2099, %v2102
    %vm2104 = vweird.f32 %v2098
    %vm2105 = vweird.f32 %v2099
    %vm2106 = vmor %vm2104, %vm2105
    %v2107 = vsel %vm2106, %v2099, %v2103
    %v2108 = vand.u32 2147483647, %v2098
    %vm2109 = vcmp.eq.f32.partialorder %v2108, 8.507059e+37
    %v2110 = vand.u32 %v2098, 2147483648
    %v2111 = vor.u32 1.1754944e-38, %v2110
    %v2112 = vsel %vm2109, %v2111, %v2107
    %v2113 = vmul.f32 1.0, %v2112
    %v2114 = vmul.f32 %v2093, %v1824
    %v2115 = vmul.f32 %v2074, %v2094
    %v2116 = vadd.f32 %v2114, %v2115
    %v2117 = vtanh.pop %v2116
    %v2118 = vmul.f32 %v2113, %v2117
    %v2119 = vpack.c.bf16 %v2118, %v2118
    %v2120 = vpack.c.bf16 %v1999, %v1999
    %2121 = vmatpush.bf16.msra.mxu0 %v757
    %2122 = vmatpush.bf16.msra.mxu0 %v753
    %2123 = vmatpush.bf16.msra.mxu0 %v749
    %2124 = vmatpush.bf16.msra.mxu0 %v745
    %2125 = vmatpush.bf16.msra.mxu0 %v741
    %2126 = vmatpush.bf16.msra.mxu0 %v737
    %2127 = vmatpush.bf16.msra.mxu0 %v733
    %2128 = vmatpush.bf16.msra.mxu0 %v729
    %2129 = vmatmul.bf16.gmra.mxu0 %v2120
    %v2130 = vpop.f32.mrf.mxu0
    %v2131 = vadd.f32 0.0, %v2130
    %v2132 = vpop.f32.mrf.mxu0
    %2133 = vdwg.mxu0
    %2134 = vmatpush.bf16.msra.mxu0 %v758
    %2135 = vmatpush.bf16.msra.mxu0 %v754
    %2136 = vmatpush.bf16.msra.mxu0 %v750
    %2137 = vmatpush.bf16.msra.mxu0 %v746
    %2138 = vmatpush.bf16.msra.mxu0 %v742
    %2139 = vmatpush.bf16.msra.mxu0 %v738
    %2140 = vmatpush.bf16.msra.mxu0 %v734
    %2141 = vmatpush.bf16.msra.mxu0 %v730
    %2142 = vmatmul.bf16.gmra.mxu0 %v2120
    %v2143 = vpop.f32.mrf.mxu0
    %v2144 = vadd.f32 0.0, %v2143
    %v2145 = vpop.f32.mrf.mxu0
    %2146 = vdwg.mxu0
    %2147 = vmatpush.bf16.msra.mxu0 %v759
    %2148 = vmatpush.bf16.msra.mxu0 %v755
    %2149 = vmatpush.bf16.msra.mxu0 %v751
    %2150 = vmatpush.bf16.msra.mxu0 %v747
    %2151 = vmatpush.bf16.msra.mxu0 %v743
    %2152 = vmatpush.bf16.msra.mxu0 %v739
    %2153 = vmatpush.bf16.msra.mxu0 %v735
    %2154 = vmatpush.bf16.msra.mxu0 %v731
    %2155 = vmatmul.bf16.gmra.mxu0 %v2120
    %v2156 = vpop.f32.mrf.mxu0
    %v2157 = vadd.f32 0.0, %v2156
    %v2158 = vpop.f32.mrf.mxu0
    %2159 = vdwg.mxu0
    %2160 = vmatpush.bf16.msra.mxu0 %v760
    %2161 = vmatpush.bf16.msra.mxu0 %v756
    %2162 = vmatpush.bf16.msra.mxu0 %v752
    %2163 = vmatpush.bf16.msra.mxu0 %v748
    %2164 = vmatpush.bf16.msra.mxu0 %v744
    %2165 = vmatpush.bf16.msra.mxu0 %v740
    %2166 = vmatpush.bf16.msra.mxu0 %v736
    %2167 = vmatpush.bf16.msra.mxu0 %v732
    %2168 = vmatmul.bf16.gmra.mxu0 %v2120
    %v2169 = vpop.f32.mrf.mxu0
    %v2170 = vadd.f32 0.0, %v2169
    %v2171 = vpop.f32.mrf.mxu0
    %2172 = vdwg.mxu0
    %2173 = vmatpush.bf16.msra.mxu0 %v969
    %2174 = vmatpush.bf16.msra.mxu0 %v965
    %2175 = vmatpush.bf16.msra.mxu0 %v961
    %2176 = vmatpush.bf16.msra.mxu0 %v957
    %2177 = vmatpush.bf16.msra.mxu0 %v953
    %2178 = vmatpush.bf16.msra.mxu0 %v949
    %2179 = vmatpush.bf16.msra.mxu0 %v945
    %2180 = vmatpush.bf16.msra.mxu0 %v941
    %2181 = vmatmul.bf16.gmra.mxu0 %v2119
    %v2182 = vpop.f32.mrf.mxu0
    %v2183 = vadd.f32 %v2131, %v2182
    %v2184 = vpop.f32.mrf.mxu0
    %2185 = vdwg.mxu0
    %2186 = vmatpush.bf16.msra.mxu0 %v970
    %2187 = vmatpush.bf16.msra.mxu0 %v966
    %2188 = vmatpush.bf16.msra.mxu0 %v962
    %2189 = vmatpush.bf16.msra.mxu0 %v958
    %2190 = vmatpush.bf16.msra.mxu0 %v954
    %2191 = vmatpush.bf16.msra.mxu0 %v950
    %2192 = vmatpush.bf16.msra.mxu0 %v946
    %2193 = vmatpush.bf16.msra.mxu0 %v942
    %2194 = vmatmul.bf16.gmra.mxu0 %v2119
    %v2195 = vpop.f32.mrf.mxu0
    %v2196 = vadd.f32 %v2144, %v2195
    %v2197 = vpop.f32.mrf.mxu0
    %2198 = vdwg.mxu0
    %2199 = vmatpush.bf16.msra.mxu0 %v971
    %2200 = vmatpush.bf16.msra.mxu0 %v967
    %2201 = vmatpush.bf16.msra.mxu0 %v963
    %2202 = vmatpush.bf16.msra.mxu0 %v959
    %2203 = vmatpush.bf16.msra.mxu0 %v955
    %2204 = vmatpush.bf16.msra.mxu0 %v951
    %2205 = vmatpush.bf16.msra.mxu0 %v947
    %2206 = vmatpush.bf16.msra.mxu0 %v943
    %2207 = vmatmul.bf16.gmra.mxu0 %v2119
    %v2208 = vpop.f32.mrf.mxu0
    %v2209 = vadd.f32 %v2157, %v2208
    %v2210 = vpop.f32.mrf.mxu0
    %2211 = vdwg.mxu0
    %2212 = vmatpush.bf16.msra.mxu0 %v972
    %2213 = vmatpush.bf16.msra.mxu0 %v968
    %2214 = vmatpush.bf16.msra.mxu0 %v964
    %2215 = vmatpush.bf16.msra.mxu0 %v960
    %2216 = vmatpush.bf16.msra.mxu0 %v956
    %2217 = vmatpush.bf16.msra.mxu0 %v952
    %2218 = vmatpush.bf16.msra.mxu0 %v948
    %2219 = vmatpush.bf16.msra.mxu0 %v944
    %2220 = vmatmul.bf16.gmra.mxu0 %v2119
    %v2221 = vpop.f32.mrf.mxu0
    %v2222 = vadd.f32 %v2170, %v2221
    %v2223 = vpop.f32.mrf.mxu0
    %2224 = vdwg.mxu0
    %v2225 = vadd.f32 %v2183, %v345
    %v2226 = vadd.f32 %v2196, %v346
    %v2227 = vadd.f32 %v2209, %v347
    %v2228 = vadd.f32 %v2222, %v348
    %v2229 = vxor.u32 %v2225, 2147483648
    %v2230 = vmul.f32 %v2229, 1.442695
    %v2231 = vpow.pop %v2230
    %v2232 = vadd.f32 %v2231, 1.0
    %v2233 = vrcp.pop %v2232
    %v2234 = vmul.f32 %v2232, %v2233
    %v2235 = vsub.f32 1.0, %v2234
    %v2236 = vmul.f32 %v2233, %v2235
    %v2237 = vadd.f32 %v2233, %v2236
    %vm2238 = vweird.f32 %v2232
    %vm2239 = vweird.f32 %v2233
    %vm2240 = vmor %vm2238, %vm2239
    %v2241 = vsel %vm2240, %v2233, %v2237
    %v2242 = vand.u32 2147483647, %v2232
    %vm2243 = vcmp.eq.f32.partialorder %v2242, 8.507059e+37
    %v2244 = vand.u32 %v2232, 2147483648
    %v2245 = vor.u32 1.1754944e-38, %v2244
    %v2246 = vsel %vm2243, %v2245, %v2241
    %v2247 = vmul.f32 1.0, %v2246
    %v2248 = vxor.u32 %v2226, 2147483648
    %v2249 = vmul.f32 %v2248, 1.442695
    %v2250 = vpow.pop %v2249
    %v2251 = vadd.f32 %v2250, 1.0
    %v2252 = vrcp.pop %v2251
    %v2253 = vmul.f32 %v2251, %v2252
    %v2254 = vsub.f32 1.0, %v2253
    %v2255 = vmul.f32 %v2252, %v2254
    %v2256 = vadd.f32 %v2252, %v2255
    %vm2257 = vweird.f32 %v2251
    %vm2258 = vweird.f32 %v2252
    %vm2259 = vmor %vm2257, %vm2258
    %v2260 = vsel %vm2259, %v2252, %v2256
    %v2261 = vand.u32 2147483647, %v2251
    %vm2262 = vcmp.eq.f32.partialorder %v2261, 8.507059e+37
    %v2263 = vand.u32 %v2251, 2147483648
    %v2264 = vor.u32 1.1754944e-38, %v2263
    %v2265 = vsel %vm2262, %v2264, %v2260
    %v2266 = vmul.f32 1.0, %v2265
    %v2267 = vtanh.pop %v2227
    %v2268 = vxor.u32 %v2228, 2147483648
    %v2269 = vmul.f32 %v2268, 1.442695
    %v2270 = vpow.pop %v2269
    %v2271 = vadd.f32 %v2270, 1.0
    %v2272 = vrcp.pop %v2271
    %v2273 = vmul.f32 %v2271, %v2272
    %v2274 = vsub.f32 1.0, %v2273
    %v2275 = vmul.f32 %v2272, %v2274
    %v2276 = vadd.f32 %v2272, %v2275
    %vm2277 = vweird.f32 %v2271
    %vm2278 = vweird.f32 %v2272
    %vm2279 = vmor %vm2277, %vm2278
    %v2280 = vsel %vm2279, %v2272, %v2276
    %v2281 = vand.u32 2147483647, %v2271
    %vm2282 = vcmp.eq.f32.partialorder %v2281, 8.507059e+37
    %v2283 = vand.u32 %v2271, 2147483648
    %v2284 = vor.u32 1.1754944e-38, %v2283
    %v2285 = vsel %vm2282, %v2284, %v2280
    %v2286 = vmul.f32 1.0, %v2285
    %v2287 = vmul.f32 %v2266, %v1997
    %v2288 = vmul.f32 %v2247, %v2267
    %v2289 = vadd.f32 %v2287, %v2288
    %v2290 = vtanh.pop %v2289
    %v2291 = vmul.f32 %v2286, %v2290
    %2292 = vmatpush.bf16.msra.mxu0 %v477
    %2293 = vmatpush.bf16.msra.mxu0 %v473
    %2294 = vmatpush.bf16.msra.mxu0 %v469
    %2295 = vmatpush.bf16.msra.mxu0 %v465
    %2296 = vmatpush.bf16.msra.mxu0 %v461
    %2297 = vmatpush.bf16.msra.mxu0 %v457
    %2298 = vmatpush.bf16.msra.mxu0 %v453
    %2299 = vmatpush.bf16.msra.mxu0 %v449
    %2300 = vmatmul.bf16.gmra.mxu0 %v2119
    %v2301 = vpop.f32.mrf.mxu0
    %v2302 = vadd.f32 0.0, %v2301
    %v2303 = vpop.f32.mrf.mxu0
    %2304 = vdwg.mxu0
    %2305 = vmatpush.bf16.msra.mxu0 %v478
    %2306 = vmatpush.bf16.msra.mxu0 %v474
    %2307 = vmatpush.bf16.msra.mxu0 %v470
    %2308 = vmatpush.bf16.msra.mxu0 %v466
    %2309 = vmatpush.bf16.msra.mxu0 %v462
    %2310 = vmatpush.bf16.msra.mxu0 %v458
    %2311 = vmatpush.bf16.msra.mxu0 %v454
    %2312 = vmatpush.bf16.msra.mxu0 %v450
    %2313 = vmatmul.bf16.gmra.mxu0 %v2119
    %v2314 = vpop.f32.mrf.mxu0
    %v2315 = vadd.f32 0.0, %v2314
    %v2316 = vpop.f32.mrf.mxu0
    %2317 = vdwg.mxu0
    %2318 = vmatpush.bf16.msra.mxu0 %v479
    %2319 = vmatpush.bf16.msra.mxu0 %v475
    %2320 = vmatpush.bf16.msra.mxu0 %v471
    %2321 = vmatpush.bf16.msra.mxu0 %v467
    %2322 = vmatpush.bf16.msra.mxu0 %v463
    %2323 = vmatpush.bf16.msra.mxu0 %v459
    %2324 = vmatpush.bf16.msra.mxu0 %v455
    %2325 = vmatpush.bf16.msra.mxu0 %v451
    %2326 = vmatmul.bf16.gmra.mxu0 %v2119
    %v2327 = vpop.f32.mrf.mxu0
    %v2328 = vadd.f32 0.0, %v2327
    %v2329 = vpop.f32.mrf.mxu0
    %2330 = vdwg.mxu0
    %2331 = vmatpush.bf16.msra.mxu0 %v480
    %2332 = vmatpush.bf16.msra.mxu0 %v476
    %2333 = vmatpush.bf16.msra.mxu0 %v472
    %2334 = vmatpush.bf16.msra.mxu0 %v468
    %2335 = vmatpush.bf16.msra.mxu0 %v464
    %2336 = vmatpush.bf16.msra.mxu0 %v460
    %2337 = vmatpush.bf16.msra.mxu0 %v456
    %2338 = vmatpush.bf16.msra.mxu0 %v452
    %2339 = vmatmul.bf16.gmra.mxu0 %v2119
    %v2340 = vpop.f32.mrf.mxu0
    %v2341 = vadd.f32 0.0, %v2340
    %v2342 = vpop.f32.mrf.mxu0
    %2343 = vdwg.mxu0
    %v2344 = vadd.f32 %v249, %v2302
    %v2345 = vadd.f32 %v278, %v2315
    %v2346 = vadd.f32 %v307, %v2328
    %v2347 = vadd.f32 %v336, %v2341
    %v2348 = vxor.u32 %v2344, 2147483648
    %v2349 = vmul.f32 %v2348, 1.442695
    %v2350 = vpow.pop %v2349
    %v2351 = vadd.f32 %v2350, 1.0
    %v2352 = vrcp.pop %v2351
    %v2353 = vmul.f32 %v2351, %v2352
    %v2354 = vsub.f32 1.0, %v2353
    %v2355 = vmul.f32 %v2352, %v2354
    %v2356 = vadd.f32 %v2352, %v2355
    %vm2357 = vweird.f32 %v2351
    %vm2358 = vweird.f32 %v2352
    %vm2359 = vmor %vm2357, %vm2358
    %v2360 = vsel %vm2359, %v2352, %v2356
    %v2361 = vand.u32 2147483647, %v2351
    %vm2362 = vcmp.eq.f32.partialorder %v2361, 8.507059e+37
    %v2363 = vand.u32 %v2351, 2147483648
    %v2364 = vor.u32 1.1754944e-38, %v2363
    %v2365 = vsel %vm2362, %v2364, %v2360
    %v2366 = vmul.f32 1.0, %v2365
    %v2367 = vxor.u32 %v2345, 2147483648
    %v2368 = vmul.f32 %v2367, 1.442695
    %v2369 = vpow.pop %v2368
    %v2370 = vadd.f32 %v2369, 1.0
    %v2371 = vrcp.pop %v2370
    %v2372 = vmul.f32 %v2370, %v2371
    %v2373 = vsub.f32 1.0, %v2372
    %v2374 = vmul.f32 %v2371, %v2373
    %v2375 = vadd.f32 %v2371, %v2374
    %vm2376 = vweird.f32 %v2370
    %vm2377 = vweird.f32 %v2371
    %vm2378 = vmor %vm2376, %vm2377
    %v2379 = vsel %vm2378, %v2371, %v2375
    %v2380 = vand.u32 2147483647, %v2370
    %vm2381 = vcmp.eq.f32.partialorder %v2380, 8.507059e+37
    %v2382 = vand.u32 %v2370, 2147483648
    %v2383 = vor.u32 1.1754944e-38, %v2382
    %v2384 = vsel %vm2381, %v2383, %v2379
    %v2385 = vmul.f32 1.0, %v2384
    %v2386 = vtanh.pop %v2346
    %v2387 = vxor.u32 %v2347, 2147483648
    %v2388 = vmul.f32 %v2387, 1.442695
    %v2389 = vpow.pop %v2388
    %v2390 = vadd.f32 %v2389, 1.0
    %v2391 = vrcp.pop %v2390
    %v2392 = vmul.f32 %v2390, %v2391
    %v2393 = vsub.f32 1.0, %v2392
    %v2394 = vmul.f32 %v2391, %v2393
    %v2395 = vadd.f32 %v2391, %v2394
    %vm2396 = vweird.f32 %v2390
    %vm2397 = vweird.f32 %v2391
    %vm2398 = vmor %vm2396, %vm2397
    %v2399 = vsel %vm2398, %v2391, %v2395
    %v2400 = vand.u32 2147483647, %v2390
    %vm2401 = vcmp.eq.f32.partialorder %v2400, 8.507059e+37
    %v2402 = vand.u32 %v2390, 2147483648
    %v2403 = vor.u32 1.1754944e-38, %v2402
    %v2404 = vsel %vm2401, %v2403, %v2399
    %v2405 = vmul.f32 1.0, %v2404
    %v2406 = vmul.f32 %v2385, %v2116
    %v2407 = vmul.f32 %v2366, %v2386
    %v2408 = vadd.f32 %v2406, %v2407
    %v2409 = vtanh.pop %v2408
    %v2410 = vmul.f32 %v2405, %v2409
    %v2411 = vpack.c.bf16 %v2410, %v2410
    %v2412 = vpack.c.bf16 %v2291, %v2291
    %2413 = vmatpush.bf16.msra.mxu0 %v757
    %2414 = vmatpush.bf16.msra.mxu0 %v753
    %2415 = vmatpush.bf16.msra.mxu0 %v749
    %2416 = vmatpush.bf16.msra.mxu0 %v745
    %2417 = vmatpush.bf16.msra.mxu0 %v741
    %2418 = vmatpush.bf16.msra.mxu0 %v737
    %2419 = vmatpush.bf16.msra.mxu0 %v733
    %2420 = vmatpush.bf16.msra.mxu0 %v729
    %2421 = vmatmul.bf16.gmra.mxu0 %v2412
    %v2422 = vpop.f32.mrf.mxu0
    %v2423 = vadd.f32 0.0, %v2422
    %v2424 = vpop.f32.mrf.mxu0
    %2425 = vdwg.mxu0
    %2426 = vmatpush.bf16.msra.mxu0 %v758
    %2427 = vmatpush.bf16.msra.mxu0 %v754
    %2428 = vmatpush.bf16.msra.mxu0 %v750
    %2429 = vmatpush.bf16.msra.mxu0 %v746
    %2430 = vmatpush.bf16.msra.mxu0 %v742
    %2431 = vmatpush.bf16.msra.mxu0 %v738
    %2432 = vmatpush.bf16.msra.mxu0 %v734
    %2433 = vmatpush.bf16.msra.mxu0 %v730
    %2434 = vmatmul.bf16.gmra.mxu0 %v2412
    %v2435 = vpop.f32.mrf.mxu0
    %v2436 = vadd.f32 0.0, %v2435
    %v2437 = vpop.f32.mrf.mxu0
    %2438 = vdwg.mxu0
    %2439 = vmatpush.bf16.msra.mxu0 %v759
    %2440 = vmatpush.bf16.msra.mxu0 %v755
    %2441 = vmatpush.bf16.msra.mxu0 %v751
    %2442 = vmatpush.bf16.msra.mxu0 %v747
    %2443 = vmatpush.bf16.msra.mxu0 %v743
    %2444 = vmatpush.bf16.msra.mxu0 %v739
    %2445 = vmatpush.bf16.msra.mxu0 %v735
    %2446 = vmatpush.bf16.msra.mxu0 %v731
    %2447 = vmatmul.bf16.gmra.mxu0 %v2412
    %v2448 = vpop.f32.mrf.mxu0
    %v2449 = vadd.f32 0.0, %v2448
    %v2450 = vpop.f32.mrf.mxu0
    %2451 = vdwg.mxu0
    %2452 = vmatpush.bf16.msra.mxu0 %v760
    %2453 = vmatpush.bf16.msra.mxu0 %v756
    %2454 = vmatpush.bf16.msra.mxu0 %v752
    %2455 = vmatpush.bf16.msra.mxu0 %v748
    %2456 = vmatpush.bf16.msra.mxu0 %v744
    %2457 = vmatpush.bf16.msra.mxu0 %v740
    %2458 = vmatpush.bf16.msra.mxu0 %v736
    %2459 = vmatpush.bf16.msra.mxu0 %v732
    %2460 = vmatmul.bf16.gmra.mxu0 %v2412
    %v2461 = vpop.f32.mrf.mxu0
    %v2462 = vadd.f32 0.0, %v2461
    %v2463 = vpop.f32.mrf.mxu0
    %2464 = vdwg.mxu0
    %2465 = vmatpush.bf16.msra.mxu0 %v969
    %2466 = vmatpush.bf16.msra.mxu0 %v965
    %2467 = vmatpush.bf16.msra.mxu0 %v961
    %2468 = vmatpush.bf16.msra.mxu0 %v957
    %2469 = vmatpush.bf16.msra.mxu0 %v953
    %2470 = vmatpush.bf16.msra.mxu0 %v949
    %2471 = vmatpush.bf16.msra.mxu0 %v945
    %2472 = vmatpush.bf16.msra.mxu0 %v941
    %2473 = vmatmul.bf16.gmra.mxu0 %v2411
    %v2474 = vpop.f32.mrf.mxu0
    %v2475 = vadd.f32 %v2423, %v2474
    %v2476 = vpop.f32.mrf.mxu0
    %2477 = vdwg.mxu0
    %2478 = vmatpush.bf16.msra.mxu0 %v970
    %2479 = vmatpush.bf16.msra.mxu0 %v966
    %2480 = vmatpush.bf16.msra.mxu0 %v962
    %2481 = vmatpush.bf16.msra.mxu0 %v958
    %2482 = vmatpush.bf16.msra.mxu0 %v954
    %2483 = vmatpush.bf16.msra.mxu0 %v950
    %2484 = vmatpush.bf16.msra.mxu0 %v946
    %2485 = vmatpush.bf16.msra.mxu0 %v942
    %2486 = vmatmul.bf16.gmra.mxu0 %v2411
    %v2487 = vpop.f32.mrf.mxu0
    %v2488 = vadd.f32 %v2436, %v2487
    %v2489 = vpop.f32.mrf.mxu0
    %2490 = vdwg.mxu0
    %2491 = vmatpush.bf16.msra.mxu0 %v971
    %2492 = vmatpush.bf16.msra.mxu0 %v967
    %2493 = vmatpush.bf16.msra.mxu0 %v963
    %2494 = vmatpush.bf16.msra.mxu0 %v959
    %2495 = vmatpush.bf16.msra.mxu0 %v955
    %2496 = vmatpush.bf16.msra.mxu0 %v951
    %2497 = vmatpush.bf16.msra.mxu0 %v947
    %2498 = vmatpush.bf16.msra.mxu0 %v943
    %2499 = vmatmul.bf16.gmra.mxu0 %v2411
    %v2500 = vpop.f32.mrf.mxu0
    %v2501 = vadd.f32 %v2449, %v2500
    %v2502 = vpop.f32.mrf.mxu0
    %2503 = vdwg.mxu0
    %2504 = vmatpush.bf16.msra.mxu0 %v972
    %2505 = vmatpush.bf16.msra.mxu0 %v968
    %2506 = vmatpush.bf16.msra.mxu0 %v964
    %2507 = vmatpush.bf16.msra.mxu0 %v960
    %2508 = vmatpush.bf16.msra.mxu0 %v956
    %2509 = vmatpush.bf16.msra.mxu0 %v952
    %2510 = vmatpush.bf16.msra.mxu0 %v948
    %2511 = vmatpush.bf16.msra.mxu0 %v944
    %2512 = vmatmul.bf16.gmra.mxu0 %v2411
    %v2513 = vpop.f32.mrf.mxu0
    %v2514 = vadd.f32 %v2462, %v2513
    %v2515 = vpop.f32.mrf.mxu0
    %2516 = vdwg.mxu0
    %v2517 = vadd.f32 %v2475, %v345
    %v2518 = vadd.f32 %v2488, %v346
    %v2519 = vadd.f32 %v2501, %v347
    %v2520 = vadd.f32 %v2514, %v348
    %v2521 = vxor.u32 %v2517, 2147483648
    %v2522 = vmul.f32 %v2521, 1.442695
    %v2523 = vpow.pop %v2522
    %v2524 = vadd.f32 %v2523, 1.0
    %v2525 = vrcp.pop %v2524
    %v2526 = vmul.f32 %v2524, %v2525
    %v2527 = vsub.f32 1.0, %v2526
    %v2528 = vmul.f32 %v2525, %v2527
    %v2529 = vadd.f32 %v2525, %v2528
    %vm2530 = vweird.f32 %v2524
    %vm2531 = vweird.f32 %v2525
    %vm2532 = vmor %vm2530, %vm2531
    %v2533 = vsel %vm2532, %v2525, %v2529
    %v2534 = vand.u32 2147483647, %v2524
    %vm2535 = vcmp.eq.f32.partialorder %v2534, 8.507059e+37
    %v2536 = vand.u32 %v2524, 2147483648
    %v2537 = vor.u32 1.1754944e-38, %v2536
    %v2538 = vsel %vm2535, %v2537, %v2533
    %v2539 = vmul.f32 1.0, %v2538
    %v2540 = vxor.u32 %v2518, 2147483648
    %v2541 = vmul.f32 %v2540, 1.442695
    %v2542 = vpow.pop %v2541
    %v2543 = vadd.f32 %v2542, 1.0
    %v2544 = vrcp.pop %v2543
    %v2545 = vmul.f32 %v2543, %v2544
    %v2546 = vsub.f32 1.0, %v2545
    %v2547 = vmul.f32 %v2544, %v2546
    %v2548 = vadd.f32 %v2544, %v2547
    %vm2549 = vweird.f32 %v2543
    %vm2550 = vweird.f32 %v2544
    %vm2551 = vmor %vm2549, %vm2550
    %v2552 = vsel %vm2551, %v2544, %v2548
    %v2553 = vand.u32 2147483647, %v2543
    %vm2554 = vcmp.eq.f32.partialorder %v2553, 8.507059e+37
    %v2555 = vand.u32 %v2543, 2147483648
    %v2556 = vor.u32 1.1754944e-38, %v2555
    %v2557 = vsel %vm2554, %v2556, %v2552
    %v2558 = vmul.f32 1.0, %v2557
    %v2559 = vtanh.pop %v2519
    %v2560 = vxor.u32 %v2520, 2147483648
    %v2561 = vmul.f32 %v2560, 1.442695
    %v2562 = vpow.pop %v2561
    %v2563 = vadd.f32 %v2562, 1.0
    %v2564 = vrcp.pop %v2563
    %v2565 = vmul.f32 %v2563, %v2564
    %v2566 = vsub.f32 1.0, %v2565
    %v2567 = vmul.f32 %v2564, %v2566
    %v2568 = vadd.f32 %v2564, %v2567
    %vm2569 = vweird.f32 %v2563
    %vm2570 = vweird.f32 %v2564
    %vm2571 = vmor %vm2569, %vm2570
    %v2572 = vsel %vm2571, %v2564, %v2568
    %v2573 = vand.u32 2147483647, %v2563
    %vm2574 = vcmp.eq.f32.partialorder %v2573, 8.507059e+37
    %v2575 = vand.u32 %v2563, 2147483648
    %v2576 = vor.u32 1.1754944e-38, %v2575
    %v2577 = vsel %vm2574, %v2576, %v2572
    %v2578 = vmul.f32 1.0, %v2577
    %v2579 = vmul.f32 %v2558, %v2289
    %v2580 = vmul.f32 %v2539, %v2559
    %v2581 = vadd.f32 %v2579, %v2580
    %v2582 = vtanh.pop %v2581
    %v2583 = vmul.f32 %v2578, %v2582
    %2584 = vmatpush.bf16.msra.mxu0 %v477
    %2585 = vmatpush.bf16.msra.mxu0 %v473
    %2586 = vmatpush.bf16.msra.mxu0 %v469
    %2587 = vmatpush.bf16.msra.mxu0 %v465
    %2588 = vmatpush.bf16.msra.mxu0 %v461
    %2589 = vmatpush.bf16.msra.mxu0 %v457
    %2590 = vmatpush.bf16.msra.mxu0 %v453
    %2591 = vmatpush.bf16.msra.mxu0 %v449
    %2592 = vmatmul.bf16.gmra.mxu0 %v2411
    %v2593 = vpop.f32.mrf.mxu0
    %v2594 = vadd.f32 0.0, %v2593
    %v2595 = vpop.f32.mrf.mxu0
    %2596 = vdwg.mxu0
    %2597 = vmatpush.bf16.msra.mxu0 %v478
    %2598 = vmatpush.bf16.msra.mxu0 %v474
    %2599 = vmatpush.bf16.msra.mxu0 %v470
    %2600 = vmatpush.bf16.msra.mxu0 %v466
    %2601 = vmatpush.bf16.msra.mxu0 %v462
    %2602 = vmatpush.bf16.msra.mxu0 %v458
    %2603 = vmatpush.bf16.msra.mxu0 %v454
    %2604 = vmatpush.bf16.msra.mxu0 %v450
    %2605 = vmatmul.bf16.gmra.mxu0 %v2411
    %v2606 = vpop.f32.mrf.mxu0
    %v2607 = vadd.f32 0.0, %v2606
    %v2608 = vpop.f32.mrf.mxu0
    %2609 = vdwg.mxu0
    %2610 = vmatpush.bf16.msra.mxu0 %v479
    %2611 = vmatpush.bf16.msra.mxu0 %v475
    %2612 = vmatpush.bf16.msra.mxu0 %v471
    %2613 = vmatpush.bf16.msra.mxu0 %v467
    %2614 = vmatpush.bf16.msra.mxu0 %v463
    %2615 = vmatpush.bf16.msra.mxu0 %v459
    %2616 = vmatpush.bf16.msra.mxu0 %v455
    %2617 = vmatpush.bf16.msra.mxu0 %v451
    %2618 = vmatmul.bf16.gmra.mxu0 %v2411
    %v2619 = vpop.f32.mrf.mxu0
    %v2620 = vadd.f32 0.0, %v2619
    %v2621 = vpop.f32.mrf.mxu0
    %2622 = vdwg.mxu0
    %2623 = vmatpush.bf16.msra.mxu0 %v480
    %2624 = vmatpush.bf16.msra.mxu0 %v476
    %2625 = vmatpush.bf16.msra.mxu0 %v472
    %2626 = vmatpush.bf16.msra.mxu0 %v468
    %2627 = vmatpush.bf16.msra.mxu0 %v464
    %2628 = vmatpush.bf16.msra.mxu0 %v460
    %2629 = vmatpush.bf16.msra.mxu0 %v456
    %2630 = vmatpush.bf16.msra.mxu0 %v452
    %2631 = vmatmul.bf16.gmra.mxu0 %v2411
    %v2632 = vpop.f32.mrf.mxu0
    %v2633 = vadd.f32 0.0, %v2632
    %v2634 = vpop.f32.mrf.mxu0
    %2635 = vdwg.mxu0
    %v2636 = vadd.f32 %v252, %v2594
    %v2637 = vadd.f32 %v281, %v2607
    %v2638 = vadd.f32 %v310, %v2620
    %v2639 = vadd.f32 %v339, %v2633
    %v2640 = vxor.u32 %v2636, 2147483648
    %v2641 = vmul.f32 %v2640, 1.442695
    %v2642 = vpow.pop %v2641
    %v2643 = vadd.f32 %v2642, 1.0
    %v2644 = vrcp.pop %v2643
    %v2645 = vmul.f32 %v2643, %v2644
    %v2646 = vsub.f32 1.0, %v2645
    %v2647 = vmul.f32 %v2644, %v2646
    %v2648 = vadd.f32 %v2644, %v2647
    %vm2649 = vweird.f32 %v2643
    %vm2650 = vweird.f32 %v2644
    %vm2651 = vmor %vm2649, %vm2650
    %v2652 = vsel %vm2651, %v2644, %v2648
    %v2653 = vand.u32 2147483647, %v2643
    %vm2654 = vcmp.eq.f32.partialorder %v2653, 8.507059e+37
    %v2655 = vand.u32 %v2643, 2147483648
    %v2656 = vor.u32 1.1754944e-38, %v2655
    %v2657 = vsel %vm2654, %v2656, %v2652
    %v2658 = vmul.f32 1.0, %v2657
    %v2659 = vxor.u32 %v2637, 2147483648
    %v2660 = vmul.f32 %v2659, 1.442695
    %v2661 = vpow.pop %v2660
    %v2662 = vadd.f32 %v2661, 1.0
    %v2663 = vrcp.pop %v2662
    %v2664 = vmul.f32 %v2662, %v2663
    %v2665 = vsub.f32 1.0, %v2664
    %v2666 = vmul.f32 %v2663, %v2665
    %v2667 = vadd.f32 %v2663, %v2666
    %vm2668 = vweird.f32 %v2662
    %vm2669 = vweird.f32 %v2663
    %vm2670 = vmor %vm2668, %vm2669
    %v2671 = vsel %vm2670, %v2663, %v2667
    %v2672 = vand.u32 2147483647, %v2662
    %vm2673 = vcmp.eq.f32.partialorder %v2672, 8.507059e+37
    %v2674 = vand.u32 %v2662, 2147483648
    %v2675 = vor.u32 1.1754944e-38, %v2674
    %v2676 = vsel %vm2673, %v2675, %v2671
    %v2677 = vmul.f32 1.0, %v2676
    %v2678 = vtanh.pop %v2638
    %v2679 = vxor.u32 %v2639, 2147483648
    %v2680 = vmul.f32 %v2679, 1.442695
    %v2681 = vpow.pop %v2680
    %v2682 = vadd.f32 %v2681, 1.0
    %v2683 = vrcp.pop %v2682
    %v2684 = vmul.f32 %v2682, %v2683
    %v2685 = vsub.f32 1.0, %v2684
    %v2686 = vmul.f32 %v2683, %v2685
    %v2687 = vadd.f32 %v2683, %v2686
    %vm2688 = vweird.f32 %v2682
    %vm2689 = vweird.f32 %v2683
    %vm2690 = vmor %vm2688, %vm2689
    %v2691 = vsel %vm2690, %v2683, %v2687
    %v2692 = vand.u32 2147483647, %v2682
    %vm2693 = vcmp.eq.f32.partialorder %v2692, 8.507059e+37
    %v2694 = vand.u32 %v2682, 2147483648
    %v2695 = vor.u32 1.1754944e-38, %v2694
    %v2696 = vsel %vm2693, %v2695, %v2691
    %v2697 = vmul.f32 1.0, %v2696
    %v2698 = vmul.f32 %v2677, %v2408
    %v2699 = vmul.f32 %v2658, %v2678
    %v2700 = vadd.f32 %v2698, %v2699
    %v2701 = vtanh.pop %v2700
    %v2702 = vmul.f32 %v2697, %v2701
    %v2703 = vpack.c.bf16 %v2702, %v2702
    %v2704 = vpack.c.bf16 %v2583, %v2583
    %2705 = vmatpush.bf16.msra.mxu0 %v757
    %2706 = vmatpush.bf16.msra.mxu0 %v753
    %2707 = vmatpush.bf16.msra.mxu0 %v749
    %2708 = vmatpush.bf16.msra.mxu0 %v745
    %2709 = vmatpush.bf16.msra.mxu0 %v741
    %2710 = vmatpush.bf16.msra.mxu0 %v737
    %2711 = vmatpush.bf16.msra.mxu0 %v733
    %2712 = vmatpush.bf16.msra.mxu0 %v729
    %2713 = vmatmul.bf16.gmra.mxu0 %v2704
    %v2714 = vpop.f32.mrf.mxu0
    %v2715 = vadd.f32 0.0, %v2714
    %v2716 = vpop.f32.mrf.mxu0
    %2717 = vdwg.mxu0
    %2718 = vmatpush.bf16.msra.mxu0 %v758
    %2719 = vmatpush.bf16.msra.mxu0 %v754
    %2720 = vmatpush.bf16.msra.mxu0 %v750
    %2721 = vmatpush.bf16.msra.mxu0 %v746
    %2722 = vmatpush.bf16.msra.mxu0 %v742
    %2723 = vmatpush.bf16.msra.mxu0 %v738
    %2724 = vmatpush.bf16.msra.mxu0 %v734
    %2725 = vmatpush.bf16.msra.mxu0 %v730
    %2726 = vmatmul.bf16.gmra.mxu0 %v2704
    %v2727 = vpop.f32.mrf.mxu0
    %v2728 = vadd.f32 0.0, %v2727
    %v2729 = vpop.f32.mrf.mxu0
    %2730 = vdwg.mxu0
    %2731 = vmatpush.bf16.msra.mxu0 %v759
    %2732 = vmatpush.bf16.msra.mxu0 %v755
    %2733 = vmatpush.bf16.msra.mxu0 %v751
    %2734 = vmatpush.bf16.msra.mxu0 %v747
    %2735 = vmatpush.bf16.msra.mxu0 %v743
    %2736 = vmatpush.bf16.msra.mxu0 %v739
    %2737 = vmatpush.bf16.msra.mxu0 %v735
    %2738 = vmatpush.bf16.msra.mxu0 %v731
    %2739 = vmatmul.bf16.gmra.mxu0 %v2704
    %v2740 = vpop.f32.mrf.mxu0
    %v2741 = vadd.f32 0.0, %v2740
    %v2742 = vpop.f32.mrf.mxu0
    %2743 = vdwg.mxu0
    %2744 = vmatpush.bf16.msra.mxu0 %v760
    %2745 = vmatpush.bf16.msra.mxu0 %v756
    %2746 = vmatpush.bf16.msra.mxu0 %v752
    %2747 = vmatpush.bf16.msra.mxu0 %v748
    %2748 = vmatpush.bf16.msra.mxu0 %v744
    %2749 = vmatpush.bf16.msra.mxu0 %v740
    %2750 = vmatpush.bf16.msra.mxu0 %v736
    %2751 = vmatpush.bf16.msra.mxu0 %v732
    %2752 = vmatmul.bf16.gmra.mxu0 %v2704
    %v2753 = vpop.f32.mrf.mxu0
    %v2754 = vadd.f32 0.0, %v2753
    %v2755 = vpop.f32.mrf.mxu0
    %2756 = vdwg.mxu0
    %2757 = vmatpush.bf16.msra.mxu0 %v969
    %2758 = vmatpush.bf16.msra.mxu0 %v965
    %2759 = vmatpush.bf16.msra.mxu0 %v961
    %2760 = vmatpush.bf16.msra.mxu0 %v957
    %2761 = vmatpush.bf16.msra.mxu0 %v953
    %2762 = vmatpush.bf16.msra.mxu0 %v949
    %2763 = vmatpush.bf16.msra.mxu0 %v945
    %2764 = vmatpush.bf16.msra.mxu0 %v941
    %2765 = vmatmul.bf16.gmra.mxu0 %v2703
    %v2766 = vpop.f32.mrf.mxu0
    %v2767 = vadd.f32 %v2715, %v2766
    %v2768 = vpop.f32.mrf.mxu0
    %2769 = vdwg.mxu0
    %2770 = vmatpush.bf16.msra.mxu0 %v970
    %2771 = vmatpush.bf16.msra.mxu0 %v966
    %2772 = vmatpush.bf16.msra.mxu0 %v962
    %2773 = vmatpush.bf16.msra.mxu0 %v958
    %2774 = vmatpush.bf16.msra.mxu0 %v954
    %2775 = vmatpush.bf16.msra.mxu0 %v950
    %2776 = vmatpush.bf16.msra.mxu0 %v946
    %2777 = vmatpush.bf16.msra.mxu0 %v942
    %2778 = vmatmul.bf16.gmra.mxu0 %v2703
    %v2779 = vpop.f32.mrf.mxu0
    %v2780 = vadd.f32 %v2728, %v2779
    %v2781 = vpop.f32.mrf.mxu0
    %2782 = vdwg.mxu0
    %2783 = vmatpush.bf16.msra.mxu0 %v971
    %2784 = vmatpush.bf16.msra.mxu0 %v967
    %2785 = vmatpush.bf16.msra.mxu0 %v963
    %2786 = vmatpush.bf16.msra.mxu0 %v959
    %2787 = vmatpush.bf16.msra.mxu0 %v955
    %2788 = vmatpush.bf16.msra.mxu0 %v951
    %2789 = vmatpush.bf16.msra.mxu0 %v947
    %2790 = vmatpush.bf16.msra.mxu0 %v943
    %2791 = vmatmul.bf16.gmra.mxu0 %v2703
    %v2792 = vpop.f32.mrf.mxu0
    %v2793 = vadd.f32 %v2741, %v2792
    %v2794 = vpop.f32.mrf.mxu0
    %2795 = vdwg.mxu0
    %2796 = vmatpush.bf16.msra.mxu0 %v972
    %2797 = vmatpush.bf16.msra.mxu0 %v968
    %2798 = vmatpush.bf16.msra.mxu0 %v964
    %2799 = vmatpush.bf16.msra.mxu0 %v960
    %2800 = vmatpush.bf16.msra.mxu0 %v956
    %2801 = vmatpush.bf16.msra.mxu0 %v952
    %2802 = vmatpush.bf16.msra.mxu0 %v948
    %2803 = vmatpush.bf16.msra.mxu0 %v944
    %2804 = vmatmul.bf16.gmra.mxu0 %v2703
    %v2805 = vpop.f32.mrf.mxu0
    %v2806 = vadd.f32 %v2754, %v2805
    %v2807 = vpop.f32.mrf.mxu0
    %2808 = vdwg.mxu0
    %v2809 = vadd.f32 %v2767, %v345
    %v2810 = vadd.f32 %v2780, %v346
    %v2811 = vadd.f32 %v2793, %v347
    %v2812 = vadd.f32 %v2806, %v348
    %v2813 = vxor.u32 %v2809, 2147483648
    %v2814 = vmul.f32 %v2813, 1.442695
    %v2815 = vpow.pop %v2814
    %v2816 = vadd.f32 %v2815, 1.0
    %v2817 = vrcp.pop %v2816
    %v2818 = vmul.f32 %v2816, %v2817
    %v2819 = vsub.f32 1.0, %v2818
    %v2820 = vmul.f32 %v2817, %v2819
    %v2821 = vadd.f32 %v2817, %v2820
    %vm2822 = vweird.f32 %v2816
    %vm2823 = vweird.f32 %v2817
    %vm2824 = vmor %vm2822, %vm2823
    %v2825 = vsel %vm2824, %v2817, %v2821
    %v2826 = vand.u32 2147483647, %v2816
    %vm2827 = vcmp.eq.f32.partialorder %v2826, 8.507059e+37
    %v2828 = vand.u32 %v2816, 2147483648
    %v2829 = vor.u32 1.1754944e-38, %v2828
    %v2830 = vsel %vm2827, %v2829, %v2825
    %v2831 = vmul.f32 1.0, %v2830
    %v2832 = vxor.u32 %v2810, 2147483648
    %v2833 = vmul.f32 %v2832, 1.442695
    %v2834 = vpow.pop %v2833
    %v2835 = vadd.f32 %v2834, 1.0
    %v2836 = vrcp.pop %v2835
    %v2837 = vmul.f32 %v2835, %v2836
    %v2838 = vsub.f32 1.0, %v2837
    %v2839 = vmul.f32 %v2836, %v2838
    %v2840 = vadd.f32 %v2836, %v2839
    %vm2841 = vweird.f32 %v2835
    %vm2842 = vweird.f32 %v2836
    %vm2843 = vmor %vm2841, %vm2842
    %v2844 = vsel %vm2843, %v2836, %v2840
    %v2845 = vand.u32 2147483647, %v2835
    %vm2846 = vcmp.eq.f32.partialorder %v2845, 8.507059e+37
    %v2847 = vand.u32 %v2835, 2147483648
    %v2848 = vor.u32 1.1754944e-38, %v2847
    %v2849 = vsel %vm2846, %v2848, %v2844
    %v2850 = vmul.f32 1.0, %v2849
    %v2851 = vtanh.pop %v2811
    %v2852 = vxor.u32 %v2812, 2147483648
    %v2853 = vmul.f32 %v2852, 1.442695
    %v2854 = vpow.pop %v2853
    %v2855 = vadd.f32 %v2854, 1.0
    %v2856 = vrcp.pop %v2855
    %v2857 = vmul.f32 %v2855, %v2856
    %v2858 = vsub.f32 1.0, %v2857
    %v2859 = vmul.f32 %v2856, %v2858
    %v2860 = vadd.f32 %v2856, %v2859
    %vm2861 = vweird.f32 %v2855
    %vm2862 = vweird.f32 %v2856
    %vm2863 = vmor %vm2861, %vm2862
    %v2864 = vsel %vm2863, %v2856, %v2860
    %v2865 = vand.u32 2147483647, %v2855
    %vm2866 = vcmp.eq.f32.partialorder %v2865, 8.507059e+37
    %v2867 = vand.u32 %v2855, 2147483648
    %v2868 = vor.u32 1.1754944e-38, %v2867
    %v2869 = vsel %vm2866, %v2868, %v2864
    %v2870 = vmul.f32 1.0, %v2869
    %v2871 = vmul.f32 %v2850, %v2581
    %v2872 = vmul.f32 %v2831, %v2851
    %v2873 = vadd.f32 %v2871, %v2872
    %v2874 = vtanh.pop %v2873
    %v2875 = vmul.f32 %v2870, %v2874
    %2876 = vmatpush.bf16.msra.mxu0 %v477
    %2877 = vmatpush.bf16.msra.mxu0 %v473
    %2878 = vmatpush.bf16.msra.mxu0 %v469
    %2879 = vmatpush.bf16.msra.mxu0 %v465
    %2880 = vmatpush.bf16.msra.mxu0 %v461
    %2881 = vmatpush.bf16.msra.mxu0 %v457
    %2882 = vmatpush.bf16.msra.mxu0 %v453
    %2883 = vmatpush.bf16.msra.mxu0 %v449
    %2884 = vmatmul.bf16.gmra.mxu0 %v2703
    %v2885 = vpop.f32.mrf.mxu0
    %v2886 = vadd.f32 0.0, %v2885
    %v2887 = vpop.f32.mrf.mxu0
    %2888 = vdwg.mxu0
    %2889 = vmatpush.bf16.msra.mxu0 %v478
    %2890 = vmatpush.bf16.msra.mxu0 %v474
    %2891 = vmatpush.bf16.msra.mxu0 %v470
    %2892 = vmatpush.bf16.msra.mxu0 %v466
    %2893 = vmatpush.bf16.msra.mxu0 %v462
    %2894 = vmatpush.bf16.msra.mxu0 %v458
    %2895 = vmatpush.bf16.msra.mxu0 %v454
    %2896 = vmatpush.bf16.msra.mxu0 %v450
    %2897 = vmatmul.bf16.gmra.mxu0 %v2703
    %v2898 = vpop.f32.mrf.mxu0
    %v2899 = vadd.f32 0.0, %v2898
    %v2900 = vpop.f32.mrf.mxu0
    %2901 = vdwg.mxu0
    %2902 = vmatpush.bf16.msra.mxu0 %v479
    %2903 = vmatpush.bf16.msra.mxu0 %v475
    %2904 = vmatpush.bf16.msra.mxu0 %v471
    %2905 = vmatpush.bf16.msra.mxu0 %v467
    %2906 = vmatpush.bf16.msra.mxu0 %v463
    %2907 = vmatpush.bf16.msra.mxu0 %v459
    %2908 = vmatpush.bf16.msra.mxu0 %v455
    %2909 = vmatpush.bf16.msra.mxu0 %v451
    %2910 = vmatmul.bf16.gmra.mxu0 %v2703
    %v2911 = vpop.f32.mrf.mxu0
    %v2912 = vadd.f32 0.0, %v2911
    %v2913 = vpop.f32.mrf.mxu0
    %2914 = vdwg.mxu0
    %2915 = vmatpush.bf16.msra.mxu0 %v480
    %2916 = vmatpush.bf16.msra.mxu0 %v476
    %2917 = vmatpush.bf16.msra.mxu0 %v472
    %2918 = vmatpush.bf16.msra.mxu0 %v468
    %2919 = vmatpush.bf16.msra.mxu0 %v464
    %2920 = vmatpush.bf16.msra.mxu0 %v460
    %2921 = vmatpush.bf16.msra.mxu0 %v456
    %2922 = vmatpush.bf16.msra.mxu0 %v452
    %2923 = vmatmul.bf16.gmra.mxu0 %v2703
    %v2924 = vpop.f32.mrf.mxu0
    %v2925 = vadd.f32 0.0, %v2924
    %v2926 = vpop.f32.mrf.mxu0
    %2927 = vdwg.mxu0
    %v2928 = vadd.f32 %v254, %v2886
    %v2929 = vadd.f32 %v283, %v2899
    %v2930 = vadd.f32 %v312, %v2912
    %v2931 = vadd.f32 %v341, %v2925
    %v2932 = vxor.u32 %v2928, 2147483648
    %v2933 = vmul.f32 %v2932, 1.442695
    %v2934 = vpow.pop %v2933
    %v2935 = vadd.f32 %v2934, 1.0
    %v2936 = vrcp.pop %v2935
    %v2937 = vmul.f32 %v2935, %v2936
    %v2938 = vsub.f32 1.0, %v2937
    %v2939 = vmul.f32 %v2936, %v2938
    %v2940 = vadd.f32 %v2936, %v2939
    %vm2941 = vweird.f32 %v2935
    %vm2942 = vweird.f32 %v2936
    %vm2943 = vmor %vm2941, %vm2942
    %v2944 = vsel %vm2943, %v2936, %v2940
    %v2945 = vand.u32 2147483647, %v2935
    %vm2946 = vcmp.eq.f32.partialorder %v2945, 8.507059e+37
    %v2947 = vand.u32 %v2935, 2147483648
    %v2948 = vor.u32 1.1754944e-38, %v2947
    %v2949 = vsel %vm2946, %v2948, %v2944
    %v2950 = vmul.f32 1.0, %v2949
    %v2951 = vxor.u32 %v2929, 2147483648
    %v2952 = vmul.f32 %v2951, 1.442695
    %v2953 = vpow.pop %v2952
    %v2954 = vadd.f32 %v2953, 1.0
    %v2955 = vrcp.pop %v2954
    %v2956 = vmul.f32 %v2954, %v2955
    %v2957 = vsub.f32 1.0, %v2956
    %v2958 = vmul.f32 %v2955, %v2957
    %v2959 = vadd.f32 %v2955, %v2958
    %vm2960 = vweird.f32 %v2954
    %vm2961 = vweird.f32 %v2955
    %vm2962 = vmor %vm2960, %vm2961
    %v2963 = vsel %vm2962, %v2955, %v2959
    %v2964 = vand.u32 2147483647, %v2954
    %vm2965 = vcmp.eq.f32.partialorder %v2964, 8.507059e+37
    %v2966 = vand.u32 %v2954, 2147483648
    %v2967 = vor.u32 1.1754944e-38, %v2966
    %v2968 = vsel %vm2965, %v2967, %v2963
    %v2969 = vmul.f32 1.0, %v2968
    %v2970 = vtanh.pop %v2930
    %v2971 = vxor.u32 %v2931, 2147483648
    %v2972 = vmul.f32 %v2971, 1.442695
    %v2973 = vpow.pop %v2972
    %v2974 = vadd.f32 %v2973, 1.0
    %v2975 = vrcp.pop %v2974
    %v2976 = vmul.f32 %v2974, %v2975
    %v2977 = vsub.f32 1.0, %v2976
    %v2978 = vmul.f32 %v2975, %v2977
    %v2979 = vadd.f32 %v2975, %v2978
    %vm2980 = vweird.f32 %v2974
    %vm2981 = vweird.f32 %v2975
    %vm2982 = vmor %vm2980, %vm2981
    %v2983 = vsel %vm2982, %v2975, %v2979
    %v2984 = vand.u32 2147483647, %v2974
    %vm2985 = vcmp.eq.f32.partialorder %v2984, 8.507059e+37
    %v2986 = vand.u32 %v2974, 2147483648
    %v2987 = vor.u32 1.1754944e-38, %v2986
    %v2988 = vsel %vm2985, %v2987, %v2983
    %v2989 = vmul.f32 1.0, %v2988
    %v2990 = vmul.f32 %v2969, %v2700
    %v2991 = vmul.f32 %v2950, %v2970
    %v2992 = vadd.f32 %v2990, %v2991
    %v2993 = vtanh.pop %v2992
    %v2994 = vmul.f32 %v2989, %v2993
    %v2995 = vpack.c.bf16 %v2994, %v2994
    %v2996 = vpack.c.bf16 %v2875, %v2875
    %2997 = vmatpush.bf16.msra.mxu0 %v757
    %2998 = vmatpush.bf16.msra.mxu0 %v753
    %2999 = vmatpush.bf16.msra.mxu0 %v749
    %3000 = vmatpush.bf16.msra.mxu0 %v745
    %3001 = vmatpush.bf16.msra.mxu0 %v741
    %3002 = vmatpush.bf16.msra.mxu0 %v737
    %3003 = vmatpush.bf16.msra.mxu0 %v733
    %3004 = vmatpush.bf16.msra.mxu0 %v729
    %3005 = vmatmul.bf16.gmra.mxu0 %v2996
    %v3006 = vpop.f32.mrf.mxu0
    %v3007 = vadd.f32 0.0, %v3006
    %v3008 = vpop.f32.mrf.mxu0
    %3009 = vdwg.mxu0
    %3010 = vmatpush.bf16.msra.mxu0 %v758
    %3011 = vmatpush.bf16.msra.mxu0 %v754
    %3012 = vmatpush.bf16.msra.mxu0 %v750
    %3013 = vmatpush.bf16.msra.mxu0 %v746
    %3014 = vmatpush.bf16.msra.mxu0 %v742
    %3015 = vmatpush.bf16.msra.mxu0 %v738
    %3016 = vmatpush.bf16.msra.mxu0 %v734
    %3017 = vmatpush.bf16.msra.mxu0 %v730
    %3018 = vmatmul.bf16.gmra.mxu0 %v2996
    %v3019 = vpop.f32.mrf.mxu0
    %v3020 = vadd.f32 0.0, %v3019
    %v3021 = vpop.f32.mrf.mxu0
    %3022 = vdwg.mxu0
    %3023 = vmatpush.bf16.msra.mxu0 %v759
    %3024 = vmatpush.bf16.msra.mxu0 %v755
    %3025 = vmatpush.bf16.msra.mxu0 %v751
    %3026 = vmatpush.bf16.msra.mxu0 %v747
    %3027 = vmatpush.bf16.msra.mxu0 %v743
    %3028 = vmatpush.bf16.msra.mxu0 %v739
    %3029 = vmatpush.bf16.msra.mxu0 %v735
    %3030 = vmatpush.bf16.msra.mxu0 %v731
    %3031 = vmatmul.bf16.gmra.mxu0 %v2996
    %v3032 = vpop.f32.mrf.mxu0
    %v3033 = vadd.f32 0.0, %v3032
    %v3034 = vpop.f32.mrf.mxu0
    %3035 = vdwg.mxu0
    %3036 = vmatpush.bf16.msra.mxu0 %v760
    %3037 = vmatpush.bf16.msra.mxu0 %v756
    %3038 = vmatpush.bf16.msra.mxu0 %v752
    %3039 = vmatpush.bf16.msra.mxu0 %v748
    %3040 = vmatpush.bf16.msra.mxu0 %v744
    %3041 = vmatpush.bf16.msra.mxu0 %v740
    %3042 = vmatpush.bf16.msra.mxu0 %v736
    %3043 = vmatpush.bf16.msra.mxu0 %v732
    %3044 = vmatmul.bf16.gmra.mxu0 %v2996
    %v3045 = vpop.f32.mrf.mxu0
    %v3046 = vadd.f32 0.0, %v3045
    %v3047 = vpop.f32.mrf.mxu0
    %3048 = vdwg.mxu0
    %3049 = vmatpush.bf16.msra.mxu0 %v969
    %3050 = vmatpush.bf16.msra.mxu0 %v965
    %3051 = vmatpush.bf16.msra.mxu0 %v961
    %3052 = vmatpush.bf16.msra.mxu0 %v957
    %3053 = vmatpush.bf16.msra.mxu0 %v953
    %3054 = vmatpush.bf16.msra.mxu0 %v949
    %3055 = vmatpush.bf16.msra.mxu0 %v945
    %3056 = vmatpush.bf16.msra.mxu0 %v941
    %3057 = vmatmul.bf16.gmra.mxu0 %v2995
    %v3058 = vpop.f32.mrf.mxu0
    %v3059 = vadd.f32 %v3007, %v3058
    %v3060 = vpop.f32.mrf.mxu0
    %3061 = vdwg.mxu0
    %3062 = vmatpush.bf16.msra.mxu0 %v970
    %3063 = vmatpush.bf16.msra.mxu0 %v966
    %3064 = vmatpush.bf16.msra.mxu0 %v962
    %3065 = vmatpush.bf16.msra.mxu0 %v958
    %3066 = vmatpush.bf16.msra.mxu0 %v954
    %3067 = vmatpush.bf16.msra.mxu0 %v950
    %3068 = vmatpush.bf16.msra.mxu0 %v946
    %3069 = vmatpush.bf16.msra.mxu0 %v942
    %3070 = vmatmul.bf16.gmra.mxu0 %v2995
    %v3071 = vpop.f32.mrf.mxu0
    %v3072 = vadd.f32 %v3020, %v3071
    %v3073 = vpop.f32.mrf.mxu0
    %3074 = vdwg.mxu0
    %3075 = vmatpush.bf16.msra.mxu0 %v971
    %3076 = vmatpush.bf16.msra.mxu0 %v967
    %3077 = vmatpush.bf16.msra.mxu0 %v963
    %3078 = vmatpush.bf16.msra.mxu0 %v959
    %3079 = vmatpush.bf16.msra.mxu0 %v955
    %3080 = vmatpush.bf16.msra.mxu0 %v951
    %3081 = vmatpush.bf16.msra.mxu0 %v947
    %3082 = vmatpush.bf16.msra.mxu0 %v943
    %3083 = vmatmul.bf16.gmra.mxu0 %v2995
    %v3084 = vpop.f32.mrf.mxu0
    %v3085 = vadd.f32 %v3033, %v3084
    %v3086 = vpop.f32.mrf.mxu0
    %3087 = vdwg.mxu0
    %3088 = vmatpush.bf16.msra.mxu0 %v972
    %3089 = vmatpush.bf16.msra.mxu0 %v968
    %3090 = vmatpush.bf16.msra.mxu0 %v964
    %3091 = vmatpush.bf16.msra.mxu0 %v960
    %3092 = vmatpush.bf16.msra.mxu0 %v956
    %3093 = vmatpush.bf16.msra.mxu0 %v952
    %3094 = vmatpush.bf16.msra.mxu0 %v948
    %3095 = vmatpush.bf16.msra.mxu0 %v944
    %3096 = vmatmul.bf16.gmra.mxu0 %v2995
    %v3097 = vpop.f32.mrf.mxu0
    %v3098 = vadd.f32 %v3046, %v3097
    %v3099 = vpop.f32.mrf.mxu0
    %3100 = vdwg.mxu0
    %v3101 = vadd.f32 %v3059, %v345
    %v3102 = vadd.f32 %v3072, %v346
    %v3103 = vadd.f32 %v3085, %v347
    %v3104 = vadd.f32 %v3098, %v348
    %v3105 = vxor.u32 %v3101, 2147483648
    %v3106 = vmul.f32 %v3105, 1.442695
    %v3107 = vpow.pop %v3106
    %v3108 = vadd.f32 %v3107, 1.0
    %v3109 = vrcp.pop %v3108
    %v3110 = vmul.f32 %v3108, %v3109
    %v3111 = vsub.f32 1.0, %v3110
    %v3112 = vmul.f32 %v3109, %v3111
    %v3113 = vadd.f32 %v3109, %v3112
    %vm3114 = vweird.f32 %v3108
    %vm3115 = vweird.f32 %v3109
    %vm3116 = vmor %vm3114, %vm3115
    %v3117 = vsel %vm3116, %v3109, %v3113
    %v3118 = vand.u32 2147483647, %v3108
    %vm3119 = vcmp.eq.f32.partialorder %v3118, 8.507059e+37
    %v3120 = vand.u32 %v3108, 2147483648
    %v3121 = vor.u32 1.1754944e-38, %v3120
    %v3122 = vsel %vm3119, %v3121, %v3117
    %v3123 = vmul.f32 1.0, %v3122
    %v3124 = vxor.u32 %v3102, 2147483648
    %v3125 = vmul.f32 %v3124, 1.442695
    %v3126 = vpow.pop %v3125
    %v3127 = vadd.f32 %v3126, 1.0
    %v3128 = vrcp.pop %v3127
    %v3129 = vmul.f32 %v3127, %v3128
    %v3130 = vsub.f32 1.0, %v3129
    %v3131 = vmul.f32 %v3128, %v3130
    %v3132 = vadd.f32 %v3128, %v3131
    %vm3133 = vweird.f32 %v3127
    %vm3134 = vweird.f32 %v3128
    %vm3135 = vmor %vm3133, %vm3134
    %v3136 = vsel %vm3135, %v3128, %v3132
    %v3137 = vand.u32 2147483647, %v3127
    %vm3138 = vcmp.eq.f32.partialorder %v3137, 8.507059e+37
    %v3139 = vand.u32 %v3127, 2147483648
    %v3140 = vor.u32 1.1754944e-38, %v3139
    %v3141 = vsel %vm3138, %v3140, %v3136
    %v3142 = vmul.f32 1.0, %v3141
    %v3143 = vtanh.pop %v3103
    %v3144 = vxor.u32 %v3104, 2147483648
    %v3145 = vmul.f32 %v3144, 1.442695
    %v3146 = vpow.pop %v3145
    %v3147 = vadd.f32 %v3146, 1.0
    %v3148 = vrcp.pop %v3147
    %v3149 = vmul.f32 %v3147, %v3148
    %v3150 = vsub.f32 1.0, %v3149
    %v3151 = vmul.f32 %v3148, %v3150
    %v3152 = vadd.f32 %v3148, %v3151
    %vm3153 = vweird.f32 %v3147
    %vm3154 = vweird.f32 %v3148
    %vm3155 = vmor %vm3153, %vm3154
    %v3156 = vsel %vm3155, %v3148, %v3152
    %v3157 = vand.u32 2147483647, %v3147
    %vm3158 = vcmp.eq.f32.partialorder %v3157, 8.507059e+37
    %v3159 = vand.u32 %v3147, 2147483648
    %v3160 = vor.u32 1.1754944e-38, %v3159
    %v3161 = vsel %vm3158, %v3160, %v3156
    %v3162 = vmul.f32 1.0, %v3161
    %v3163 = vmul.f32 %v3142, %v2873
    %v3164 = vmul.f32 %v3123, %v3143
    %v3165 = vadd.f32 %v3163, %v3164
    %v3166 = vtanh.pop %v3165
    %v3167 = vmul.f32 %v3162, %v3166
    %v3168 = vpack.c.bf16 %v1415, %v1123
    %v3169 = vpack.c.bf16 %v1999, %v1707
    %v3170 = vpack.c.bf16 %v2583, %v2291
    %v3171 = vpack.c.bf16 %v3167, %v2875
    %v3172 = vld [vmem:[%s7] sm:$0xf]
    %v3173 = vld [vmem:[%s7 + $0x4] sm:$0xf]
    %v3174 = vld [vmem:[%s7 + $0x8] sm:$0xf]
    %v3175 = vld [vmem:[%s7 + $0xc] sm:$0xf]
    %v3176 = vld [vmem:[%s7 + $0x10] sm:$0xf]
    %v3177 = vld [vmem:[%s7 + $0x14] sm:$0xf]
    %v3178 = vld [vmem:[%s7 + $0x18] sm:$0xf]
    %v3179 = vld [vmem:[%s7 + $0x1c] sm:$0xf]
    %v3180 = vld [vmem:[%s7 + $0x20] sm:$0xf]
    %v3181 = vld [vmem:[%s7 + $0x24] sm:$0xf]
    %v3182 = vld [vmem:[%s7 + $0x28] sm:$0xf]
    %v3183 = vld [vmem:[%s7 + $0x2c] sm:$0xf]
    %v3184 = vld [vmem:[%s7 + $0x30] sm:$0xf]
    %v3185 = vld [vmem:[%s7 + $0x34] sm:$0xf]
    %v3186 = vld [vmem:[%s7 + $0x38] sm:$0xf]
    %v3187 = vld [vmem:[%s7 + $0x3c] sm:$0xf]
    %v3188 = vld [vmem:[%s8] sm:$0x1]
    %v3190 = vperm.slane %v3188, 0
    %v3208 = vunpack.c.l.b16 %v3172
    %v3209 = vunpack.c.l.b16 %v3173
    %v3210 = vunpack.c.l.b16 %v3174
    %v3211 = vunpack.c.l.b16 %v3175
    %v3212 = vunpack.c.l.b16 %v3176
    %v3213 = vunpack.c.l.b16 %v3177
    %v3214 = vunpack.c.l.b16 %v3178
    %v3215 = vunpack.c.l.b16 %v3179
    %v3216 = vunpack.c.l.b16 %v3180
    %v3217 = vunpack.c.l.b16 %v3181
    %v3218 = vunpack.c.l.b16 %v3182
    %v3219 = vunpack.c.l.b16 %v3183
    %v3220 = vunpack.c.l.b16 %v3184
    %v3221 = vunpack.c.l.b16 %v3185
    %v3222 = vunpack.c.l.b16 %v3186
    %v3223 = vunpack.c.l.b16 %v3187
    %v3224 = vpack.c.b16 %v3209, %v3208
    %v3225 = vpack.c.b16 %v3211, %v3210
    %v3226 = vpack.c.b16 %v3213, %v3212
    %v3227 = vpack.c.b16 %v3215, %v3214
    %v3228 = vpack.c.b16 %v3217, %v3216
    %v3229 = vpack.c.b16 %v3219, %v3218
    %v3230 = vpack.c.b16 %v3221, %v3220
    %v3231 = vpack.c.b16 %v3223, %v3222
    %3240 = vmatpush.bf16.msra.mxu0 %v3231
    %3241 = vmatpush.bf16.msra.mxu0 %v3230
    %3242 = vmatpush.bf16.msra.mxu0 %v3229
    %3243 = vmatpush.bf16.msra.mxu0 %v3228
    %3244 = vmatpush.bf16.msra.mxu0 %v3227
    %3245 = vmatpush.bf16.msra.mxu0 %v3226
    %3246 = vmatpush.bf16.msra.mxu0 %v3225
    %3247 = vmatpush.bf16.msra.mxu0 %v3224
    %3248 = vmatmul.bf16.gmra.mxu0 %v3168
    %v3249 = vpop.f32.mrf.mxu0
    %v3250 = vadd.f32 %v3190, %v3249
    %v3251 = vpop.f32.mrf.mxu0
    %v3252 = vadd.f32 %v3190, %v3251
    %3253 = vmatmul.bf16.gmra.mxu0 %v3169
    %v3254 = vpop.f32.mrf.mxu0
    %v3255 = vadd.f32 %v3190, %v3254
    %v3256 = vpop.f32.mrf.mxu0
    %v3257 = vadd.f32 %v3190, %v3256
    %3258 = vmatmul.bf16.gmra.mxu0 %v3170
    %v3259 = vpop.f32.mrf.mxu0
    %v3260 = vadd.f32 %v3190, %v3259
    %v3261 = vpop.f32.mrf.mxu0
    %v3262 = vadd.f32 %v3190, %v3261
    %3263 = vmatmul.bf16.gmra.mxu0 %v3171
    %v3264 = vpop.f32.mrf.mxu0
    %v3265 = vadd.f32 %v3190, %v3264
    %v3266 = vpop.f32.mrf.mxu0
    %v3267 = vadd.f32 %v3190, %v3266
    %3268 = vdwg.mxu0
    %3269 = vmax.xlane.f32.xlu0 %v3250
    %v3270 = vpop.xlane.xlu0 %3269
    %3271 = vmax.xlane.f32.xlu0 %v3252
    %v3272 = vpop.xlane.xlu0 %3271
    %3273 = vmax.xlane.f32.xlu0 %v3255
    %v3274 = vpop.xlane.xlu0 %3273
    %3275 = vmax.xlane.f32.xlu0 %v3257
    %v3276 = vpop.xlane.xlu0 %3275
    %3277 = vmax.xlane.f32.xlu0 %v3260
    %v3278 = vpop.xlane.xlu0 %3277
    %3279 = vmax.xlane.f32.xlu0 %v3262
    %v3280 = vpop.xlane.xlu0 %3279
    %3281 = vmax.xlane.f32.xlu0 %v3265
    %v3282 = vpop.xlane.xlu0 %3281
    %3283 = vmax.xlane.f32.xlu0 %v3267
    %v3284 = vpop.xlane.xlu0 %3283
    %v3285 = vsub.f32 %v3250, %v3270
    %v3286 = vsub.f32 %v3252, %v3272
    %v3287 = vsub.f32 %v3255, %v3274
    %v3288 = vsub.f32 %v3257, %v3276
    %v3289 = vsub.f32 %v3260, %v3278
    %v3290 = vsub.f32 %v3262, %v3280
    %v3291 = vsub.f32 %v3265, %v3282
    %v3292 = vsub.f32 %v3267, %v3284
    %v3293 = vmul.f32 %v3285, 1.442695
    %v3294 = vpow.pop %v3293
    %v3295 = vmul.f32 %v3286, 1.442695
    %v3296 = vpow.pop %v3295
    %v3297 = vmul.f32 %v3287, 1.442695
    %v3298 = vpow.pop %v3297
    %v3299 = vmul.f32 %v3288, 1.442695
    %v3300 = vpow.pop %v3299
    %v3301 = vmul.f32 %v3289, 1.442695
    %v3302 = vpow.pop %v3301
    %v3303 = vmul.f32 %v3290, 1.442695
    %v3304 = vpow.pop %v3303
    %v3305 = vmul.f32 %v3291, 1.442695
    %v3306 = vpow.pop %v3305
    %v3307 = vmul.f32 %v3292, 1.442695
    %v3308 = vpow.pop %v3307
    %3309 = vadd.xlane.f32.xlu0 %v3294
    %v3310 = vpop.xlane.xlu0 %3309
    %3311 = vadd.xlane.f32.xlu0 %v3296
    %v3312 = vpop.xlane.xlu0 %3311
    %3313 = vadd.xlane.f32.xlu0 %v3298
    %v3314 = vpop.xlane.xlu0 %3313
    %3315 = vadd.xlane.f32.xlu0 %v3300
    %v3316 = vpop.xlane.xlu0 %3315
    %3317 = vadd.xlane.f32.xlu0 %v3302
    %v3318 = vpop.xlane.xlu0 %3317
    %3319 = vadd.xlane.f32.xlu0 %v3304
    %v3320 = vpop.xlane.xlu0 %3319
    %3321 = vadd.xlane.f32.xlu0 %v3306
    %v3322 = vpop.xlane.xlu0 %3321
    %3323 = vadd.xlane.f32.xlu0 %v3308
    %v3324 = vpop.xlane.xlu0 %3323
    %v3325 = vlog2.pop %v3310
    %v3326 = vmul.f32 %v3325, 0.6931472
    %v3327 = vlog2.pop %v3312
    %v3328 = vmul.f32 %v3327, 0.6931472
    %v3329 = vlog2.pop %v3314
    %v3330 = vmul.f32 %v3329, 0.6931472
    %v3331 = vlog2.pop %v3316
    %v3332 = vmul.f32 %v3331, 0.6931472
    %v3333 = vlog2.pop %v3318
    %v3334 = vmul.f32 %v3333, 0.6931472
    %v3335 = vlog2.pop %v3320
    %v3336 = vmul.f32 %v3335, 0.6931472
    %v3337 = vlog2.pop %v3322
    %v3338 = vmul.f32 %v3337, 0.6931472
    %v3339 = vlog2.pop %v3324
    %v3340 = vmul.f32 %v3339, 0.6931472
    %v3341 = vsub.f32 %v3285, %v3326
    %v3342 = vsub.f32 %v3286, %v3328
    %v3343 = vsub.f32 %v3287, %v3330
    %v3344 = vsub.f32 %v3288, %v3332
    %v3345 = vsub.f32 %v3289, %v3334
    %v3346 = vsub.f32 %v3290, %v3336
    %v3347 = vsub.f32 %v3291, %v3338
    %v3348 = vsub.f32 %v3292, %v3340
    %3349 = vst [vmem:[%s9] sm:$0xff] %v3341
    %3350 = vst [vmem:[%s9 + $0x8] sm:$0xff] %v3342
    %3351 = vst [vmem:[%s9 + $0x10] sm:$0xff] %v3343
    %3352 = vst [vmem:[%s9 + $0x18] sm:$0xff] %v3344
    %3353 = vst [vmem:[%s9 + $0x20] sm:$0xff] %v3345
    %3354 = vst [vmem:[%s9 + $0x28] sm:$0xff] %v3346
    %3355 = vst [vmem:[%s9 + $0x30] sm:$0xff] %v3347
    %3356 = vst [vmem:[%s9 + $0x38] sm:$0xff] %v3348
    // Predicated region
    $region50: #{actuator_net_forward.1} parent=1 // pred_check
      _
    $region51: #{actuator_net_forward.1} parent=1 // pred_check_branch
      %3358 = sbr.rel (0) target = $region53
    $region52: #{actuator_net_forward.1} parent=1 // pred_region
      _
    $region53: #{actuator_net_forward.1} parent=1 // pred_fallthru
      _
    // Predicated region
    $region54: #{actuator_net_forward.1} parent=1 // pred_check
      _
    $region55: #{actuator_net_forward.1} parent=1 // pred_check_branch
      %3360 = sbr.rel (0) target = $region57
    $region56: #{actuator_net_forward.1} parent=1 // pred_region
      _
    $region57: #{actuator_net_forward.1} parent=1 // pred_fallthru
      _
    %3361 = vsyncpa [#allocation3], 1
    %3362 = vsyncpa [#allocation5], 1

</llo_original>
